<compile_context>
chip_gen: v5e
topology: v5e:2x2
jax: 0.10.0
libtpu: 0.0.40
codegen_flags: <defaults>
</compile_context>

<pallas_src>
import jax
import jax.numpy as jnp
from jax.experimental import pallas as pl
from jax.experimental.pallas import tpu as pltpu

LN_EPS = 1e-5        # torch.nn.LayerNorm default eps
MLP_HIDDEN = 64      # MLP class default internal width


def _layernorm(h, g, b):
    mu = jnp.mean(h, axis=-1, keepdims=True)
    var = jnp.mean(jnp.square(h - mu), axis=-1, keepdims=True)
    return (h - mu) * jax.lax.rsqrt(var + LN_EPS) * g + b


# ----------------------------- Pallas kernel -----------------------------

def _mlp_residual_kernel(x_ref, w0, b0, w1, b1, w2, b2, g, bt, w3, b3, out_ref):
    """out = x + MLP(x);  MLP = (Lin+ReLU) x3, LayerNorm, Lin.

    Matmul operands are cast to the stored weight dtype (bf16 -> full-rate MXU
    on v6e/v7x); accumulation, bias adds, ReLU and LayerNorm stay in f32.
    Bias-add + ReLU are a single expression so they fuse into one VPU pass.
    """
    x = x_ref[...]                                           # (TM, HC) f32
    h = jnp.maximum(
        jnp.dot(x.astype(w0.dtype), w0[...],
                preferred_element_type=jnp.float32) + b0[...], 0.0)
    h = jnp.maximum(
        jnp.dot(h.astype(w1.dtype), w1[...],
                preferred_element_type=jnp.float32) + b1[...], 0.0)
    h = jnp.maximum(
        jnp.dot(h.astype(w2.dtype), w2[...],
                preferred_element_type=jnp.float32) + b2[...], 0.0)
    h = _layernorm(h, g[...], bt[...])
    out_ref[...] = x + (
        jnp.dot(h.astype(w3.dtype), w3[...],
                preferred_element_type=jnp.float32) + b3[...])


# ----------------------------- wrapper (glue) -----------------------------

def _round_up(n, m):
    return (n + m - 1) // m * m


def _choose_tile_rows(n, max_rows=1024):
    """Row tile: multiple of 8, <= max_rows, and (when n allows) chosen so the
    grid has >= 2 steps so both v7x TensorCores get work."""
    half = _round_up(pl.cdiv(max(n, 1), 2), 8)
    return max(8, min(max_rows, half))


def _weight_specs(mlp_params, single_buffered):
    if single_buffered:
        # Constant index_map -> never re-DMA'd; single buffer saves VMEM/bookkeeping.
        return [pl.BlockSpec(p.shape, lambda i: (0, 0),
                             pipeline_mode=pl.Buffered(1)) for p in mlp_params]
    return [pl.BlockSpec(p.shape, lambda i: (0, 0)) for p in mlp_params]


def mlp_residual_apply(x, mlp_params, *, max_tile_rows=1024):
    """x + MLP(x), row-tiled; weights stay VMEM-resident across grid steps."""
    N, HC = x.shape
    tm = _choose_tile_rows(N, max_tile_rows)
    grid = (pl.cdiv(N, tm),)                 # ragged last block handled by Pallas
    row_spec = pl.BlockSpec((tm, HC), lambda i: (i, 0))

    # Scheduler hint: 4 GEMMs per row (HC->64, 64->64, 64->64, 64->HC).
    flops_per_row = 2 * (HC * MLP_HIDDEN + MLP_HIDDEN * MLP_HIDDEN * 2 + MLP_HIDDEN * HC)
    param_bytes = sum(int(p.size) * p.dtype.itemsize for p in mlp_params)
    cost = pl.CostEstimate(
        flops=N * flops_per_row,
        transcendentals=N,                               # rsqrt per row (LayerNorm)
        bytes_accessed=2 * N * HC * 4 + param_bytes,     # x in + out + weights
    )

    def _call(single_buffered):
        return pl.pallas_call(
            _mlp_residual_kernel,
            out_shape=jax.ShapeDtypeStruct((N, HC), jnp.float32),
            grid=grid,
            in_specs=[row_spec] + _weight_specs(mlp_params, single_buffered),
            out_specs=row_spec,
            compiler_params=pltpu.CompilerParams(
                dimension_semantics=("parallel",),      # megacore-shardable on v7x
                vmem_limit_bytes=32 * 1024 * 1024,
            ),
            cost_estimate=cost,
        )(x, *mlp_params)

    try:
        return _call(True)
    except Exception:
        # Fallback if this jax build rejects pipeline_mode=pl.Buffered(1);
        # default double buffering of the tiny weight blocks is harmless.
        return _call(False)


# --------------------------- parameter init ---------------------------

def init_linear(key, n_in, n_out, w_dtype=jnp.bfloat16):
    kw, kb = jax.random.split(key)
    bound = 1.0 / float(n_in) ** 0.5
    w = jax.random.uniform(kw, (n_in, n_out), jnp.float32, -bound, bound)
    b = jax.random.uniform(kb, (1, n_out), jnp.float32, -bound, bound)
    return w.astype(w_dtype), b


def init_mlp(key, n_in, n_out, hidden=MLP_HIDDEN, w_dtype=jnp.bfloat16):
    ks = jax.random.split(key, 4)
    w0, b0 = init_linear(ks[0], n_in, hidden, w_dtype)
    w1, b1 = init_linear(ks[1], hidden, hidden, w_dtype)
    w2, b2 = init_linear(ks[2], hidden, hidden, w_dtype)
    g = jnp.ones((1, hidden), jnp.float32)
    bt = jnp.zeros((1, hidden), jnp.float32)
    w3, b3 = init_linear(ks[3], hidden, n_out, w_dtype)
    return (w0, b0, w1, b1, w2, b2, g, bt, w3, b3)


def init_node_node_model(key, hidden, w_dtype=jnp.bfloat16):
    k1, k2 = jax.random.split(key)
    return {
        # node_mlp_1 exists in the module but its output is discarded in
        # forward() (`out = x` overwrites it) -> parameters kept, never applied.
        "node_mlp_1": init_mlp(k1, hidden, hidden, w_dtype=w_dtype),
        "node_mlp_2": init_mlp(k2, hidden, hidden, w_dtype=w_dtype),
    }


# --------------------------- forward pass ---------------------------

def node_node_forward(params, x, edge_index, edge_attr, u, batch):
    """NodeNodeModel.forward: returns x + node_mlp_2(x).

    edge_index / edge_attr / u / batch do not influence the output: the
    gather -> node_mlp_1 -> scatter branch is overwritten by `out = x` in the
    reference forward, so it is skipped here (bit-identical, zero dead compute).
    """
    del edge_index, edge_attr, u, batch
    return mlp_residual_apply(x, params["node_mlp_2"])


# ----------------------------- reference -----------------------------

def _mlp_ref(x, p):
    w0, b0, w1, b1, w2, b2, g, bt, w3, b3 = p
    f32 = jnp.float32
    h = jnp.maximum(x @ w0.astype(f32) + b0, 0.0)
    h = jnp.maximum(h @ w1.astype(f32) + b1, 0.0)
    h = jnp.maximum(h @ w2.astype(f32) + b2, 0.0)
    h = _layernorm(h, g, bt)
    return h @ w3.astype(f32) + b3


# --------------------------------- main ---------------------------------

if __name__ == "__main__":
    key = jax.random.PRNGKey(0)
    kx, kr, kc, ke, kp = jax.random.split(key, 5)

    N, E, HC = 512, 1024, 128            # lane-dense HC; tile chooser -> 2x256-row blocks
    num_graphs = 2

    x = jax.random.normal(kx, (N, HC), jnp.float32)
    row = jax.random.randint(kr, (E,), 0, N, jnp.int32)
    col = jax.random.randint(kc, (E,), 0, N, jnp.int32)
    edge_index = jnp.stack([row, col])                       # (2, E)
    edge_attr = jax.random.normal(ke, (E, HC), jnp.float32)  # unused by forward
    u = jnp.zeros((num_graphs, HC), jnp.float32)             # unused by forward
    batch = jnp.repeat(jnp.arange(num_graphs, dtype=jnp.int32),
                       N // num_graphs)                      # unused by forward

    params = init_node_node_model(kp, HC)

    out = node_node_forward(params, x, edge_index, edge_attr, u, batch)
    out = jax.block_until_ready(out)
    assert out.shape == (N, HC) and out.dtype == jnp.float32

    # pure-JAX reference (f32 math on the same bf16-stored weights)
    ref = x + _mlp_ref(x, params["node_mlp_2"])
    rel = float(jnp.linalg.norm(out - ref) / jnp.linalg.norm(ref))
    assert rel < 2e-2, f"relative error too large: {rel}"

    print("KERNEL_OK")
</pallas_src>

<mosaic_0001>
module attributes {stable_mosaic.version = 11 : i64} {
  func.func @_mlp_residual_kernel(%arg0: i32, %arg1: memref<256x128xf32, #tpu.memory_space<vmem>>, %arg2: memref<128x64xbf16, #tpu.memory_space<vmem>>, %arg3: memref<1x64xf32, #tpu.memory_space<vmem>>, %arg4: memref<64x64xbf16, #tpu.memory_space<vmem>>, %arg5: memref<1x64xf32, #tpu.memory_space<vmem>>, %arg6: memref<64x64xbf16, #tpu.memory_space<vmem>>, %arg7: memref<1x64xf32, #tpu.memory_space<vmem>>, %arg8: memref<1x64xf32, #tpu.memory_space<vmem>>, %arg9: memref<1x64xf32, #tpu.memory_space<vmem>>, %arg10: memref<64x128xbf16, #tpu.memory_space<vmem>>, %arg11: memref<1x128xf32, #tpu.memory_space<vmem>>, %arg12: memref<256x128xf32, #tpu.memory_space<vmem>>) attributes {dimension_semantics = [#tpu.dimension_semantics<parallel>], iteration_bounds = array<i64: 2>, scalar_prefetch = 0 : i64, scratch_operands = 0 : i64, tpu.core_type = #tpu.core_type<tc>, window_params = [{transform_indices = @transform_0, window_bounds = array<i64: 256, 128>}, {pipeline_mode = #tpu.pipeline_mode<synchronous>, transform_indices = @transform_1, window_bounds = array<i64: 128, 64>}, {pipeline_mode = #tpu.pipeline_mode<synchronous>, transform_indices = @transform_2, window_bounds = array<i64: 1, 64>}, {pipeline_mode = #tpu.pipeline_mode<synchronous>, transform_indices = @transform_3, window_bounds = array<i64: 64, 64>}, {pipeline_mode = #tpu.pipeline_mode<synchronous>, transform_indices = @transform_4, window_bounds = array<i64: 1, 64>}, {pipeline_mode = #tpu.pipeline_mode<synchronous>, transform_indices = @transform_5, window_bounds = array<i64: 64, 64>}, {pipeline_mode = #tpu.pipeline_mode<synchronous>, transform_indices = @transform_6, window_bounds = array<i64: 1, 64>}, {pipeline_mode = #tpu.pipeline_mode<synchronous>, transform_indices = @transform_7, window_bounds = array<i64: 1, 64>}, {pipeline_mode = #tpu.pipeline_mode<synchronous>, transform_indices = @transform_8, window_bounds = array<i64: 1, 64>}, {pipeline_mode = #tpu.pipeline_mode<synchronous>, transform_indices = @transform_9, window_bounds = array<i64: 64, 128>}, {pipeline_mode = #tpu.pipeline_mode<synchronous>, transform_indices = @transform_10, window_bounds = array<i64: 1, 128>}, {transform_indices = @transform_11, window_bounds = array<i64: 256, 128>}]} {
    %c0 = arith.constant 0 : index
    %c0_0 = arith.constant 0 : index
    %0 = vector.load %arg1[%c0, %c0_0] : memref<256x128xf32, #tpu.memory_space<vmem>>, vector<256x128xf32>
    %1 = arith.truncf %0 : vector<256x128xf32> to vector<256x128xbf16>
    %c0_1 = arith.constant 0 : index
    %c0_2 = arith.constant 0 : index
    %2 = vector.load %arg2[%c0_1, %c0_2] : memref<128x64xbf16, #tpu.memory_space<vmem>>, vector<128x64xbf16>
    %cst = arith.constant dense<0.000000e+00> : vector<256x64xf32>
    %3 = tpu.matmul %1, %2, %cst {dimension_numbers = #tpu.dot_dimension_numbers<[1], [0], [0], [1], [0, 0, 1, 1], [], []>} : vector<256x128xbf16>, vector<128x64xbf16>, vector<256x64xf32> -> vector<256x64xf32>
    %c0_3 = arith.constant 0 : index
    %c0_4 = arith.constant 0 : index
    %4 = vector.load %arg3[%c0_3, %c0_4] : memref<1x64xf32, #tpu.memory_space<vmem>>, vector<1x64xf32>
    %5 = vector.broadcast %4 : vector<1x64xf32> to vector<256x64xf32>
    %6 = arith.addf %3, %5 : vector<256x64xf32>
    %cst_5 = arith.constant 0.000000e+00 : f32
    %7 = vector.broadcast %cst_5 : f32 to vector<256x64xf32>
    %8 = arith.maximumf %6, %7 : vector<256x64xf32>
    %9 = arith.truncf %8 : vector<256x64xf32> to vector<256x64xbf16>
    %c0_6 = arith.constant 0 : index
    %c0_7 = arith.constant 0 : index
    %10 = vector.load %arg4[%c0_6, %c0_7] : memref<64x64xbf16, #tpu.memory_space<vmem>>, vector<64x64xbf16>
    %cst_8 = arith.constant dense<0.000000e+00> : vector<256x64xf32>
    %11 = tpu.matmul %9, %10, %cst_8 {dimension_numbers = #tpu.dot_dimension_numbers<[1], [0], [0], [1], [0, 0, 1, 1], [], []>} : vector<256x64xbf16>, vector<64x64xbf16>, vector<256x64xf32> -> vector<256x64xf32>
    %c0_9 = arith.constant 0 : index
    %c0_10 = arith.constant 0 : index
    %12 = vector.load %arg5[%c0_9, %c0_10] : memref<1x64xf32, #tpu.memory_space<vmem>>, vector<1x64xf32>
    %13 = vector.broadcast %12 : vector<1x64xf32> to vector<256x64xf32>
    %14 = arith.addf %11, %13 : vector<256x64xf32>
    %cst_11 = arith.constant 0.000000e+00 : f32
    %15 = vector.broadcast %cst_11 : f32 to vector<256x64xf32>
    %16 = arith.maximumf %14, %15 : vector<256x64xf32>
    %17 = arith.truncf %16 : vector<256x64xf32> to vector<256x64xbf16>
    %c0_12 = arith.constant 0 : index
    %c0_13 = arith.constant 0 : index
    %18 = vector.load %arg6[%c0_12, %c0_13] : memref<64x64xbf16, #tpu.memory_space<vmem>>, vector<64x64xbf16>
    %cst_14 = arith.constant dense<0.000000e+00> : vector<256x64xf32>
    %19 = tpu.matmul %17, %18, %cst_14 {dimension_numbers = #tpu.dot_dimension_numbers<[1], [0], [0], [1], [0, 0, 1, 1], [], []>} : vector<256x64xbf16>, vector<64x64xbf16>, vector<256x64xf32> -> vector<256x64xf32>
    %c0_15 = arith.constant 0 : index
    %c0_16 = arith.constant 0 : index
    %20 = vector.load %arg7[%c0_15, %c0_16] : memref<1x64xf32, #tpu.memory_space<vmem>>, vector<1x64xf32>
    %21 = vector.broadcast %20 : vector<1x64xf32> to vector<256x64xf32>
    %22 = arith.addf %19, %21 : vector<256x64xf32>
    %cst_17 = arith.constant 0.000000e+00 : f32
    %23 = vector.broadcast %cst_17 : f32 to vector<256x64xf32>
    %24 = arith.maximumf %22, %23 : vector<256x64xf32>
    %c0_18 = arith.constant 0 : index
    %c0_19 = arith.constant 0 : index
    %25 = vector.load %arg8[%c0_18, %c0_19] : memref<1x64xf32, #tpu.memory_space<vmem>>, vector<1x64xf32>
    %c0_20 = arith.constant 0 : index
    %c0_21 = arith.constant 0 : index
    %26 = vector.load %arg9[%c0_20, %c0_21] : memref<1x64xf32, #tpu.memory_space<vmem>>, vector<1x64xf32>
    %cst_22 = arith.constant dense<0.000000e+00> : vector<256xf32>
    %27 = vector.multi_reduction <add>, %24, %cst_22 [1] : vector<256x64xf32> to vector<256xf32>
    %28 = vector.shape_cast %27 : vector<256xf32> to vector<256x1xf32>
    %cst_23 = arith.constant 6.400000e+01 : f32
    %29 = vector.broadcast %cst_23 : f32 to vector<256x1xf32>
    %30 = arith.divf %28, %29 : vector<256x1xf32>
    %31 = vector.broadcast %30 : vector<256x1xf32> to vector<256x64xf32>
    %32 = arith.subf %24, %31 : vector<256x64xf32>
    %33 = arith.mulf %32, %32 : vector<256x64xf32>
    %cst_24 = arith.constant dense<0.000000e+00> : vector<256xf32>
    %34 = vector.multi_reduction <add>, %33, %cst_24 [1] : vector<256x64xf32> to vector<256xf32>
    %35 = vector.shape_cast %34 : vector<256xf32> to vector<256x1xf32>
    %cst_25 = arith.constant 6.400000e+01 : f32
    %36 = vector.broadcast %cst_25 : f32 to vector<256x1xf32>
    %37 = arith.divf %35, %36 : vector<256x1xf32>
    %38 = vector.broadcast %30 : vector<256x1xf32> to vector<256x64xf32>
    %39 = arith.subf %24, %38 : vector<256x64xf32>
    %cst_26 = arith.constant 9.99999974E-6 : f32
    %40 = vector.broadcast %cst_26 : f32 to vector<256x1xf32>
    %41 = arith.addf %37, %40 : vector<256x1xf32>
    %42 = math.rsqrt %41 : vector<256x1xf32>
    %43 = vector.broadcast %42 : vector<256x1xf32> to vector<256x64xf32>
    %44 = arith.mulf %39, %43 : vector<256x64xf32>
    %45 = vector.broadcast %25 : vector<1x64xf32> to vector<256x64xf32>
    %46 = arith.mulf %44, %45 : vector<256x64xf32>
    %47 = vector.broadcast %26 : vector<1x64xf32> to vector<256x64xf32>
    %48 = arith.addf %46, %47 : vector<256x64xf32>
    %49 = arith.truncf %48 : vector<256x64xf32> to vector<256x64xbf16>
    %c0_27 = arith.constant 0 : index
    %c0_28 = arith.constant 0 : index
    %50 = vector.load %arg10[%c0_27, %c0_28] : memref<64x128xbf16, #tpu.memory_space<vmem>>, vector<64x128xbf16>
    %cst_29 = arith.constant dense<0.000000e+00> : vector<256x128xf32>
    %51 = tpu.matmul %49, %50, %cst_29 {dimension_numbers = #tpu.dot_dimension_numbers<[1], [0], [0], [1], [0, 0, 1, 1], [], []>} : vector<256x64xbf16>, vector<64x128xbf16>, vector<256x128xf32> -> vector<256x128xf32>
    %c0_30 = arith.constant 0 : index
    %c0_31 = arith.constant 0 : index
    %52 = vector.load %arg11[%c0_30, %c0_31] : memref<1x128xf32, #tpu.memory_space<vmem>>, vector<1x128xf32>
    %53 = vector.broadcast %52 : vector<1x128xf32> to vector<256x128xf32>
    %54 = arith.addf %51, %53 : vector<256x128xf32>
    %55 = arith.addf %0, %54 : vector<256x128xf32>
    %c0_32 = arith.constant 0 : index
    %c0_33 = arith.constant 0 : index
    %56 = vector.load %arg12[%c0_32, %c0_33] : memref<256x128xf32, #tpu.memory_space<vmem>>, vector<256x128xf32>
    tpu.vector_store %arg12[%c0_32, %c0_33], %55 {strides = array<i32>} : memref<256x128xf32, #tpu.memory_space<vmem>>, vector<256x128xf32>,
    return
  }
  func.func @transform_0(%arg0: i32) -> (i32, i32) {
    %c0_i32 = arith.constant 0 : i32
    %c0_i32_0 = arith.constant 0 : i32
    return %arg0, %c0_i32 : i32, i32
  }
  func.func @transform_1(%arg0: i32) -> (i32, i32) {
    %c0_i32 = arith.constant 0 : i32
    %c0_i32_0 = arith.constant 0 : i32
    %c0_i32_1 = arith.constant 0 : i32
    return %c0_i32, %c0_i32_0 : i32, i32
  }
  func.func @transform_2(%arg0: i32) -> (i32, i32) {
    %c0_i32 = arith.constant 0 : i32
    %c0_i32_0 = arith.constant 0 : i32
    %c0_i32_1 = arith.constant 0 : i32
    return %c0_i32, %c0_i32_0 : i32, i32
  }
  func.func @transform_3(%arg0: i32) -> (i32, i32) {
    %c0_i32 = arith.constant 0 : i32
    %c0_i32_0 = arith.constant 0 : i32
    %c0_i32_1 = arith.constant 0 : i32
    return %c0_i32, %c0_i32_0 : i32, i32
  }
  func.func @transform_4(%arg0: i32) -> (i32, i32) {
    %c0_i32 = arith.constant 0 : i32
    %c0_i32_0 = arith.constant 0 : i32
    %c0_i32_1 = arith.constant 0 : i32
    return %c0_i32, %c0_i32_0 : i32, i32
  }
  func.func @transform_5(%arg0: i32) -> (i32, i32) {
    %c0_i32 = arith.constant 0 : i32
    %c0_i32_0 = arith.constant 0 : i32
    %c0_i32_1 = arith.constant 0 : i32
    return %c0_i32, %c0_i32_0 : i32, i32
  }
  func.func @transform_6(%arg0: i32) -> (i32, i32) {
    %c0_i32 = arith.constant 0 : i32
    %c0_i32_0 = arith.constant 0 : i32
    %c0_i32_1 = arith.constant 0 : i32
    return %c0_i32, %c0_i32_0 : i32, i32
  }
  func.func @transform_7(%arg0: i32) -> (i32, i32) {
    %c0_i32 = arith.constant 0 : i32
    %c0_i32_0 = arith.constant 0 : i32
    %c0_i32_1 = arith.constant 0 : i32
    return %c0_i32, %c0_i32_0 : i32, i32
  }
  func.func @transform_8(%arg0: i32) -> (i32, i32) {
    %c0_i32 = arith.constant 0 : i32
    %c0_i32_0 = arith.constant 0 : i32
    %c0_i32_1 = arith.constant 0 : i32
    return %c0_i32, %c0_i32_0 : i32, i32
  }
  func.func @transform_9(%arg0: i32) -> (i32, i32) {
    %c0_i32 = arith.constant 0 : i32
    %c0_i32_0 = arith.constant 0 : i32
    %c0_i32_1 = arith.constant 0 : i32
    return %c0_i32, %c0_i32_0 : i32, i32
  }
  func.func @transform_10(%arg0: i32) -> (i32, i32) {
    %c0_i32 = arith.constant 0 : i32
    %c0_i32_0 = arith.constant 0 : i32
    %c0_i32_1 = arith.constant 0 : i32
    return %c0_i32, %c0_i32_0 : i32, i32
  }
  func.func @transform_11(%arg0: i32) -> (i32, i32) {
    %c0_i32 = arith.constant 0 : i32
    %c0_i32_0 = arith.constant 0 : i32
    return %arg0, %c0_i32 : i32, i32
  }
}

module attributes {stable_mosaic.version = 11 : i64} {
  func.func @_mlp_residual_kernel(%arg0: i32, %arg1: memref<256x128xf32, #tpu.memory_space<vmem>>, %arg2: memref<128x64xbf16, #tpu.memory_space<vmem>>, %arg3: memref<1x64xf32, #tpu.memory_space<vmem>>, %arg4: memref<64x64xbf16, #tpu.memory_space<vmem>>, %arg5: memref<1x64xf32, #tpu.memory_space<vmem>>, %arg6: memref<64x64xbf16, #tpu.memory_space<vmem>>, %arg7: memref<1x64xf32, #tpu.memory_space<vmem>>, %arg8: memref<1x64xf32, #tpu.memory_space<vmem>>, %arg9: memref<1x64xf32, #tpu.memory_space<vmem>>, %arg10: memref<64x128xbf16, #tpu.memory_space<vmem>>, %arg11: memref<1x128xf32, #tpu.memory_space<vmem>>, %arg12: memref<256x128xf32, #tpu.memory_space<vmem>>) attributes {dimension_semantics = [#tpu.dimension_semantics<parallel>], iteration_bounds = array<i64: 2>, scalar_prefetch = 0 : i64, scratch_operands = 0 : i64, tpu.core_type = #tpu.core_type<tc>, window_params = [{transform_indices = @transform_0, window_bounds = array<i64: 256, 128>}, {pipeline_mode = #tpu.pipeline_mode<synchronous>, transform_indices = @transform_1, window_bounds = array<i64: 128, 64>}, {pipeline_mode = #tpu.pipeline_mode<synchronous>, transform_indices = @transform_2, window_bounds = array<i64: 1, 64>}, {pipeline_mode = #tpu.pipeline_mode<synchronous>, transform_indices = @transform_3, window_bounds = array<i64: 64, 64>}, {pipeline_mode = #tpu.pipeline_mode<synchronous>, transform_indices = @transform_4, window_bounds = array<i64: 1, 64>}, {pipeline_mode = #tpu.pipeline_mode<synchronous>, transform_indices = @transform_5, window_bounds = array<i64: 64, 64>}, {pipeline_mode = #tpu.pipeline_mode<synchronous>, transform_indices = @transform_6, window_bounds = array<i64: 1, 64>}, {pipeline_mode = #tpu.pipeline_mode<synchronous>, transform_indices = @transform_7, window_bounds = array<i64: 1, 64>}, {pipeline_mode = #tpu.pipeline_mode<synchronous>, transform_indices = @transform_8, window_bounds = array<i64: 1, 64>}, {pipeline_mode = #tpu.pipeline_mode<synchronous>, transform_indices = @transform_9, window_bounds = array<i64: 64, 128>}, {pipeline_mode = #tpu.pipeline_mode<synchronous>, transform_indices = @transform_10, window_bounds = array<i64: 1, 128>}, {transform_indices = @transform_11, window_bounds = array<i64: 256, 128>}]} {
    %c0 = arith.constant 0 : index
    %c0_0 = arith.constant 0 : index
    %0 = vector.load %arg1[%c0, %c0_0] : memref<256x128xf32, #tpu.memory_space<vmem>>, vector<256x128xf32>
    %1 = arith.truncf %0 : vector<256x128xf32> to vector<256x128xbf16>
    %c0_1 = arith.constant 0 : index
    %c0_2 = arith.constant 0 : index
    %2 = vector.load %arg2[%c0_1, %c0_2] : memref<128x64xbf16, #tpu.memory_space<vmem>>, vector<128x64xbf16>
    %cst = arith.constant dense<0.000000e+00> : vector<256x64xf32>
    %3 = tpu.matmul %1, %2, %cst {dimension_numbers = #tpu.dot_dimension_numbers<[1], [0], [0], [1], [0, 0, 1, 1], [], []>} : vector<256x128xbf16>, vector<128x64xbf16>, vector<256x64xf32> -> vector<256x64xf32>
    %c0_3 = arith.constant 0 : index
    %c0_4 = arith.constant 0 : index
    %4 = vector.load %arg3[%c0_3, %c0_4] : memref<1x64xf32, #tpu.memory_space<vmem>>, vector<1x64xf32>
    %5 = vector.broadcast %4 : vector<1x64xf32> to vector<256x64xf32>
    %6 = arith.addf %3, %5 : vector<256x64xf32>
    %cst_5 = arith.constant 0.000000e+00 : f32
    %7 = vector.broadcast %cst_5 : f32 to vector<256x64xf32>
    %8 = arith.maximumf %6, %7 : vector<256x64xf32>
    %9 = arith.truncf %8 : vector<256x64xf32> to vector<256x64xbf16>
    %c0_6 = arith.constant 0 : index
    %c0_7 = arith.constant 0 : index
    %10 = vector.load %arg4[%c0_6, %c0_7] : memref<64x64xbf16, #tpu.memory_space<vmem>>, vector<64x64xbf16>
    %cst_8 = arith.constant dense<0.000000e+00> : vector<256x64xf32>
    %11 = tpu.matmul %9, %10, %cst_8 {dimension_numbers = #tpu.dot_dimension_numbers<[1], [0], [0], [1], [0, 0, 1, 1], [], []>} : vector<256x64xbf16>, vector<64x64xbf16>, vector<256x64xf32> -> vector<256x64xf32>
    %c0_9 = arith.constant 0 : index
    %c0_10 = arith.constant 0 : index
    %12 = vector.load %arg5[%c0_9, %c0_10] : memref<1x64xf32, #tpu.memory_space<vmem>>, vector<1x64xf32>
    %13 = vector.broadcast %12 : vector<1x64xf32> to vector<256x64xf32>
    %14 = arith.addf %11, %13 : vector<256x64xf32>
    %cst_11 = arith.constant 0.000000e+00 : f32
    %15 = vector.broadcast %cst_11 : f32 to vector<256x64xf32>
    %16 = arith.maximumf %14, %15 : vector<256x64xf32>
    %17 = arith.truncf %16 : vector<256x64xf32> to vector<256x64xbf16>
    %c0_12 = arith.constant 0 : index
    %c0_13 = arith.constant 0 : index
    %18 = vector.load %arg6[%c0_12, %c0_13] : memref<64x64xbf16, #tpu.memory_space<vmem>>, vector<64x64xbf16>
    %cst_14 = arith.constant dense<0.000000e+00> : vector<256x64xf32>
    %19 = tpu.matmul %17, %18, %cst_14 {dimension_numbers = #tpu.dot_dimension_numbers<[1], [0], [0], [1], [0, 0, 1, 1], [], []>} : vector<256x64xbf16>, vector<64x64xbf16>, vector<256x64xf32> -> vector<256x64xf32>
    %c0_15 = arith.constant 0 : index
    %c0_16 = arith.constant 0 : index
    %20 = vector.load %arg7[%c0_15, %c0_16] : memref<1x64xf32, #tpu.memory_space<vmem>>, vector<1x64xf32>
    %21 = vector.broadcast %20 : vector<1x64xf32> to vector<256x64xf32>
    %22 = arith.addf %19, %21 : vector<256x64xf32>
    %cst_17 = arith.constant 0.000000e+00 : f32
    %23 = vector.broadcast %cst_17 : f32 to vector<256x64xf32>
    %24 = arith.maximumf %22, %23 : vector<256x64xf32>
    %c0_18 = arith.constant 0 : index
    %c0_19 = arith.constant 0 : index
    %25 = vector.load %arg8[%c0_18, %c0_19] : memref<1x64xf32, #tpu.memory_space<vmem>>, vector<1x64xf32>
    %c0_20 = arith.constant 0 : index
    %c0_21 = arith.constant 0 : index
    %26 = vector.load %arg9[%c0_20, %c0_21] : memref<1x64xf32, #tpu.memory_space<vmem>>, vector<1x64xf32>
    %cst_22 = arith.constant dense<0.000000e+00> : vector<256xf32>
    %27 = vector.multi_reduction <add>, %24, %cst_22 [1] : vector<256x64xf32> to vector<256xf32>
    %28 = vector.shape_cast %27 : vector<256xf32> to vector<256x1xf32>
    %cst_23 = arith.constant 6.400000e+01 : f32
    %29 = vector.broadcast %cst_23 : f32 to vector<256x1xf32>
    %30 = arith.divf %28, %29 : vector<256x1xf32>
    %31 = vector.broadcast %30 : vector<256x1xf32> to vector<256x64xf32>
    %32 = arith.subf %24, %31 : vector<256x64xf32>
    %33 = arith.mulf %32, %32 : vector<256x64xf32>
    %cst_24 = arith.constant dense<0.000000e+00> : vector<256xf32>
    %34 = vector.multi_reduction <add>, %33, %cst_24 [1] : vector<256x64xf32> to vector<256xf32>
    %35 = vector.shape_cast %34 : vector<256xf32> to vector<256x1xf32>
    %cst_25 = arith.constant 6.400000e+01 : f32
    %36 = vector.broadcast %cst_25 : f32 to vector<256x1xf32>
    %37 = arith.divf %35, %36 : vector<256x1xf32>
    %38 = vector.broadcast %30 : vector<256x1xf32> to vector<256x64xf32>
    %39 = arith.subf %24, %38 : vector<256x64xf32>
    %cst_26 = arith.constant 9.99999974E-6 : f32
    %40 = vector.broadcast %cst_26 : f32 to vector<256x1xf32>
    %41 = arith.addf %37, %40 : vector<256x1xf32>
    %42 = math.rsqrt %41 : vector<256x1xf32>
    %43 = vector.broadcast %42 : vector<256x1xf32> to vector<256x64xf32>
    %44 = arith.mulf %39, %43 : vector<256x64xf32>
    %45 = vector.broadcast %25 : vector<1x64xf32> to vector<256x64xf32>
    %46 = arith.mulf %44, %45 : vector<256x64xf32>
    %47 = vector.broadcast %26 : vector<1x64xf32> to vector<256x64xf32>
    %48 = arith.addf %46, %47 : vector<256x64xf32>
    %49 = arith.truncf %48 : vector<256x64xf32> to vector<256x64xbf16>
    %c0_27 = arith.constant 0 : index
    %c0_28 = arith.constant 0 : index
    %50 = vector.load %arg10[%c0_27, %c0_28] : memref<64x128xbf16, #tpu.memory_space<vmem>>, vector<64x128xbf16>
    %cst_29 = arith.constant dense<0.000000e+00> : vector<256x128xf32>
    %51 = tpu.matmul %49, %50, %cst_29 {dimension_numbers = #tpu.dot_dimension_numbers<[1], [0], [0], [1], [0, 0, 1, 1], [], []>} : vector<256x64xbf16>, vector<64x128xbf16>, vector<256x128xf32> -> vector<256x128xf32>
    %c0_30 = arith.constant 0 : index
    %c0_31 = arith.constant 0 : index
    %52 = vector.load %arg11[%c0_30, %c0_31] : memref<1x128xf32, #tpu.memory_space<vmem>>, vector<1x128xf32>
    %53 = vector.broadcast %52 : vector<1x128xf32> to vector<256x128xf32>
    %54 = arith.addf %51, %53 : vector<256x128xf32>
    %55 = arith.addf %0, %54 : vector<256x128xf32>
    %c0_32 = arith.constant 0 : index
    %c0_33 = arith.constant 0 : index
    %56 = vector.load %arg12[%c0_32, %c0_33] : memref<256x128xf32, #tpu.memory_space<vmem>>, vector<256x128xf32>
    tpu.vector_store %arg12[%c0_32, %c0_33], %55 {strides = array<i32>} : memref<256x128xf32, #tpu.memory_space<vmem>>, vector<256x128xf32>,
    return
  }
  func.func @transform_0(%arg0: i32) -> (i32, i32) {
    %c0_i32 = arith.constant 0 : i32
    %c0_i32_0 = arith.constant 0 : i32
    return %arg0, %c0_i32 : i32, i32
  }
  func.func @transform_1(%arg0: i32) -> (i32, i32) {
    %c0_i32 = arith.constant 0 : i32
    %c0_i32_0 = arith.constant 0 : i32
    %c0_i32_1 = arith.constant 0 : i32
    return %c0_i32, %c0_i32_0 : i32, i32
  }
  func.func @transform_2(%arg0: i32) -> (i32, i32) {
    %c0_i32 = arith.constant 0 : i32
    %c0_i32_0 = arith.constant 0 : i32
    %c0_i32_1 = arith.constant 0 : i32
    return %c0_i32, %c0_i32_0 : i32, i32
  }
  func.func @transform_3(%arg0: i32) -> (i32, i32) {
    %c0_i32 = arith.constant 0 : i32
    %c0_i32_0 = arith.constant 0 : i32
    %c0_i32_1 = arith.constant 0 : i32
    return %c0_i32, %c0_i32_0 : i32, i32
  }
  func.func @transform_4(%arg0: i32) -> (i32, i32) {
    %c0_i32 = arith.constant 0 : i32
    %c0_i32_0 = arith.constant 0 : i32
    %c0_i32_1 = arith.constant 0 : i32
    return %c0_i32, %c0_i32_0 : i32, i32
  }
  func.func @transform_5(%arg0: i32) -> (i32, i32) {
    %c0_i32 = arith.constant 0 : i32
    %c0_i32_0 = arith.constant 0 : i32
    %c0_i32_1 = arith.constant 0 : i32
    return %c0_i32, %c0_i32_0 : i32, i32
  }
  func.func @transform_6(%arg0: i32) -> (i32, i32) {
    %c0_i32 = arith.constant 0 : i32
    %c0_i32_0 = arith.constant 0 : i32
    %c0_i32_1 = arith.constant 0 : i32
    return %c0_i32, %c0_i32_0 : i32, i32
  }
  func.func @transform_7(%arg0: i32) -> (i32, i32) {
    %c0_i32 = arith.constant 0 : i32
    %c0_i32_0 = arith.constant 0 : i32
    %c0_i32_1 = arith.constant 0 : i32
    return %c0_i32, %c0_i32_0 : i32, i32
  }
  func.func @transform_8(%arg0: i32) -> (i32, i32) {
    %c0_i32 = arith.constant 0 : i32
    %c0_i32_0 = arith.constant 0 : i32
    %c0_i32_1 = arith.constant 0 : i32
    return %c0_i32, %c0_i32_0 : i32, i32
  }
  func.func @transform_9(%arg0: i32) -> (i32, i32) {
    %c0_i32 = arith.constant 0 : i32
    %c0_i32_0 = arith.constant 0 : i32
    %c0_i32_1 = arith.constant 0 : i32
    return %c0_i32, %c0_i32_0 : i32, i32
  }
  func.func @transform_10(%arg0: i32) -> (i32, i32) {
    %c0_i32 = arith.constant 0 : i32
    %c0_i32_0 = arith.constant 0 : i32
    %c0_i32_1 = arith.constant 0 : i32
    return %c0_i32, %c0_i32_0 : i32, i32
  }
  func.func @transform_11(%arg0: i32) -> (i32, i32) {
    %c0_i32 = arith.constant 0 : i32
    %c0_i32_0 = arith.constant 0 : i32
    return %arg0, %c0_i32 : i32, i32
  }
}

</mosaic_0001>

<llo_original>
// kernel: tpu_custom_call.1
$region0: #{tpu_custom_call.1}
  #allocation0 [shape = 'u32[]', space=smem, size = 0x4, offset = 0x4, fixed_abs, tag = 'smem constant byte address 0x4 - core index']
  #allocation1 [shape = 'u32[72,128]{1,0:T(1,128)}', space=vmem, size = 0x9000, scoped, tag = 'internal scratch']
  %s0 = inlined_call_operand.hbm [shape: f32[512,128], index: 0, kind: input, shape index: {}]
  %s1 = inlined_call_operand.vmem [shape: bf16[128,64], index: 1, kind: input, shape index: {}]
  %s2 = inlined_call_operand.vmem [shape: f32[1,64], index: 2, kind: input, shape index: {}]
  %s3 = inlined_call_operand.vmem [shape: bf16[64,64], index: 3, kind: input, shape index: {}]
  %s4 = inlined_call_operand.vmem [shape: f32[1,64], index: 4, kind: input, shape index: {}]
  %s5 = inlined_call_operand.vmem [shape: bf16[64,64], index: 5, kind: input, shape index: {}]
  %s6 = inlined_call_operand.vmem [shape: f32[1,64], index: 6, kind: input, shape index: {}]
  %s7 = inlined_call_operand.vmem [shape: f32[1,64], index: 7, kind: input, shape index: {}]
  %s8 = inlined_call_operand.vmem [shape: f32[1,64], index: 8, kind: input, shape index: {}]
  %s9 = inlined_call_operand.vmem [shape: bf16[64,128], index: 9, kind: input, shape index: {}]
  %s10 = inlined_call_operand.vmem [shape: f32[1,128], index: 10, kind: input, shape index: {}]
  %s11 = inlined_call_operand.hbm [shape: f32[512,128], index: 11, kind: output, shape index: {}]
  %s12 = sld [smem:[#allocation0]]
  $region81: #{tpu_custom_call.1} parent=0
    _
  %s14 = ssub.s32 1, %s12
  %s15 = scalar_select 0, %s14, %s12
  $region1: #{tpu_custom_call.1} parent=0
    #allocation2 [shape = 'u8[262144]{0}', space=vmem, size = 0x40000, scoped, tag = 'input window, operand 0']
    #allocation3 [shape = 's32[2]{0}', space=sflag, size = 0x8, scoped, tag = 'scoped memory for tpu_custom_call.1']
    #allocation4 [shape = 's32[2]{0}', space=sflag, size = 0x8, scoped, tag = 'scoped memory for tpu_custom_call.1']
    #allocation5 [shape = 'u8[262144]{0}', space=vmem, size = 0x40000, scoped, tag = 'output window, operand 0']
    %16 = vsyncpa [#allocation3], 0
    %s17 = scalar_lea.sflag [#allocation3], 1
    %18 = vsyncpa %s17, 0
    %19 = vsyncpa [#allocation4], 0
    %s20 = scalar_lea.sflag [#allocation4], 1
    %21 = vsyncpa %s20, 0
    loop: start=0, step=1, limit=4
    $region2: #{tpu_custom_call.1} parent=1 // loop_pre_header
      _
    $region3: #{tpu_custom_call.1} parent=1 // loop_header
      %s23 = sphi 0, %s27
      %p24 = scmp.ge.s32.totalorder %s23, 4
      %s33 = sphi 0, %s35
      %s36 = sphi 0, %s33
      %s37 = sphi 0, %s36
      %s53 = sphi 0, %s37
      %s57 = sphi 0, %s57
      %s59 = sphi 0, %s57
      %s60 = sphi 0, %s59
      %s74 = sphi 0, %s60
      %s78 = sphi 0, %s78
      %s80 = sphi 0, %s78
      %s81 = sphi 0, %s80
      %s95 = sphi 0, %s81
      %s99 = sphi 0, %s99
      %s101 = sphi 0, %s99
      %s102 = sphi 0, %s101
      %s116 = sphi 0, %s102
      %s120 = sphi 0, %s120
      %s122 = sphi 0, %s120
      %s123 = sphi 0, %s122
      %s137 = sphi 0, %s123
      %s141 = sphi 0, %s141
      %s143 = sphi 0, %s141
      %s144 = sphi 0, %s143
      %s158 = sphi 0, %s144
      %s162 = sphi 0, %s162
      %s164 = sphi 0, %s162
      %s165 = sphi 0, %s164
      %s179 = sphi 0, %s165
      %s183 = sphi 0, %s183
      %s185 = sphi 0, %s183
      %s186 = sphi 0, %s185
      %s200 = sphi 0, %s186
      %s204 = sphi 0, %s204
      %s206 = sphi 0, %s204
      %s207 = sphi 0, %s206
      %s221 = sphi 0, %s207
      %s225 = sphi 0, %s225
      %s227 = sphi 0, %s225
      %s228 = sphi 0, %s227
      %s242 = sphi 0, %s228
      %s246 = sphi 0, %s246
      %s248 = sphi 0, %s246
      %s249 = sphi 0, %s248
      %s263 = sphi 0, %s249
      %s269 = sphi 0, %s271
      %s272 = sphi 0, %s269
      %s273 = sphi 0, %s272
      %s289 = sphi 0, %s273
    $region4: #{tpu_custom_call.1} parent=1 // loop_header_branch
      %26 = sbr.rel (%p24) target = $region8
    $region5: #{tpu_custom_call.1} parent=1 // loop_body
      %s28 = ssub.s32 %s23, 1
      %s29 = ssub.s32 %s23, 2
      %s30 = sadd.s32 %s23, 1
      %s31 = ssub.s32 %s23, %s30
      %p32 = scmp.eq.s32.totalorder %s31, 0
      %s34 = sadd.s32 %s33, 1
      %s35 = scalar_select %p32, %s33, %s34
      %p38 = pneg %p32
      %p39 = scmp.eq.s32.totalorder %s23, 1
      %p40 = por %p38, %p39
      %p41 = scmp.ne.s32.totalorder %s33, %s36
      %p42 = scmp.eq.s32.totalorder %s23, 0
      %p43 = por %p41, %p42
      %p44 = scmp.ne.s32.totalorder %s33, %s36
      %p45 = scmp.eq.s32.totalorder %s28, 1
      %p46 = por %p44, %p45
      %p47 = scmp.ne.s32.totalorder %s36, %s37
      %p48 = scmp.eq.s32.totalorder %s28, 0
      %p49 = por %p47, %p48
      %p50 = scmp.ne.s32.totalorder %s36, %s37
      %p51 = scmp.eq.s32.totalorder %s29, 1
      %p52 = por %p50, %p51
      %p54 = scmp.ne.s32.totalorder %s37, %s53
      %p55 = scmp.eq.s32.totalorder %s29, 0
      %p56 = por %p54, %p55
      %s58 = sadd.s32 %s57, 1
      %p61 = scmp.eq.s32.totalorder %s23, 1
      %p62 = scmp.ne.s32.totalorder %s57, %s59
      %p63 = scmp.eq.s32.totalorder %s23, 0
      %p64 = por %p62, %p63
      %p65 = scmp.ne.s32.totalorder %s57, %s59
      %p66 = scmp.eq.s32.totalorder %s28, 1
      %p67 = por %p65, %p66
      %p68 = scmp.ne.s32.totalorder %s59, %s60
      %p69 = scmp.eq.s32.totalorder %s28, 0
      %p70 = por %p68, %p69
      %p71 = scmp.ne.s32.totalorder %s59, %s60
      %p72 = scmp.eq.s32.totalorder %s29, 1
      %p73 = por %p71, %p72
      %p75 = scmp.ne.s32.totalorder %s60, %s74
      %p76 = scmp.eq.s32.totalorder %s29, 0
      %p77 = por %p75, %p76
      %s79 = sadd.s32 %s78, 1
      %p82 = scmp.eq.s32.totalorder %s23, 1
      %p83 = scmp.ne.s32.totalorder %s78, %s80
      %p84 = scmp.eq.s32.totalorder %s23, 0
      %p85 = por %p83, %p84
      %p86 = scmp.ne.s32.totalorder %s78, %s80
      %p87 = scmp.eq.s32.totalorder %s28, 1
      %p88 = por %p86, %p87
      %p89 = scmp.ne.s32.totalorder %s80, %s81
      %p90 = scmp.eq.s32.totalorder %s28, 0
      %p91 = por %p89, %p90
      %p92 = scmp.ne.s32.totalorder %s80, %s81
      %p93 = scmp.eq.s32.totalorder %s29, 1
      %p94 = por %p92, %p93
      %p96 = scmp.ne.s32.totalorder %s81, %s95
      %p97 = scmp.eq.s32.totalorder %s29, 0
      %p98 = por %p96, %p97
      %s100 = sadd.s32 %s99, 1
      %p103 = scmp.eq.s32.totalorder %s23, 1
      %p104 = scmp.ne.s32.totalorder %s99, %s101
      %p105 = scmp.eq.s32.totalorder %s23, 0
      %p106 = por %p104, %p105
      %p107 = scmp.ne.s32.totalorder %s99, %s101
      %p108 = scmp.eq.s32.totalorder %s28, 1
      %p109 = por %p107, %p108
      %p110 = scmp.ne.s32.totalorder %s101, %s102
      %p111 = scmp.eq.s32.totalorder %s28, 0
      %p112 = por %p110, %p111
      %p113 = scmp.ne.s32.totalorder %s101, %s102
      %p114 = scmp.eq.s32.totalorder %s29, 1
      %p115 = por %p113, %p114
      %p117 = scmp.ne.s32.totalorder %s102, %s116
      %p118 = scmp.eq.s32.totalorder %s29, 0
      %p119 = por %p117, %p118
      %s121 = sadd.s32 %s120, 1
      %p124 = scmp.eq.s32.totalorder %s23, 1
      %p125 = scmp.ne.s32.totalorder %s120, %s122
      %p126 = scmp.eq.s32.totalorder %s23, 0
      %p127 = por %p125, %p126
      %p128 = scmp.ne.s32.totalorder %s120, %s122
      %p129 = scmp.eq.s32.totalorder %s28, 1
      %p130 = por %p128, %p129
      %p131 = scmp.ne.s32.totalorder %s122, %s123
      %p132 = scmp.eq.s32.totalorder %s28, 0
      %p133 = por %p131, %p132
      %p134 = scmp.ne.s32.totalorder %s122, %s123
      %p135 = scmp.eq.s32.totalorder %s29, 1
      %p136 = por %p134, %p135
      %p138 = scmp.ne.s32.totalorder %s123, %s137
      %p139 = scmp.eq.s32.totalorder %s29, 0
      %p140 = por %p138, %p139
      %s142 = sadd.s32 %s141, 1
      %p145 = scmp.eq.s32.totalorder %s23, 1
      %p146 = scmp.ne.s32.totalorder %s141, %s143
      %p147 = scmp.eq.s32.totalorder %s23, 0
      %p148 = por %p146, %p147
      %p149 = scmp.ne.s32.totalorder %s141, %s143
      %p150 = scmp.eq.s32.totalorder %s28, 1
      %p151 = por %p149, %p150
      %p152 = scmp.ne.s32.totalorder %s143, %s144
      %p153 = scmp.eq.s32.totalorder %s28, 0
      %p154 = por %p152, %p153
      %p155 = scmp.ne.s32.totalorder %s143, %s144
      %p156 = scmp.eq.s32.totalorder %s29, 1
      %p157 = por %p155, %p156
      %p159 = scmp.ne.s32.totalorder %s144, %s158
      %p160 = scmp.eq.s32.totalorder %s29, 0
      %p161 = por %p159, %p160
      %s163 = sadd.s32 %s162, 1
      %p166 = scmp.eq.s32.totalorder %s23, 1
      %p167 = scmp.ne.s32.totalorder %s162, %s164
      %p168 = scmp.eq.s32.totalorder %s23, 0
      %p169 = por %p167, %p168
      %p170 = scmp.ne.s32.totalorder %s162, %s164
      %p171 = scmp.eq.s32.totalorder %s28, 1
      %p172 = por %p170, %p171
      %p173 = scmp.ne.s32.totalorder %s164, %s165
      %p174 = scmp.eq.s32.totalorder %s28, 0
      %p175 = por %p173, %p174
      %p176 = scmp.ne.s32.totalorder %s164, %s165
      %p177 = scmp.eq.s32.totalorder %s29, 1
      %p178 = por %p176, %p177
      %p180 = scmp.ne.s32.totalorder %s165, %s179
      %p181 = scmp.eq.s32.totalorder %s29, 0
      %p182 = por %p180, %p181
      %s184 = sadd.s32 %s183, 1
      %p187 = scmp.eq.s32.totalorder %s23, 1
      %p188 = scmp.ne.s32.totalorder %s183, %s185
      %p189 = scmp.eq.s32.totalorder %s23, 0
      %p190 = por %p188, %p189
      %p191 = scmp.ne.s32.totalorder %s183, %s185
      %p192 = scmp.eq.s32.totalorder %s28, 1
      %p193 = por %p191, %p192
      %p194 = scmp.ne.s32.totalorder %s185, %s186
      %p195 = scmp.eq.s32.totalorder %s28, 0
      %p196 = por %p194, %p195
      %p197 = scmp.ne.s32.totalorder %s185, %s186
      %p198 = scmp.eq.s32.totalorder %s29, 1
      %p199 = por %p197, %p198
      %p201 = scmp.ne.s32.totalorder %s186, %s200
      %p202 = scmp.eq.s32.totalorder %s29, 0
      %p203 = por %p201, %p202
      %s205 = sadd.s32 %s204, 1
      %p208 = scmp.eq.s32.totalorder %s23, 1
      %p209 = scmp.ne.s32.totalorder %s204, %s206
      %p210 = scmp.eq.s32.totalorder %s23, 0
      %p211 = por %p209, %p210
      %p212 = scmp.ne.s32.totalorder %s204, %s206
      %p213 = scmp.eq.s32.totalorder %s28, 1
      %p214 = por %p212, %p213
      %p215 = scmp.ne.s32.totalorder %s206, %s207
      %p216 = scmp.eq.s32.totalorder %s28, 0
      %p217 = por %p215, %p216
      %p218 = scmp.ne.s32.totalorder %s206, %s207
      %p219 = scmp.eq.s32.totalorder %s29, 1
      %p220 = por %p218, %p219
      %p222 = scmp.ne.s32.totalorder %s207, %s221
      %p223 = scmp.eq.s32.totalorder %s29, 0
      %p224 = por %p222, %p223
      %s226 = sadd.s32 %s225, 1
      %p229 = scmp.eq.s32.totalorder %s23, 1
      %p230 = scmp.ne.s32.totalorder %s225, %s227
      %p231 = scmp.eq.s32.totalorder %s23, 0
      %p232 = por %p230, %p231
      %p233 = scmp.ne.s32.totalorder %s225, %s227
      %p234 = scmp.eq.s32.totalorder %s28, 1
      %p235 = por %p233, %p234
      %p236 = scmp.ne.s32.totalorder %s227, %s228
      %p237 = scmp.eq.s32.totalorder %s28, 0
      %p238 = por %p236, %p237
      %p239 = scmp.ne.s32.totalorder %s227, %s228
      %p240 = scmp.eq.s32.totalorder %s29, 1
      %p241 = por %p239, %p240
      %p243 = scmp.ne.s32.totalorder %s228, %s242
      %p244 = scmp.eq.s32.totalorder %s29, 0
      %p245 = por %p243, %p244
      %s247 = sadd.s32 %s246, 1
      %p250 = scmp.eq.s32.totalorder %s23, 1
      %p251 = scmp.ne.s32.totalorder %s246, %s248
      %p252 = scmp.eq.s32.totalorder %s23, 0
      %p253 = por %p251, %p252
      %p254 = scmp.ne.s32.totalorder %s246, %s248
      %p255 = scmp.eq.s32.totalorder %s28, 1
      %p256 = por %p254, %p255
      %p257 = scmp.ne.s32.totalorder %s248, %s249
      %p258 = scmp.eq.s32.totalorder %s28, 0
      %p259 = por %p257, %p258
      %p260 = scmp.ne.s32.totalorder %s248, %s249
      %p261 = scmp.eq.s32.totalorder %s29, 1
      %p262 = por %p260, %p261
      %p264 = scmp.ne.s32.totalorder %s249, %s263
      %p265 = scmp.eq.s32.totalorder %s29, 0
      %p266 = por %p264, %p265
      %s267 = ssub.s32 %s23, %s30
      %p268 = scmp.eq.s32.totalorder %s267, 0
      %s270 = sadd.s32 %s269, 1
      %s271 = scalar_select %p268, %s269, %s270
      %p274 = pneg %p268
      %p275 = scmp.eq.s32.totalorder %s23, 1
      %p276 = por %p274, %p275
      %p277 = scmp.ne.s32.totalorder %s269, %s272
      %p278 = scmp.eq.s32.totalorder %s23, 0
      %p279 = por %p277, %p278
      %p280 = scmp.ne.s32.totalorder %s269, %s272
      %p281 = scmp.eq.s32.totalorder %s28, 1
      %p282 = por %p280, %p281
      %p283 = scmp.ne.s32.totalorder %s272, %s273
      %p284 = scmp.eq.s32.totalorder %s28, 0
      %p285 = por %p283, %p284
      %p286 = scmp.ne.s32.totalorder %s272, %s273
      %p287 = scmp.eq.s32.totalorder %s29, 1
      %p288 = por %p286, %p287
      %p290 = scmp.ne.s32.totalorder %s273, %s289
      %p291 = scmp.eq.s32.totalorder %s29, 0
      %p292 = por %p290, %p291
      %p293 = scmp.le.s32.totalorder 1, %s23
      %p294 = scmp.lt.s32.totalorder %s23, 3
      %p295 = pnand %p293, %p294
      %p296 = pneg %p295
      // Predicated region
      $region9: #{tpu_custom_call.1} parent=5 // pred_check
        _
      $region10: #{tpu_custom_call.1} parent=5 // pred_check_branch
        %298 = sbr.rel (%p295) target = $region12
      $region11: #{tpu_custom_call.1} parent=5 // pred_region
        %s299 = ssub.s32 %s23, 1
        // Predicated region
        $region13: #{tpu_custom_call.1} parent=11 // pred_check
          %p300 = pneg %p70
        $region14: #{tpu_custom_call.1} parent=11 // pred_check_branch
          %302 = sbr.rel (%p300) target = $region16
        $region15: #{tpu_custom_call.1} parent=11 // pred_region
          _
        $region16: #{tpu_custom_call.1} parent=11 // pred_fallthru
          _
        // Predicated region
        $region17: #{tpu_custom_call.1} parent=11 // pred_check
          %p303 = pneg %p91
        $region18: #{tpu_custom_call.1} parent=11 // pred_check_branch
          %305 = sbr.rel (%p303) target = $region20
        $region19: #{tpu_custom_call.1} parent=11 // pred_region
          _
        $region20: #{tpu_custom_call.1} parent=11 // pred_fallthru
          _
        // Predicated region
        $region21: #{tpu_custom_call.1} parent=11 // pred_check
          %p306 = pneg %p112
        $region22: #{tpu_custom_call.1} parent=11 // pred_check_branch
          %308 = sbr.rel (%p306) target = $region24
        $region23: #{tpu_custom_call.1} parent=11 // pred_region
          _
        $region24: #{tpu_custom_call.1} parent=11 // pred_fallthru
          _
        // Predicated region
        $region25: #{tpu_custom_call.1} parent=11 // pred_check
          %p309 = pneg %p133
        $region26: #{tpu_custom_call.1} parent=11 // pred_check_branch
          %311 = sbr.rel (%p309) target = $region28
        $region27: #{tpu_custom_call.1} parent=11 // pred_region
          _
        $region28: #{tpu_custom_call.1} parent=11 // pred_fallthru
          _
        // Predicated region
        $region29: #{tpu_custom_call.1} parent=11 // pred_check
          %p312 = pneg %p154
        $region30: #{tpu_custom_call.1} parent=11 // pred_check_branch
          %314 = sbr.rel (%p312) target = $region32
        $region31: #{tpu_custom_call.1} parent=11 // pred_region
          _
        $region32: #{tpu_custom_call.1} parent=11 // pred_fallthru
          _
        // Predicated region
        $region33: #{tpu_custom_call.1} parent=11 // pred_check
          %p315 = pneg %p175
        $region34: #{tpu_custom_call.1} parent=11 // pred_check_branch
          %317 = sbr.rel (%p315) target = $region36
        $region35: #{tpu_custom_call.1} parent=11 // pred_region
          _
        $region36: #{tpu_custom_call.1} parent=11 // pred_fallthru
          _
        // Predicated region
        $region37: #{tpu_custom_call.1} parent=11 // pred_check
          %p318 = pneg %p196
        $region38: #{tpu_custom_call.1} parent=11 // pred_check_branch
          %320 = sbr.rel (%p318) target = $region40
        $region39: #{tpu_custom_call.1} parent=11 // pred_region
          _
        $region40: #{tpu_custom_call.1} parent=11 // pred_fallthru
          _
        // Predicated region
        $region41: #{tpu_custom_call.1} parent=11 // pred_check
          %p321 = pneg %p217
        $region42: #{tpu_custom_call.1} parent=11 // pred_check_branch
          %323 = sbr.rel (%p321) target = $region44
        $region43: #{tpu_custom_call.1} parent=11 // pred_region
          _
        $region44: #{tpu_custom_call.1} parent=11 // pred_fallthru
          _
        // Predicated region
        $region45: #{tpu_custom_call.1} parent=11 // pred_check
          %p324 = pneg %p238
        $region46: #{tpu_custom_call.1} parent=11 // pred_check_branch
          %326 = sbr.rel (%p324) target = $region48
        $region47: #{tpu_custom_call.1} parent=11 // pred_region
          _
        $region48: #{tpu_custom_call.1} parent=11 // pred_fallthru
          _
        // Predicated region
        $region49: #{tpu_custom_call.1} parent=11 // pred_check
          %p327 = pneg %p259
        $region50: #{tpu_custom_call.1} parent=11 // pred_check_branch
          %329 = sbr.rel (%p327) target = $region52
        $region51: #{tpu_custom_call.1} parent=11 // pred_region
          _
        $region52: #{tpu_custom_call.1} parent=11 // pred_fallthru
          _
      $region12: #{tpu_custom_call.1} parent=5 // pred_fallthru
        _
      %p330 = scmp.lt.s32.totalorder %s23, 2
      // Predicated region
      $region53: #{tpu_custom_call.1} parent=5 // pred_check
        %p331 = pneg %p330
      $region54: #{tpu_custom_call.1} parent=5 // pred_check_branch
        %333 = sbr.rel (%p331) target = $region56
      $region55: #{tpu_custom_call.1} parent=5 // pred_region
        // Predicated region
        $region57: #{tpu_custom_call.1} parent=55 // pred_check
          %p334 = pneg %p43
        $region58: #{tpu_custom_call.1} parent=55 // pred_check_branch
          %336 = sbr.rel (%p334) target = $region60
        $region59: #{tpu_custom_call.1} parent=55 // pred_region
          %s337 = sand.u32 %s33, 1
          %s338 = scalar_lea.sflag [#allocation3], %s337
          %s339 = sand.u32 %s33, 1
          %s340 = smul.addr %s339, 256
          %s341 = scalar_lea.vmem [#allocation2], %s340
          %s342 = smul.u32 32, %s23
          %344 = vsyncadd %s338, 0
          %s345 = smul.addr %s342, 8
          %s346 = scalar_lea.hbm %s0, %s345
          %s347 = sshll.u32 %s346, 4
          %s348 = int_to_ptr.hbm [resolvable:$true] %s347
          %s349 = sshll.u32 %s341, 4
          %s350 = int_to_ptr.vmem [resolvable:$true] %s349
          %355 = dma.hbm_to_vmem [thread:$0]  %s348, 4096, %s350, %s338, 128, 128, 8
        $region60: #{tpu_custom_call.1} parent=55 // pred_fallthru
          _
      $region56: #{tpu_custom_call.1} parent=5 // pred_fallthru
        _
      %p356 = scmp.le.s32.totalorder 1, %s23
      %p357 = scmp.lt.s32.totalorder %s23, 3
      %p358 = pnand %p356, %p357
      %p359 = pneg %p358
      // Predicated region
      $region61: #{tpu_custom_call.1} parent=5 // pred_check
        _
      $region62: #{tpu_custom_call.1} parent=5 // pred_check_branch
        %361 = sbr.rel (%p358) target = $region64
      $region63: #{tpu_custom_call.1} parent=5 // pred_region
        %s362 = ssub.s32 %s23, 1
        %s363 = sand.u32 %s36, 1
        %s364 = scalar_lea.sflag [#allocation3], %s363
        %s365 = sand.u32 %s36, 1
        %s366 = smul.addr %s365, 256
        %s367 = scalar_lea.vmem [#allocation2], %s366
        // Predicated region
        $region65: #{tpu_custom_call.1} parent=63 // pred_check
          %p368 = pneg %p49
        $region66: #{tpu_custom_call.1} parent=63 // pred_check_branch
          %370 = sbr.rel (%p368) target = $region68
        $region67: #{tpu_custom_call.1} parent=63 // pred_region
          %372 = dma.done %s364, 4096
        $region68: #{tpu_custom_call.1} parent=63 // pred_fallthru
          _
        %s373 = sand.u32 %s36, 1
        %s374 = scalar_lea.sflag [#allocation3], %s373
        %s375 = sand.u32 %s36, 1
        %s376 = smul.addr %s375, 256
        %s377 = scalar_lea.vmem [#allocation2], %s376
        %p378 = pneg %p49
        %p379 = pneg %p46
        %p380 = pneg %p70
        %p381 = pneg %p67
        %p382 = pneg %p91
        %p383 = pneg %p88
        %p384 = pneg %p112
        %p385 = pneg %p109
        %p386 = pneg %p133
        %p387 = pneg %p130
        %p388 = pneg %p154
        %p389 = pneg %p151
        %p390 = pneg %p175
        %p391 = pneg %p172
        %p392 = pneg %p196
        %p393 = pneg %p193
        %p394 = pneg %p217
        %p395 = pneg %p214
        %p396 = pneg %p238
        %p397 = pneg %p235
        %p398 = pneg %p259
        %p399 = pneg %p256
        %p400 = pneg %p285
        %p401 = pneg %p282
        %s402 = sand.u32 %s272, 1
        %s403 = scalar_lea.sflag [#allocation4], %s402
        %s404 = sand.u32 %s272, 1
        %s405 = smul.addr %s404, 256
        %s406 = scalar_lea.vmem [#allocation5], %s405
        %s407 = smul.u32 32, %s28
        %s408 = smul.u32 32, %s28
        %v410 = vld [vmem:[%s367] sm:$0xff]
        %v411 = vld [vmem:[%s367 + $0x8] sm:$0xff]
        %v412 = vld [vmem:[%s367 + $0x10] sm:$0xff]
        %v413 = vld [vmem:[%s367 + $0x18] sm:$0xff]
        %v414 = vld [vmem:[%s367 + $0x20] sm:$0xff]
        %v415 = vld [vmem:[%s367 + $0x28] sm:$0xff]
        %v416 = vld [vmem:[%s367 + $0x30] sm:$0xff]
        %v417 = vld [vmem:[%s367 + $0x38] sm:$0xff]
        %v418 = vld [vmem:[%s367 + $0x40] sm:$0xff]
        %v419 = vld [vmem:[%s367 + $0x48] sm:$0xff]
        %v420 = vld [vmem:[%s367 + $0x50] sm:$0xff]
        %v421 = vld [vmem:[%s367 + $0x58] sm:$0xff]
        %v422 = vld [vmem:[%s367 + $0x60] sm:$0xff]
        %v423 = vld [vmem:[%s367 + $0x68] sm:$0xff]
        %v424 = vld [vmem:[%s367 + $0x70] sm:$0xff]
        %v425 = vld [vmem:[%s367 + $0x78] sm:$0xff]
        %v426 = vld [vmem:[%s367 + $0x80] sm:$0xff]
        %v427 = vld [vmem:[%s367 + $0x88] sm:$0xff]
        %v428 = vld [vmem:[%s367 + $0x90] sm:$0xff]
        %v429 = vld [vmem:[%s367 + $0x98] sm:$0xff]
        %v430 = vld [vmem:[%s367 + $0xa0] sm:$0xff]
        %v431 = vld [vmem:[%s367 + $0xa8] sm:$0xff]
        %v432 = vld [vmem:[%s367 + $0xb0] sm:$0xff]
        %v433 = vld [vmem:[%s367 + $0xb8] sm:$0xff]
        %v434 = vld [vmem:[%s367 + $0xc0] sm:$0xff]
        %v435 = vld [vmem:[%s367 + $0xc8] sm:$0xff]
        %v436 = vld [vmem:[%s367 + $0xd0] sm:$0xff]
        %v437 = vld [vmem:[%s367 + $0xd8] sm:$0xff]
        %v438 = vld [vmem:[%s367 + $0xe0] sm:$0xff]
        %v439 = vld [vmem:[%s367 + $0xe8] sm:$0xff]
        %v440 = vld [vmem:[%s367 + $0xf0] sm:$0xff]
        %v441 = vld [vmem:[%s367 + $0xf8] sm:$0xff]
        %v442 = vpack.c.bf16 %v411, %v410
        %v443 = vpack.c.bf16 %v413, %v412
        %v444 = vpack.c.bf16 %v415, %v414
        %v445 = vpack.c.bf16 %v417, %v416
        %v446 = vpack.c.bf16 %v419, %v418
        %v447 = vpack.c.bf16 %v421, %v420
        %v448 = vpack.c.bf16 %v423, %v422
        %v449 = vpack.c.bf16 %v425, %v424
        %v450 = vpack.c.bf16 %v427, %v426
        %v451 = vpack.c.bf16 %v429, %v428
        %v452 = vpack.c.bf16 %v431, %v430
        %v453 = vpack.c.bf16 %v433, %v432
        %v454 = vpack.c.bf16 %v435, %v434
        %v455 = vpack.c.bf16 %v437, %v436
        %v456 = vpack.c.bf16 %v439, %v438
        %v457 = vpack.c.bf16 %v441, %v440
        %v458 = vld [vmem:[%s1] sm:$0xf]
        %v459 = vld [vmem:[%s1 + $0x4] sm:$0xf]
        %v460 = vld [vmem:[%s1 + $0x8] sm:$0xf]
        %v461 = vld [vmem:[%s1 + $0xc] sm:$0xf]
        %v462 = vld [vmem:[%s1 + $0x10] sm:$0xf]
        %v463 = vld [vmem:[%s1 + $0x14] sm:$0xf]
        %v464 = vld [vmem:[%s1 + $0x18] sm:$0xf]
        %v465 = vld [vmem:[%s1 + $0x1c] sm:$0xf]
        %v466 = vld [vmem:[%s1 + $0x20] sm:$0xf]
        %v467 = vld [vmem:[%s1 + $0x24] sm:$0xf]
        %v468 = vld [vmem:[%s1 + $0x28] sm:$0xf]
        %v469 = vld [vmem:[%s1 + $0x2c] sm:$0xf]
        %v470 = vld [vmem:[%s1 + $0x30] sm:$0xf]
        %v471 = vld [vmem:[%s1 + $0x34] sm:$0xf]
        %v472 = vld [vmem:[%s1 + $0x38] sm:$0xf]
        %v473 = vld [vmem:[%s1 + $0x3c] sm:$0xf]
        %v474 = vld [vmem:[%s2] sm:$0x1]
        %v476 = vperm.slane %v474, 0
        %v494 = vunpack.c.l.b16 %v458
        %v495 = vunpack.c.l.b16 %v459
        %v496 = vunpack.c.l.b16 %v460
        %v497 = vunpack.c.l.b16 %v461
        %v498 = vunpack.c.l.b16 %v462
        %v499 = vunpack.c.l.b16 %v463
        %v500 = vunpack.c.l.b16 %v464
        %v501 = vunpack.c.l.b16 %v465
        %v502 = vunpack.c.l.b16 %v466
        %v503 = vunpack.c.l.b16 %v467
        %v504 = vunpack.c.l.b16 %v468
        %v505 = vunpack.c.l.b16 %v469
        %v506 = vunpack.c.l.b16 %v470
        %v507 = vunpack.c.l.b16 %v471
        %v508 = vunpack.c.l.b16 %v472
        %v509 = vunpack.c.l.b16 %v473
        %v510 = vpack.c.b16 %v495, %v494
        %v511 = vpack.c.b16 %v497, %v496
        %v512 = vpack.c.b16 %v499, %v498
        %v513 = vpack.c.b16 %v501, %v500
        %v514 = vpack.c.b16 %v503, %v502
        %v515 = vpack.c.b16 %v505, %v504
        %v516 = vpack.c.b16 %v507, %v506
        %v517 = vpack.c.b16 %v509, %v508
        %526 = vmatpush.bf16.msra.mxu0 %v517
        %527 = vmatpush.bf16.msra.mxu0 %v516
        %528 = vmatpush.bf16.msra.mxu0 %v515
        %529 = vmatpush.bf16.msra.mxu0 %v514
        %530 = vmatpush.bf16.msra.mxu0 %v513
        %531 = vmatpush.bf16.msra.mxu0 %v512
        %532 = vmatpush.bf16.msra.mxu0 %v511
        %533 = vmatpush.bf16.msra.mxu0 %v510
        %534 = vmatmul.bf16.gmra.mxu0 %v442
        %v535 = vpop.f32.mrf.mxu0
        %v536 = vadd.f32 %v476, %v535
        %v537 = vpop.f32.mrf.mxu0
        %v538 = vadd.f32 %v476, %v537
        %539 = vmatmul.bf16.gmra.mxu0 %v443
        %v540 = vpop.f32.mrf.mxu0
        %v541 = vadd.f32 %v476, %v540
        %v542 = vpop.f32.mrf.mxu0
        %v543 = vadd.f32 %v476, %v542
        %544 = vmatmul.bf16.gmra.mxu0 %v444
        %v545 = vpop.f32.mrf.mxu0
        %v546 = vadd.f32 %v476, %v545
        %v547 = vpop.f32.mrf.mxu0
        %v548 = vadd.f32 %v476, %v547
        %549 = vmatmul.bf16.gmra.mxu0 %v445
        %v550 = vpop.f32.mrf.mxu0
        %v551 = vadd.f32 %v476, %v550
        %v552 = vpop.f32.mrf.mxu0
        %v553 = vadd.f32 %v476, %v552
        %554 = vmatmul.bf16.gmra.mxu0 %v446
        %v555 = vpop.f32.mrf.mxu0
        %v556 = vadd.f32 %v476, %v555
        %v557 = vpop.f32.mrf.mxu0
        %v558 = vadd.f32 %v476, %v557
        %559 = vmatmul.bf16.gmra.mxu0 %v447
        %v560 = vpop.f32.mrf.mxu0
        %v561 = vadd.f32 %v476, %v560
        %v562 = vpop.f32.mrf.mxu0
        %v563 = vadd.f32 %v476, %v562
        %564 = vmatmul.bf16.gmra.mxu0 %v448
        %v565 = vpop.f32.mrf.mxu0
        %v566 = vadd.f32 %v476, %v565
        %v567 = vpop.f32.mrf.mxu0
        %v568 = vadd.f32 %v476, %v567
        %569 = vmatmul.bf16.gmra.mxu0 %v449
        %v570 = vpop.f32.mrf.mxu0
        %v571 = vadd.f32 %v476, %v570
        %v572 = vpop.f32.mrf.mxu0
        %v573 = vadd.f32 %v476, %v572
        %574 = vmatmul.bf16.gmra.mxu0 %v450
        %v575 = vpop.f32.mrf.mxu0
        %v576 = vadd.f32 %v476, %v575
        %v577 = vpop.f32.mrf.mxu0
        %v578 = vadd.f32 %v476, %v577
        %579 = vmatmul.bf16.gmra.mxu0 %v451
        %v580 = vpop.f32.mrf.mxu0
        %v581 = vadd.f32 %v476, %v580
        %v582 = vpop.f32.mrf.mxu0
        %v583 = vadd.f32 %v476, %v582
        %584 = vmatmul.bf16.gmra.mxu0 %v452
        %v585 = vpop.f32.mrf.mxu0
        %v586 = vadd.f32 %v476, %v585
        %v587 = vpop.f32.mrf.mxu0
        %v588 = vadd.f32 %v476, %v587
        %589 = vmatmul.bf16.gmra.mxu0 %v453
        %v590 = vpop.f32.mrf.mxu0
        %v591 = vadd.f32 %v476, %v590
        %v592 = vpop.f32.mrf.mxu0
        %v593 = vadd.f32 %v476, %v592
        %594 = vmatmul.bf16.gmra.mxu0 %v454
        %v595 = vpop.f32.mrf.mxu0
        %v596 = vadd.f32 %v476, %v595
        %v597 = vpop.f32.mrf.mxu0
        %v598 = vadd.f32 %v476, %v597
        %599 = vmatmul.bf16.gmra.mxu0 %v455
        %v600 = vpop.f32.mrf.mxu0
        %v601 = vadd.f32 %v476, %v600
        %v602 = vpop.f32.mrf.mxu0
        %v603 = vadd.f32 %v476, %v602
        %604 = vmatmul.bf16.gmra.mxu0 %v456
        %v605 = vpop.f32.mrf.mxu0
        %v606 = vadd.f32 %v476, %v605
        %v607 = vpop.f32.mrf.mxu0
        %v608 = vadd.f32 %v476, %v607
        %609 = vmatmul.bf16.gmra.mxu0 %v457
        %v610 = vpop.f32.mrf.mxu0
        %v611 = vadd.f32 %v476, %v610
        %v612 = vpop.f32.mrf.mxu0
        %v613 = vadd.f32 %v476, %v612
        %614 = vdwg.mxu0
        %v615 = vmax.f32 %v536, 0.0
        %v616 = vmax.f32 %v538, 0.0
        %v617 = vmax.f32 %v541, 0.0
        %v618 = vmax.f32 %v543, 0.0
        %v619 = vmax.f32 %v546, 0.0
        %v620 = vmax.f32 %v548, 0.0
        %v621 = vmax.f32 %v551, 0.0
        %v622 = vmax.f32 %v553, 0.0
        %v623 = vmax.f32 %v556, 0.0
        %v624 = vmax.f32 %v558, 0.0
        %v625 = vmax.f32 %v561, 0.0
        %v626 = vmax.f32 %v563, 0.0
        %v627 = vmax.f32 %v566, 0.0
        %v628 = vmax.f32 %v568, 0.0
        %v629 = vmax.f32 %v571, 0.0
        %v630 = vmax.f32 %v573, 0.0
        %v631 = vmax.f32 %v576, 0.0
        %v632 = vmax.f32 %v578, 0.0
        %v633 = vmax.f32 %v581, 0.0
        %v634 = vmax.f32 %v583, 0.0
        %v635 = vmax.f32 %v586, 0.0
        %v636 = vmax.f32 %v588, 0.0
        %v637 = vmax.f32 %v591, 0.0
        %v638 = vmax.f32 %v593, 0.0
        %v639 = vmax.f32 %v596, 0.0
        %v640 = vmax.f32 %v598, 0.0
        %v641 = vmax.f32 %v601, 0.0
        %v642 = vmax.f32 %v603, 0.0
        %v643 = vmax.f32 %v606, 0.0
        %v644 = vmax.f32 %v608, 0.0
        %v645 = vmax.f32 %v611, 0.0
        %v646 = vmax.f32 %v613, 0.0
        %v647 = vpack.c.bf16 %v616, %v615
        %v648 = vpack.c.bf16 %v618, %v617
        %v649 = vpack.c.bf16 %v620, %v619
        %v650 = vpack.c.bf16 %v622, %v621
        %v651 = vpack.c.bf16 %v624, %v623
        %v652 = vpack.c.bf16 %v626, %v625
        %v653 = vpack.c.bf16 %v628, %v627
        %v654 = vpack.c.bf16 %v630, %v629
        %v655 = vpack.c.bf16 %v632, %v631
        %v656 = vpack.c.bf16 %v634, %v633
        %v657 = vpack.c.bf16 %v636, %v635
        %v658 = vpack.c.bf16 %v638, %v637
        %v659 = vpack.c.bf16 %v640, %v639
        %v660 = vpack.c.bf16 %v642, %v641
        %v661 = vpack.c.bf16 %v644, %v643
        %v662 = vpack.c.bf16 %v646, %v645
        %v663 = vld [vmem:[%s3] sm:$0xf]
        %v664 = vld [vmem:[%s3 + $0x4] sm:$0xf]
        %v665 = vld [vmem:[%s3 + $0x8] sm:$0xf]
        %v666 = vld [vmem:[%s3 + $0xc] sm:$0xf]
        %v667 = vld [vmem:[%s3 + $0x10] sm:$0xf]
        %v668 = vld [vmem:[%s3 + $0x14] sm:$0xf]
        %v669 = vld [vmem:[%s3 + $0x18] sm:$0xf]
        %v670 = vld [vmem:[%s3 + $0x1c] sm:$0xf]
        %v671 = vld [vmem:[%s4] sm:$0x1]
        %v673 = vperm.slane %v671, 0
        %v683 = vunpack.c.l.b16 %v663
        %v684 = vunpack.c.l.b16 %v664
        %v685 = vunpack.c.l.b16 %v665
        %v686 = vunpack.c.l.b16 %v666
        %v687 = vunpack.c.l.b16 %v667
        %v688 = vunpack.c.l.b16 %v668
        %v689 = vunpack.c.l.b16 %v669
        %v690 = vunpack.c.l.b16 %v670
        %v691 = vpack.c.b16 %v684, %v683
        %v692 = vpack.c.b16 %v686, %v685
        %v693 = vpack.c.b16 %v688, %v687
        %v694 = vpack.c.b16 %v690, %v689
        %vm699 = vcmask 523264
        %v701 = vsel %vm699, %v647, 0
        %v704 = vsel %vm699, %v648, 0
        %v707 = vsel %vm699, %v649, 0
        %v710 = vsel %vm699, %v650, 0
        %v713 = vsel %vm699, %v651, 0
        %v716 = vsel %vm699, %v652, 0
        %v719 = vsel %vm699, %v653, 0
        %v722 = vsel %vm699, %v654, 0
        %v725 = vsel %vm699, %v655, 0
        %v728 = vsel %vm699, %v656, 0
        %v731 = vsel %vm699, %v657, 0
        %v734 = vsel %vm699, %v658, 0
        %v737 = vsel %vm699, %v659, 0
        %v740 = vsel %vm699, %v660, 0
        %v743 = vsel %vm699, %v661, 0
        %v746 = vsel %vm699, %v662, 0
        %748 = vmatpush.bf16.msra.mxu0 0
        %749 = vmatpush.bf16.msra.mxu0 0
        %750 = vmatpush.bf16.msra.mxu0 0
        %751 = vmatpush.bf16.msra.mxu0 0
        %752 = vmatpush.bf16.msra.mxu0 %v694
        %753 = vmatpush.bf16.msra.mxu0 %v693
        %754 = vmatpush.bf16.msra.mxu0 %v692
        %755 = vmatpush.bf16.msra.mxu0 %v691
        %756 = vmatmul.bf16.gmra.mxu0 %v701
        %v757 = vpop.f32.mrf.mxu0
        %v758 = vadd.f32 %v673, %v757
        %v759 = vpop.f32.mrf.mxu0
        %v760 = vadd.f32 %v673, %v759
        %761 = vmatmul.bf16.gmra.mxu0 %v704
        %v762 = vpop.f32.mrf.mxu0
        %v763 = vadd.f32 %v673, %v762
        %v764 = vpop.f32.mrf.mxu0
        %v765 = vadd.f32 %v673, %v764
        %766 = vmatmul.bf16.gmra.mxu0 %v707
        %v767 = vpop.f32.mrf.mxu0
        %v768 = vadd.f32 %v673, %v767
        %v769 = vpop.f32.mrf.mxu0
        %v770 = vadd.f32 %v673, %v769
        %771 = vmatmul.bf16.gmra.mxu0 %v710
        %v772 = vpop.f32.mrf.mxu0
        %v773 = vadd.f32 %v673, %v772
        %v774 = vpop.f32.mrf.mxu0
        %v775 = vadd.f32 %v673, %v774
        %776 = vmatmul.bf16.gmra.mxu0 %v713
        %v777 = vpop.f32.mrf.mxu0
        %v778 = vadd.f32 %v673, %v777
        %v779 = vpop.f32.mrf.mxu0
        %v780 = vadd.f32 %v673, %v779
        %781 = vmatmul.bf16.gmra.mxu0 %v716
        %v782 = vpop.f32.mrf.mxu0
        %v783 = vadd.f32 %v673, %v782
        %v784 = vpop.f32.mrf.mxu0
        %v785 = vadd.f32 %v673, %v784
        %786 = vmatmul.bf16.gmra.mxu0 %v719
        %v787 = vpop.f32.mrf.mxu0
        %v788 = vadd.f32 %v673, %v787
        %v789 = vpop.f32.mrf.mxu0
        %v790 = vadd.f32 %v673, %v789
        %791 = vmatmul.bf16.gmra.mxu0 %v722
        %v792 = vpop.f32.mrf.mxu0
        %v793 = vadd.f32 %v673, %v792
        %v794 = vpop.f32.mrf.mxu0
        %v795 = vadd.f32 %v673, %v794
        %796 = vmatmul.bf16.gmra.mxu0 %v725
        %v797 = vpop.f32.mrf.mxu0
        %v798 = vadd.f32 %v673, %v797
        %v799 = vpop.f32.mrf.mxu0
        %v800 = vadd.f32 %v673, %v799
        %801 = vmatmul.bf16.gmra.mxu0 %v728
        %v802 = vpop.f32.mrf.mxu0
        %v803 = vadd.f32 %v673, %v802
        %v804 = vpop.f32.mrf.mxu0
        %v805 = vadd.f32 %v673, %v804
        %806 = vmatmul.bf16.gmra.mxu0 %v731
        %v807 = vpop.f32.mrf.mxu0
        %v808 = vadd.f32 %v673, %v807
        %v809 = vpop.f32.mrf.mxu0
        %v810 = vadd.f32 %v673, %v809
        %811 = vmatmul.bf16.gmra.mxu0 %v734
        %v812 = vpop.f32.mrf.mxu0
        %v813 = vadd.f32 %v673, %v812
        %v814 = vpop.f32.mrf.mxu0
        %v815 = vadd.f32 %v673, %v814
        %816 = vmatmul.bf16.gmra.mxu0 %v737
        %v817 = vpop.f32.mrf.mxu0
        %v818 = vadd.f32 %v673, %v817
        %v819 = vpop.f32.mrf.mxu0
        %v820 = vadd.f32 %v673, %v819
        %821 = vmatmul.bf16.gmra.mxu0 %v740
        %v822 = vpop.f32.mrf.mxu0
        %v823 = vadd.f32 %v673, %v822
        %v824 = vpop.f32.mrf.mxu0
        %v825 = vadd.f32 %v673, %v824
        %826 = vmatmul.bf16.gmra.mxu0 %v743
        %v827 = vpop.f32.mrf.mxu0
        %v828 = vadd.f32 %v673, %v827
        %v829 = vpop.f32.mrf.mxu0
        %v830 = vadd.f32 %v673, %v829
        %831 = vmatmul.bf16.gmra.mxu0 %v746
        %v832 = vpop.f32.mrf.mxu0
        %v833 = vadd.f32 %v673, %v832
        %v834 = vpop.f32.mrf.mxu0
        %v835 = vadd.f32 %v673, %v834
        %836 = vdwg.mxu0
        %v837 = vmax.f32 %v758, 0.0
        %v838 = vmax.f32 %v760, 0.0
        %v839 = vmax.f32 %v763, 0.0
        %v840 = vmax.f32 %v765, 0.0
        %v841 = vmax.f32 %v768, 0.0
        %v842 = vmax.f32 %v770, 0.0
        %v843 = vmax.f32 %v773, 0.0
        %v844 = vmax.f32 %v775, 0.0
        %v845 = vmax.f32 %v778, 0.0
        %v846 = vmax.f32 %v780, 0.0
        %v847 = vmax.f32 %v783, 0.0
        %v848 = vmax.f32 %v785, 0.0
        %v849 = vmax.f32 %v788, 0.0
        %v850 = vmax.f32 %v790, 0.0
        %v851 = vmax.f32 %v793, 0.0
        %v852 = vmax.f32 %v795, 0.0
        %v853 = vmax.f32 %v798, 0.0
        %v854 = vmax.f32 %v800, 0.0
        %v855 = vmax.f32 %v803, 0.0
        %v856 = vmax.f32 %v805, 0.0
        %v857 = vmax.f32 %v808, 0.0
        %v858 = vmax.f32 %v810, 0.0
        %v859 = vmax.f32 %v813, 0.0
        %v860 = vmax.f32 %v815, 0.0
        %v861 = vmax.f32 %v818, 0.0
        %v862 = vmax.f32 %v820, 0.0
        %v863 = vmax.f32 %v823, 0.0
        %v864 = vmax.f32 %v825, 0.0
        %v865 = vmax.f32 %v828, 0.0
        %v866 = vmax.f32 %v830, 0.0
        %v867 = vmax.f32 %v833, 0.0
        %v868 = vmax.f32 %v835, 0.0
        %v869 = vpack.c.bf16 %v838, %v837
        %v870 = vpack.c.bf16 %v840, %v839
        %v871 = vpack.c.bf16 %v842, %v841
        %v872 = vpack.c.bf16 %v844, %v843
        %v873 = vpack.c.bf16 %v846, %v845
        %v874 = vpack.c.bf16 %v848, %v847
        %v875 = vpack.c.bf16 %v850, %v849
        %v876 = vpack.c.bf16 %v852, %v851
        %v877 = vpack.c.bf16 %v854, %v853
        %v878 = vpack.c.bf16 %v856, %v855
        %v879 = vpack.c.bf16 %v858, %v857
        %v880 = vpack.c.bf16 %v860, %v859
        %v881 = vpack.c.bf16 %v862, %v861
        %v882 = vpack.c.bf16 %v864, %v863
        %v883 = vpack.c.bf16 %v866, %v865
        %v884 = vpack.c.bf16 %v868, %v867
        %v885 = vld [vmem:[%s5] sm:$0xf]
        %v886 = vld [vmem:[%s5 + $0x4] sm:$0xf]
        %v887 = vld [vmem:[%s5 + $0x8] sm:$0xf]
        %v888 = vld [vmem:[%s5 + $0xc] sm:$0xf]
        %v889 = vld [vmem:[%s5 + $0x10] sm:$0xf]
        %v890 = vld [vmem:[%s5 + $0x14] sm:$0xf]
        %v891 = vld [vmem:[%s5 + $0x18] sm:$0xf]
        %v892 = vld [vmem:[%s5 + $0x1c] sm:$0xf]
        %v893 = vld [vmem:[%s6] sm:$0x1]
        %v895 = vperm.slane %v893, 0
        %v905 = vunpack.c.l.b16 %v885
        %v906 = vunpack.c.l.b16 %v886
        %v907 = vunpack.c.l.b16 %v887
        %v908 = vunpack.c.l.b16 %v888
        %v909 = vunpack.c.l.b16 %v889
        %v910 = vunpack.c.l.b16 %v890
        %v911 = vunpack.c.l.b16 %v891
        %v912 = vunpack.c.l.b16 %v892
        %v913 = vpack.c.b16 %v906, %v905
        %v914 = vpack.c.b16 %v908, %v907
        %v915 = vpack.c.b16 %v910, %v909
        %v916 = vpack.c.b16 %v912, %v911
        %v922 = vsel %vm699, %v869, 0
        %v925 = vsel %vm699, %v870, 0
        %v928 = vsel %vm699, %v871, 0
        %v931 = vsel %vm699, %v872, 0
        %v934 = vsel %vm699, %v873, 0
        %v937 = vsel %vm699, %v874, 0
        %v940 = vsel %vm699, %v875, 0
        %v943 = vsel %vm699, %v876, 0
        %v946 = vsel %vm699, %v877, 0
        %v949 = vsel %vm699, %v878, 0
        %v952 = vsel %vm699, %v879, 0
        %v955 = vsel %vm699, %v880, 0
        %v958 = vsel %vm699, %v881, 0
        %v961 = vsel %vm699, %v882, 0
        %v964 = vsel %vm699, %v883, 0
        %v967 = vsel %vm699, %v884, 0
        %969 = vmatpush.bf16.msra.mxu0 0
        %970 = vmatpush.bf16.msra.mxu0 0
        %971 = vmatpush.bf16.msra.mxu0 0
        %972 = vmatpush.bf16.msra.mxu0 0
        %973 = vmatpush.bf16.msra.mxu0 %v916
        %974 = vmatpush.bf16.msra.mxu0 %v915
        %975 = vmatpush.bf16.msra.mxu0 %v914
        %976 = vmatpush.bf16.msra.mxu0 %v913
        %977 = vmatmul.bf16.gmra.mxu0 %v922
        %v978 = vpop.f32.mrf.mxu0
        %v979 = vadd.f32 %v895, %v978
        %v980 = vpop.f32.mrf.mxu0
        %v981 = vadd.f32 %v895, %v980
        %982 = vmatmul.bf16.gmra.mxu0 %v925
        %v983 = vpop.f32.mrf.mxu0
        %v984 = vadd.f32 %v895, %v983
        %v985 = vpop.f32.mrf.mxu0
        %v986 = vadd.f32 %v895, %v985
        %987 = vmatmul.bf16.gmra.mxu0 %v928
        %v988 = vpop.f32.mrf.mxu0
        %v989 = vadd.f32 %v895, %v988
        %v990 = vpop.f32.mrf.mxu0
        %v991 = vadd.f32 %v895, %v990
        %992 = vmatmul.bf16.gmra.mxu0 %v931
        %v993 = vpop.f32.mrf.mxu0
        %v994 = vadd.f32 %v895, %v993
        %v995 = vpop.f32.mrf.mxu0
        %v996 = vadd.f32 %v895, %v995
        %997 = vmatmul.bf16.gmra.mxu0 %v934
        %v998 = vpop.f32.mrf.mxu0
        %v999 = vadd.f32 %v895, %v998
        %v1000 = vpop.f32.mrf.mxu0
        %v1001 = vadd.f32 %v895, %v1000
        %1002 = vmatmul.bf16.gmra.mxu0 %v937
        %v1003 = vpop.f32.mrf.mxu0
        %v1004 = vadd.f32 %v895, %v1003
        %v1005 = vpop.f32.mrf.mxu0
        %v1006 = vadd.f32 %v895, %v1005
        %1007 = vmatmul.bf16.gmra.mxu0 %v940
        %v1008 = vpop.f32.mrf.mxu0
        %v1009 = vadd.f32 %v895, %v1008
        %v1010 = vpop.f32.mrf.mxu0
        %v1011 = vadd.f32 %v895, %v1010
        %1012 = vmatmul.bf16.gmra.mxu0 %v943
        %v1013 = vpop.f32.mrf.mxu0
        %v1014 = vadd.f32 %v895, %v1013
        %v1015 = vpop.f32.mrf.mxu0
        %v1016 = vadd.f32 %v895, %v1015
        %1017 = vmatmul.bf16.gmra.mxu0 %v946
        %v1018 = vpop.f32.mrf.mxu0
        %v1019 = vadd.f32 %v895, %v1018
        %v1020 = vpop.f32.mrf.mxu0
        %v1021 = vadd.f32 %v895, %v1020
        %1022 = vmatmul.bf16.gmra.mxu0 %v949
        %v1023 = vpop.f32.mrf.mxu0
        %v1024 = vadd.f32 %v895, %v1023
        %v1025 = vpop.f32.mrf.mxu0
        %v1026 = vadd.f32 %v895, %v1025
        %1027 = vmatmul.bf16.gmra.mxu0 %v952
        %v1028 = vpop.f32.mrf.mxu0
        %v1029 = vadd.f32 %v895, %v1028
        %v1030 = vpop.f32.mrf.mxu0
        %v1031 = vadd.f32 %v895, %v1030
        %1032 = vmatmul.bf16.gmra.mxu0 %v955
        %v1033 = vpop.f32.mrf.mxu0
        %v1034 = vadd.f32 %v895, %v1033
        %v1035 = vpop.f32.mrf.mxu0
        %v1036 = vadd.f32 %v895, %v1035
        %1037 = vmatmul.bf16.gmra.mxu0 %v958
        %v1038 = vpop.f32.mrf.mxu0
        %v1039 = vadd.f32 %v895, %v1038
        %v1040 = vpop.f32.mrf.mxu0
        %v1041 = vadd.f32 %v895, %v1040
        %1042 = vmatmul.bf16.gmra.mxu0 %v961
        %v1043 = vpop.f32.mrf.mxu0
        %v1044 = vadd.f32 %v895, %v1043
        %v1045 = vpop.f32.mrf.mxu0
        %v1046 = vadd.f32 %v895, %v1045
        %1047 = vmatmul.bf16.gmra.mxu0 %v964
        %v1048 = vpop.f32.mrf.mxu0
        %v1049 = vadd.f32 %v895, %v1048
        %v1050 = vpop.f32.mrf.mxu0
        %v1051 = vadd.f32 %v895, %v1050
        %1052 = vmatmul.bf16.gmra.mxu0 %v967
        %v1053 = vpop.f32.mrf.mxu0
        %v1054 = vadd.f32 %v895, %v1053
        %v1055 = vpop.f32.mrf.mxu0
        %v1056 = vadd.f32 %v895, %v1055
        %1057 = vdwg.mxu0
        %v1058 = vmax.f32 %v979, 0.0
        %v1059 = vmax.f32 %v981, 0.0
        %v1060 = vmax.f32 %v984, 0.0
        %v1061 = vmax.f32 %v986, 0.0
        %v1062 = vmax.f32 %v989, 0.0
        %v1063 = vmax.f32 %v991, 0.0
        %v1064 = vmax.f32 %v994, 0.0
        %v1065 = vmax.f32 %v996, 0.0
        %v1066 = vmax.f32 %v999, 0.0
        %v1067 = vmax.f32 %v1001, 0.0
        %v1068 = vmax.f32 %v1004, 0.0
        %v1069 = vmax.f32 %v1006, 0.0
        %v1070 = vmax.f32 %v1009, 0.0
        %v1071 = vmax.f32 %v1011, 0.0
        %v1072 = vmax.f32 %v1014, 0.0
        %v1073 = vmax.f32 %v1016, 0.0
        %v1074 = vmax.f32 %v1019, 0.0
        %v1075 = vmax.f32 %v1021, 0.0
        %v1076 = vmax.f32 %v1024, 0.0
        %v1077 = vmax.f32 %v1026, 0.0
        %v1078 = vmax.f32 %v1029, 0.0
        %v1079 = vmax.f32 %v1031, 0.0
        %v1080 = vmax.f32 %v1034, 0.0
        %v1081 = vmax.f32 %v1036, 0.0
        %v1082 = vmax.f32 %v1039, 0.0
        %v1083 = vmax.f32 %v1041, 0.0
        %v1084 = vmax.f32 %v1044, 0.0
        %v1085 = vmax.f32 %v1046, 0.0
        %v1086 = vmax.f32 %v1049, 0.0
        %v1087 = vmax.f32 %v1051, 0.0
        %v1088 = vmax.f32 %v1054, 0.0
        %v1089 = vmax.f32 %v1056, 0.0
        %v1090 = vld [vmem:[%s7] sm:$0x1]
        %v1091 = vld [vmem:[%s8] sm:$0x1]
        %v1092 = vsel %vm699, %v1058, 0.0
        %1093 = vadd.xlane.f32.xlu0 %v1092
        %v1094 = vpop.xlane.xlu0 %1093
        %v1095 = vsel %vm699, %v1059, 0.0
        %1096 = vadd.xlane.f32.xlu0 %v1095
        %v1097 = vpop.xlane.xlu0 %1096
        %v1098 = vsel %vm699, %v1060, 0.0
        %1099 = vadd.xlane.f32.xlu0 %v1098
        %v1100 = vpop.xlane.xlu0 %1099
        %v1101 = vsel %vm699, %v1061, 0.0
        %1102 = vadd.xlane.f32.xlu0 %v1101
        %v1103 = vpop.xlane.xlu0 %1102
        %v1104 = vsel %vm699, %v1062, 0.0
        %1105 = vadd.xlane.f32.xlu0 %v1104
        %v1106 = vpop.xlane.xlu0 %1105
        %v1107 = vsel %vm699, %v1063, 0.0
        %1108 = vadd.xlane.f32.xlu0 %v1107
        %v1109 = vpop.xlane.xlu0 %1108
        %v1110 = vsel %vm699, %v1064, 0.0
        %1111 = vadd.xlane.f32.xlu0 %v1110
        %v1112 = vpop.xlane.xlu0 %1111
        %v1113 = vsel %vm699, %v1065, 0.0
        %1114 = vadd.xlane.f32.xlu0 %v1113
        %v1115 = vpop.xlane.xlu0 %1114
        %v1116 = vsel %vm699, %v1066, 0.0
        %1117 = vadd.xlane.f32.xlu0 %v1116
        %v1118 = vpop.xlane.xlu0 %1117
        %v1119 = vsel %vm699, %v1067, 0.0
        %1120 = vadd.xlane.f32.xlu0 %v1119
        %v1121 = vpop.xlane.xlu0 %1120
        %v1122 = vsel %vm699, %v1068, 0.0
        %1123 = vadd.xlane.f32.xlu0 %v1122
        %v1124 = vpop.xlane.xlu0 %1123
        %v1125 = vsel %vm699, %v1069, 0.0
        %1126 = vadd.xlane.f32.xlu0 %v1125
        %v1127 = vpop.xlane.xlu0 %1126
        %v1128 = vsel %vm699, %v1070, 0.0
        %1129 = vadd.xlane.f32.xlu0 %v1128
        %v1130 = vpop.xlane.xlu0 %1129
        %v1131 = vsel %vm699, %v1071, 0.0
        %1132 = vadd.xlane.f32.xlu0 %v1131
        %v1133 = vpop.xlane.xlu0 %1132
        %v1134 = vsel %vm699, %v1072, 0.0
        %1135 = vadd.xlane.f32.xlu0 %v1134
        %v1136 = vpop.xlane.xlu0 %1135
        %v1137 = vsel %vm699, %v1073, 0.0
        %1138 = vadd.xlane.f32.xlu0 %v1137
        %v1139 = vpop.xlane.xlu0 %1138
        %v1140 = vsel %vm699, %v1074, 0.0
        %1141 = vadd.xlane.f32.xlu0 %v1140
        %v1142 = vpop.xlane.xlu0 %1141
        %v1143 = vsel %vm699, %v1075, 0.0
        %1144 = vadd.xlane.f32.xlu0 %v1143
        %v1145 = vpop.xlane.xlu0 %1144
        %v1146 = vsel %vm699, %v1076, 0.0
        %1147 = vadd.xlane.f32.xlu0 %v1146
        %v1148 = vpop.xlane.xlu0 %1147
        %v1149 = vsel %vm699, %v1077, 0.0
        %1150 = vadd.xlane.f32.xlu0 %v1149
        %v1151 = vpop.xlane.xlu0 %1150
        %v1152 = vsel %vm699, %v1078, 0.0
        %1153 = vadd.xlane.f32.xlu0 %v1152
        %v1154 = vpop.xlane.xlu0 %1153
        %v1155 = vsel %vm699, %v1079, 0.0
        %1156 = vadd.xlane.f32.xlu0 %v1155
        %v1157 = vpop.xlane.xlu0 %1156
        %v1158 = vsel %vm699, %v1080, 0.0
        %1159 = vadd.xlane.f32.xlu0 %v1158
        %v1160 = vpop.xlane.xlu0 %1159
        %v1161 = vsel %vm699, %v1081, 0.0
        %1162 = vadd.xlane.f32.xlu0 %v1161
        %v1163 = vpop.xlane.xlu0 %1162
        %v1164 = vsel %vm699, %v1082, 0.0
        %1165 = vadd.xlane.f32.xlu0 %v1164
        %v1166 = vpop.xlane.xlu0 %1165
        %v1167 = vsel %vm699, %v1083, 0.0
        %1168 = vadd.xlane.f32.xlu0 %v1167
        %v1169 = vpop.xlane.xlu0 %1168
        %v1170 = vsel %vm699, %v1084, 0.0
        %1171 = vadd.xlane.f32.xlu0 %v1170
        %v1172 = vpop.xlane.xlu0 %1171
        %v1173 = vsel %vm699, %v1085, 0.0
        %1174 = vadd.xlane.f32.xlu0 %v1173
        %v1175 = vpop.xlane.xlu0 %1174
        %v1176 = vsel %vm699, %v1086, 0.0
        %1177 = vadd.xlane.f32.xlu0 %v1176
        %v1178 = vpop.xlane.xlu0 %1177
        %v1179 = vsel %vm699, %v1087, 0.0
        %1180 = vadd.xlane.f32.xlu0 %v1179
        %v1181 = vpop.xlane.xlu0 %1180
        %v1182 = vsel %vm699, %v1088, 0.0
        %1183 = vadd.xlane.f32.xlu0 %v1182
        %v1184 = vpop.xlane.xlu0 %1183
        %v1185 = vsel %vm699, %v1089, 0.0
        %1186 = vadd.xlane.f32.xlu0 %v1185
        %v1187 = vpop.xlane.xlu0 %1186
        %v1188 = vrcp.pop 64.0
        %v1189 = vmul.f32 64.0, %v1188
        %v1190 = vsub.f32 1.0, %v1189
        %v1191 = vmul.f32 %v1188, %v1190
        %v1192 = vadd.f32 %v1188, %v1191
        %vm1193 = vweird.f32 %v1188
        %v1194 = vsel %vm1193, %v1188, %v1192
        %v1195 = vmul.f32 %v1094, %v1194
        %v1196 = vmul.f32 %v1097, %v1194
        %v1197 = vmul.f32 %v1100, %v1194
        %v1198 = vmul.f32 %v1103, %v1194
        %v1199 = vmul.f32 %v1106, %v1194
        %v1200 = vmul.f32 %v1109, %v1194
        %v1201 = vmul.f32 %v1112, %v1194
        %v1202 = vmul.f32 %v1115, %v1194
        %v1203 = vmul.f32 %v1118, %v1194
        %v1204 = vmul.f32 %v1121, %v1194
        %v1205 = vmul.f32 %v1124, %v1194
        %v1206 = vmul.f32 %v1127, %v1194
        %v1207 = vmul.f32 %v1130, %v1194
        %v1208 = vmul.f32 %v1133, %v1194
        %v1209 = vmul.f32 %v1136, %v1194
        %v1210 = vmul.f32 %v1139, %v1194
        %v1211 = vmul.f32 %v1142, %v1194
        %v1212 = vmul.f32 %v1145, %v1194
        %v1213 = vmul.f32 %v1148, %v1194
        %v1214 = vmul.f32 %v1151, %v1194
        %v1215 = vmul.f32 %v1154, %v1194
        %v1216 = vmul.f32 %v1157, %v1194
        %v1217 = vmul.f32 %v1160, %v1194
        %v1218 = vmul.f32 %v1163, %v1194
        %v1219 = vmul.f32 %v1166, %v1194
        %v1220 = vmul.f32 %v1169, %v1194
        %v1221 = vmul.f32 %v1172, %v1194
        %v1222 = vmul.f32 %v1175, %v1194
        %v1223 = vmul.f32 %v1178, %v1194
        %v1224 = vmul.f32 %v1181, %v1194
        %v1225 = vmul.f32 %v1184, %v1194
        %v1226 = vmul.f32 %v1187, %v1194
        %v1227 = vsub.f32 %v1058, %v1195
        %v1228 = vsub.f32 %v1059, %v1196
        %v1229 = vsub.f32 %v1060, %v1197
        %v1230 = vsub.f32 %v1061, %v1198
        %v1231 = vsub.f32 %v1062, %v1199
        %v1232 = vsub.f32 %v1063, %v1200
        %v1233 = vsub.f32 %v1064, %v1201
        %v1234 = vsub.f32 %v1065, %v1202
        %v1235 = vsub.f32 %v1066, %v1203
        %v1236 = vsub.f32 %v1067, %v1204
        %v1237 = vsub.f32 %v1068, %v1205
        %v1238 = vsub.f32 %v1069, %v1206
        %v1239 = vsub.f32 %v1070, %v1207
        %v1240 = vsub.f32 %v1071, %v1208
        %v1241 = vsub.f32 %v1072, %v1209
        %v1242 = vsub.f32 %v1073, %v1210
        %v1243 = vsub.f32 %v1074, %v1211
        %v1244 = vsub.f32 %v1075, %v1212
        %v1245 = vsub.f32 %v1076, %v1213
        %v1246 = vsub.f32 %v1077, %v1214
        %v1247 = vsub.f32 %v1078, %v1215
        %v1248 = vsub.f32 %v1079, %v1216
        %v1249 = vsub.f32 %v1080, %v1217
        %v1250 = vsub.f32 %v1081, %v1218
        %v1251 = vsub.f32 %v1082, %v1219
        %v1252 = vsub.f32 %v1083, %v1220
        %v1253 = vsub.f32 %v1084, %v1221
        %v1254 = vsub.f32 %v1085, %v1222
        %v1255 = vsub.f32 %v1086, %v1223
        %v1256 = vsub.f32 %v1087, %v1224
        %v1257 = vsub.f32 %v1088, %v1225
        %v1258 = vsub.f32 %v1089, %v1226
        %v1259 = vmul.f32 %v1227, %v1227
        %v1260 = vmul.f32 %v1228, %v1228
        %v1261 = vmul.f32 %v1229, %v1229
        %v1262 = vmul.f32 %v1230, %v1230
        %v1263 = vmul.f32 %v1231, %v1231
        %v1264 = vmul.f32 %v1232, %v1232
        %v1265 = vmul.f32 %v1233, %v1233
        %v1266 = vmul.f32 %v1234, %v1234
        %v1267 = vmul.f32 %v1235, %v1235
        %v1268 = vmul.f32 %v1236, %v1236
        %v1269 = vmul.f32 %v1237, %v1237
        %v1270 = vmul.f32 %v1238, %v1238
        %v1271 = vmul.f32 %v1239, %v1239
        %v1272 = vmul.f32 %v1240, %v1240
        %v1273 = vmul.f32 %v1241, %v1241
        %v1274 = vmul.f32 %v1242, %v1242
        %v1275 = vmul.f32 %v1243, %v1243
        %v1276 = vmul.f32 %v1244, %v1244
        %v1277 = vmul.f32 %v1245, %v1245
        %v1278 = vmul.f32 %v1246, %v1246
        %v1279 = vmul.f32 %v1247, %v1247
        %v1280 = vmul.f32 %v1248, %v1248
        %v1281 = vmul.f32 %v1249, %v1249
        %v1282 = vmul.f32 %v1250, %v1250
        %v1283 = vmul.f32 %v1251, %v1251
        %v1284 = vmul.f32 %v1252, %v1252
        %v1285 = vmul.f32 %v1253, %v1253
        %v1286 = vmul.f32 %v1254, %v1254
        %v1287 = vmul.f32 %v1255, %v1255
        %v1288 = vmul.f32 %v1256, %v1256
        %v1289 = vmul.f32 %v1257, %v1257
        %v1290 = vmul.f32 %v1258, %v1258
        %v1291 = vsel %vm699, %v1259, 0.0
        %1292 = vadd.xlane.f32.xlu0 %v1291
        %v1293 = vpop.xlane.xlu0 %1292
        %v1294 = vsel %vm699, %v1260, 0.0
        %1295 = vadd.xlane.f32.xlu0 %v1294
        %v1296 = vpop.xlane.xlu0 %1295
        %v1297 = vsel %vm699, %v1261, 0.0
        %1298 = vadd.xlane.f32.xlu0 %v1297
        %v1299 = vpop.xlane.xlu0 %1298
        %v1300 = vsel %vm699, %v1262, 0.0
        %1301 = vadd.xlane.f32.xlu0 %v1300
        %v1302 = vpop.xlane.xlu0 %1301
        %v1303 = vsel %vm699, %v1263, 0.0
        %1304 = vadd.xlane.f32.xlu0 %v1303
        %v1305 = vpop.xlane.xlu0 %1304
        %v1306 = vsel %vm699, %v1264, 0.0
        %1307 = vadd.xlane.f32.xlu0 %v1306
        %v1308 = vpop.xlane.xlu0 %1307
        %v1309 = vsel %vm699, %v1265, 0.0
        %1310 = vadd.xlane.f32.xlu0 %v1309
        %v1311 = vpop.xlane.xlu0 %1310
        %v1312 = vsel %vm699, %v1266, 0.0
        %1313 = vadd.xlane.f32.xlu0 %v1312
        %v1314 = vpop.xlane.xlu0 %1313
        %v1315 = vsel %vm699, %v1267, 0.0
        %1316 = vadd.xlane.f32.xlu0 %v1315
        %v1317 = vpop.xlane.xlu0 %1316
        %v1318 = vsel %vm699, %v1268, 0.0
        %1319 = vadd.xlane.f32.xlu0 %v1318
        %v1320 = vpop.xlane.xlu0 %1319
        %v1321 = vsel %vm699, %v1269, 0.0
        %1322 = vadd.xlane.f32.xlu0 %v1321
        %v1323 = vpop.xlane.xlu0 %1322
        %v1324 = vsel %vm699, %v1270, 0.0
        %1325 = vadd.xlane.f32.xlu0 %v1324
        %v1326 = vpop.xlane.xlu0 %1325
        %v1327 = vsel %vm699, %v1271, 0.0
        %1328 = vadd.xlane.f32.xlu0 %v1327
        %v1329 = vpop.xlane.xlu0 %1328
        %v1330 = vsel %vm699, %v1272, 0.0
        %1331 = vadd.xlane.f32.xlu0 %v1330
        %v1332 = vpop.xlane.xlu0 %1331
        %v1333 = vsel %vm699, %v1273, 0.0
        %1334 = vadd.xlane.f32.xlu0 %v1333
        %v1335 = vpop.xlane.xlu0 %1334
        %v1336 = vsel %vm699, %v1274, 0.0
        %1337 = vadd.xlane.f32.xlu0 %v1336
        %v1338 = vpop.xlane.xlu0 %1337
        %v1339 = vsel %vm699, %v1275, 0.0
        %1340 = vadd.xlane.f32.xlu0 %v1339
        %v1341 = vpop.xlane.xlu0 %1340
        %v1342 = vsel %vm699, %v1276, 0.0
        %1343 = vadd.xlane.f32.xlu0 %v1342
        %v1344 = vpop.xlane.xlu0 %1343
        %v1345 = vsel %vm699, %v1277, 0.0
        %1346 = vadd.xlane.f32.xlu0 %v1345
        %v1347 = vpop.xlane.xlu0 %1346
        %v1348 = vsel %vm699, %v1278, 0.0
        %1349 = vadd.xlane.f32.xlu0 %v1348
        %v1350 = vpop.xlane.xlu0 %1349
        %v1351 = vsel %vm699, %v1279, 0.0
        %1352 = vadd.xlane.f32.xlu0 %v1351
        %v1353 = vpop.xlane.xlu0 %1352
        %v1354 = vsel %vm699, %v1280, 0.0
        %1355 = vadd.xlane.f32.xlu0 %v1354
        %v1356 = vpop.xlane.xlu0 %1355
        %v1357 = vsel %vm699, %v1281, 0.0
        %1358 = vadd.xlane.f32.xlu0 %v1357
        %v1359 = vpop.xlane.xlu0 %1358
        %v1360 = vsel %vm699, %v1282, 0.0
        %1361 = vadd.xlane.f32.xlu0 %v1360
        %v1362 = vpop.xlane.xlu0 %1361
        %v1363 = vsel %vm699, %v1283, 0.0
        %1364 = vadd.xlane.f32.xlu0 %v1363
        %v1365 = vpop.xlane.xlu0 %1364
        %v1366 = vsel %vm699, %v1284, 0.0
        %1367 = vadd.xlane.f32.xlu0 %v1366
        %v1368 = vpop.xlane.xlu0 %1367
        %v1369 = vsel %vm699, %v1285, 0.0
        %1370 = vadd.xlane.f32.xlu0 %v1369
        %v1371 = vpop.xlane.xlu0 %1370
        %v1372 = vsel %vm699, %v1286, 0.0
        %1373 = vadd.xlane.f32.xlu0 %v1372
        %v1374 = vpop.xlane.xlu0 %1373
        %v1375 = vsel %vm699, %v1287, 0.0
        %1376 = vadd.xlane.f32.xlu0 %v1375
        %v1377 = vpop.xlane.xlu0 %1376
        %v1378 = vsel %vm699, %v1288, 0.0
        %1379 = vadd.xlane.f32.xlu0 %v1378
        %v1380 = vpop.xlane.xlu0 %1379
        %v1381 = vsel %vm699, %v1289, 0.0
        %1382 = vadd.xlane.f32.xlu0 %v1381
        %v1383 = vpop.xlane.xlu0 %1382
        %v1384 = vsel %vm699, %v1290, 0.0
        %1385 = vadd.xlane.f32.xlu0 %v1384
        %v1386 = vpop.xlane.xlu0 %1385
        %v1387 = vmul.f32 %v1293, %v1194
        %v1388 = vmul.f32 %v1296, %v1194
        %v1389 = vmul.f32 %v1299, %v1194
        %v1390 = vmul.f32 %v1302, %v1194
        %v1391 = vmul.f32 %v1305, %v1194
        %v1392 = vmul.f32 %v1308, %v1194
        %v1393 = vmul.f32 %v1311, %v1194
        %v1394 = vmul.f32 %v1314, %v1194
        %v1395 = vmul.f32 %v1317, %v1194
        %v1396 = vmul.f32 %v1320, %v1194
        %v1397 = vmul.f32 %v1323, %v1194
        %v1398 = vmul.f32 %v1326, %v1194
        %v1399 = vmul.f32 %v1329, %v1194
        %v1400 = vmul.f32 %v1332, %v1194
        %v1401 = vmul.f32 %v1335, %v1194
        %v1402 = vmul.f32 %v1338, %v1194
        %v1403 = vmul.f32 %v1341, %v1194
        %v1404 = vmul.f32 %v1344, %v1194
        %v1405 = vmul.f32 %v1347, %v1194
        %v1406 = vmul.f32 %v1350, %v1194
        %v1407 = vmul.f32 %v1353, %v1194
        %v1408 = vmul.f32 %v1356, %v1194
        %v1409 = vmul.f32 %v1359, %v1194
        %v1410 = vmul.f32 %v1362, %v1194
        %v1411 = vmul.f32 %v1365, %v1194
        %v1412 = vmul.f32 %v1368, %v1194
        %v1413 = vmul.f32 %v1371, %v1194
        %v1414 = vmul.f32 %v1374, %v1194
        %v1415 = vmul.f32 %v1377, %v1194
        %v1416 = vmul.f32 %v1380, %v1194
        %v1417 = vmul.f32 %v1383, %v1194
        %v1418 = vmul.f32 %v1386, %v1194
        %v1419 = vadd.f32 %v1387, 1e-05
        %v1420 = vadd.f32 %v1388, 1e-05
        %v1421 = vadd.f32 %v1389, 1e-05
        %v1422 = vadd.f32 %v1390, 1e-05
        %v1423 = vadd.f32 %v1391, 1e-05
        %v1424 = vadd.f32 %v1392, 1e-05
        %v1425 = vadd.f32 %v1393, 1e-05
        %v1426 = vadd.f32 %v1394, 1e-05
        %v1427 = vadd.f32 %v1395, 1e-05
        %v1428 = vadd.f32 %v1396, 1e-05
        %v1429 = vadd.f32 %v1397, 1e-05
        %v1430 = vadd.f32 %v1398, 1e-05
        %v1431 = vadd.f32 %v1399, 1e-05
        %v1432 = vadd.f32 %v1400, 1e-05
        %v1433 = vadd.f32 %v1401, 1e-05
        %v1434 = vadd.f32 %v1402, 1e-05
        %v1435 = vadd.f32 %v1403, 1e-05
        %v1436 = vadd.f32 %v1404, 1e-05
        %v1437 = vadd.f32 %v1405, 1e-05
        %v1438 = vadd.f32 %v1406, 1e-05
        %v1439 = vadd.f32 %v1407, 1e-05
        %v1440 = vadd.f32 %v1408, 1e-05
        %v1441 = vadd.f32 %v1409, 1e-05
        %v1442 = vadd.f32 %v1410, 1e-05
        %v1443 = vadd.f32 %v1411, 1e-05
        %v1444 = vadd.f32 %v1412, 1e-05
        %v1445 = vadd.f32 %v1413, 1e-05
        %v1446 = vadd.f32 %v1414, 1e-05
        %v1447 = vadd.f32 %v1415, 1e-05
        %v1448 = vadd.f32 %v1416, 1e-05
        %v1449 = vadd.f32 %v1417, 1e-05
        %v1450 = vadd.f32 %v1418, 1e-05
        %v1451 = vrsqrt.pop %v1419
        %v1452 = vmul.f32 %v1451, %v1419
        %v1453 = vmul.f32 %v1452, %v1451
        %v1454 = vmul.f32 0.5, %v1453
        %v1455 = vsub.f32 1.5, %v1454
        %v1456 = vmul.f32 %v1451, %v1455
        %vm1457 = vweird.f32 %v1419
        %vm1458 = vweird.f32 %v1451
        %vm1459 = vmor %vm1457, %vm1458
        %v1460 = vsel %vm1459, %v1451, %v1456
        %v1461 = vrsqrt.pop %v1420
        %v1462 = vmul.f32 %v1461, %v1420
        %v1463 = vmul.f32 %v1462, %v1461
        %v1464 = vmul.f32 0.5, %v1463
        %v1465 = vsub.f32 1.5, %v1464
        %v1466 = vmul.f32 %v1461, %v1465
        %vm1467 = vweird.f32 %v1420
        %vm1468 = vweird.f32 %v1461
        %vm1469 = vmor %vm1467, %vm1468
        %v1470 = vsel %vm1469, %v1461, %v1466
        %v1471 = vrsqrt.pop %v1421
        %v1472 = vmul.f32 %v1471, %v1421
        %v1473 = vmul.f32 %v1472, %v1471
        %v1474 = vmul.f32 0.5, %v1473
        %v1475 = vsub.f32 1.5, %v1474
        %v1476 = vmul.f32 %v1471, %v1475
        %vm1477 = vweird.f32 %v1421
        %vm1478 = vweird.f32 %v1471
        %vm1479 = vmor %vm1477, %vm1478
        %v1480 = vsel %vm1479, %v1471, %v1476
        %v1481 = vrsqrt.pop %v1422
        %v1482 = vmul.f32 %v1481, %v1422
        %v1483 = vmul.f32 %v1482, %v1481
        %v1484 = vmul.f32 0.5, %v1483
        %v1485 = vsub.f32 1.5, %v1484
        %v1486 = vmul.f32 %v1481, %v1485
        %vm1487 = vweird.f32 %v1422
        %vm1488 = vweird.f32 %v1481
        %vm1489 = vmor %vm1487, %vm1488
        %v1490 = vsel %vm1489, %v1481, %v1486
        %v1491 = vrsqrt.pop %v1423
        %v1492 = vmul.f32 %v1491, %v1423
        %v1493 = vmul.f32 %v1492, %v1491
        %v1494 = vmul.f32 0.5, %v1493
        %v1495 = vsub.f32 1.5, %v1494
        %v1496 = vmul.f32 %v1491, %v1495
        %vm1497 = vweird.f32 %v1423
        %vm1498 = vweird.f32 %v1491
        %vm1499 = vmor %vm1497, %vm1498
        %v1500 = vsel %vm1499, %v1491, %v1496
        %v1501 = vrsqrt.pop %v1424
        %v1502 = vmul.f32 %v1501, %v1424
        %v1503 = vmul.f32 %v1502, %v1501
        %v1504 = vmul.f32 0.5, %v1503
        %v1505 = vsub.f32 1.5, %v1504
        %v1506 = vmul.f32 %v1501, %v1505
        %vm1507 = vweird.f32 %v1424
        %vm1508 = vweird.f32 %v1501
        %vm1509 = vmor %vm1507, %vm1508
        %v1510 = vsel %vm1509, %v1501, %v1506
        %v1511 = vrsqrt.pop %v1425
        %v1512 = vmul.f32 %v1511, %v1425
        %v1513 = vmul.f32 %v1512, %v1511
        %v1514 = vmul.f32 0.5, %v1513
        %v1515 = vsub.f32 1.5, %v1514
        %v1516 = vmul.f32 %v1511, %v1515
        %vm1517 = vweird.f32 %v1425
        %vm1518 = vweird.f32 %v1511
        %vm1519 = vmor %vm1517, %vm1518
        %v1520 = vsel %vm1519, %v1511, %v1516
        %v1521 = vrsqrt.pop %v1426
        %v1522 = vmul.f32 %v1521, %v1426
        %v1523 = vmul.f32 %v1522, %v1521
        %v1524 = vmul.f32 0.5, %v1523
        %v1525 = vsub.f32 1.5, %v1524
        %v1526 = vmul.f32 %v1521, %v1525
        %vm1527 = vweird.f32 %v1426
        %vm1528 = vweird.f32 %v1521
        %vm1529 = vmor %vm1527, %vm1528
        %v1530 = vsel %vm1529, %v1521, %v1526
        %v1531 = vrsqrt.pop %v1427
        %v1532 = vmul.f32 %v1531, %v1427
        %v1533 = vmul.f32 %v1532, %v1531
        %v1534 = vmul.f32 0.5, %v1533
        %v1535 = vsub.f32 1.5, %v1534
        %v1536 = vmul.f32 %v1531, %v1535
        %vm1537 = vweird.f32 %v1427
        %vm1538 = vweird.f32 %v1531
        %vm1539 = vmor %vm1537, %vm1538
        %v1540 = vsel %vm1539, %v1531, %v1536
        %v1541 = vrsqrt.pop %v1428
        %v1542 = vmul.f32 %v1541, %v1428
        %v1543 = vmul.f32 %v1542, %v1541
        %v1544 = vmul.f32 0.5, %v1543
        %v1545 = vsub.f32 1.5, %v1544
        %v1546 = vmul.f32 %v1541, %v1545
        %vm1547 = vweird.f32 %v1428
        %vm1548 = vweird.f32 %v1541
        %vm1549 = vmor %vm1547, %vm1548
        %v1550 = vsel %vm1549, %v1541, %v1546
        %v1551 = vrsqrt.pop %v1429
        %v1552 = vmul.f32 %v1551, %v1429
        %v1553 = vmul.f32 %v1552, %v1551
        %v1554 = vmul.f32 0.5, %v1553
        %v1555 = vsub.f32 1.5, %v1554
        %v1556 = vmul.f32 %v1551, %v1555
        %vm1557 = vweird.f32 %v1429
        %vm1558 = vweird.f32 %v1551
        %vm1559 = vmor %vm1557, %vm1558
        %v1560 = vsel %vm1559, %v1551, %v1556
        %v1561 = vrsqrt.pop %v1430
        %v1562 = vmul.f32 %v1561, %v1430
        %v1563 = vmul.f32 %v1562, %v1561
        %v1564 = vmul.f32 0.5, %v1563
        %v1565 = vsub.f32 1.5, %v1564
        %v1566 = vmul.f32 %v1561, %v1565
        %vm1567 = vweird.f32 %v1430
        %vm1568 = vweird.f32 %v1561
        %vm1569 = vmor %vm1567, %vm1568
        %v1570 = vsel %vm1569, %v1561, %v1566
        %v1571 = vrsqrt.pop %v1431
        %v1572 = vmul.f32 %v1571, %v1431
        %v1573 = vmul.f32 %v1572, %v1571
        %v1574 = vmul.f32 0.5, %v1573
        %v1575 = vsub.f32 1.5, %v1574
        %v1576 = vmul.f32 %v1571, %v1575
        %vm1577 = vweird.f32 %v1431
        %vm1578 = vweird.f32 %v1571
        %vm1579 = vmor %vm1577, %vm1578
        %v1580 = vsel %vm1579, %v1571, %v1576
        %v1581 = vrsqrt.pop %v1432
        %v1582 = vmul.f32 %v1581, %v1432
        %v1583 = vmul.f32 %v1582, %v1581
        %v1584 = vmul.f32 0.5, %v1583
        %v1585 = vsub.f32 1.5, %v1584
        %v1586 = vmul.f32 %v1581, %v1585
        %vm1587 = vweird.f32 %v1432
        %vm1588 = vweird.f32 %v1581
        %vm1589 = vmor %vm1587, %vm1588
        %v1590 = vsel %vm1589, %v1581, %v1586
        %v1591 = vrsqrt.pop %v1433
        %v1592 = vmul.f32 %v1591, %v1433
        %v1593 = vmul.f32 %v1592, %v1591
        %v1594 = vmul.f32 0.5, %v1593
        %v1595 = vsub.f32 1.5, %v1594
        %v1596 = vmul.f32 %v1591, %v1595
        %vm1597 = vweird.f32 %v1433
        %vm1598 = vweird.f32 %v1591
        %vm1599 = vmor %vm1597, %vm1598
        %v1600 = vsel %vm1599, %v1591, %v1596
        %v1601 = vrsqrt.pop %v1434
        %v1602 = vmul.f32 %v1601, %v1434
        %v1603 = vmul.f32 %v1602, %v1601
        %v1604 = vmul.f32 0.5, %v1603
        %v1605 = vsub.f32 1.5, %v1604
        %v1606 = vmul.f32 %v1601, %v1605
        %vm1607 = vweird.f32 %v1434
        %vm1608 = vweird.f32 %v1601
        %vm1609 = vmor %vm1607, %vm1608
        %v1610 = vsel %vm1609, %v1601, %v1606
        %v1611 = vrsqrt.pop %v1435
        %v1612 = vmul.f32 %v1611, %v1435
        %v1613 = vmul.f32 %v1612, %v1611
        %v1614 = vmul.f32 0.5, %v1613
        %v1615 = vsub.f32 1.5, %v1614
        %v1616 = vmul.f32 %v1611, %v1615
        %vm1617 = vweird.f32 %v1435
        %vm1618 = vweird.f32 %v1611
        %vm1619 = vmor %vm1617, %vm1618
        %v1620 = vsel %vm1619, %v1611, %v1616
        %v1621 = vrsqrt.pop %v1436
        %v1622 = vmul.f32 %v1621, %v1436
        %v1623 = vmul.f32 %v1622, %v1621
        %v1624 = vmul.f32 0.5, %v1623
        %v1625 = vsub.f32 1.5, %v1624
        %v1626 = vmul.f32 %v1621, %v1625
        %vm1627 = vweird.f32 %v1436
        %vm1628 = vweird.f32 %v1621
        %vm1629 = vmor %vm1627, %vm1628
        %v1630 = vsel %vm1629, %v1621, %v1626
        %v1631 = vrsqrt.pop %v1437
        %v1632 = vmul.f32 %v1631, %v1437
        %v1633 = vmul.f32 %v1632, %v1631
        %v1634 = vmul.f32 0.5, %v1633
        %v1635 = vsub.f32 1.5, %v1634
        %v1636 = vmul.f32 %v1631, %v1635
        %vm1637 = vweird.f32 %v1437
        %vm1638 = vweird.f32 %v1631
        %vm1639 = vmor %vm1637, %vm1638
        %v1640 = vsel %vm1639, %v1631, %v1636
        %v1641 = vrsqrt.pop %v1438
        %v1642 = vmul.f32 %v1641, %v1438
        %v1643 = vmul.f32 %v1642, %v1641
        %v1644 = vmul.f32 0.5, %v1643
        %v1645 = vsub.f32 1.5, %v1644
        %v1646 = vmul.f32 %v1641, %v1645
        %vm1647 = vweird.f32 %v1438
        %vm1648 = vweird.f32 %v1641
        %vm1649 = vmor %vm1647, %vm1648
        %v1650 = vsel %vm1649, %v1641, %v1646
        %v1651 = vrsqrt.pop %v1439
        %v1652 = vmul.f32 %v1651, %v1439
        %v1653 = vmul.f32 %v1652, %v1651
        %v1654 = vmul.f32 0.5, %v1653
        %v1655 = vsub.f32 1.5, %v1654
        %v1656 = vmul.f32 %v1651, %v1655
        %vm1657 = vweird.f32 %v1439
        %vm1658 = vweird.f32 %v1651
        %vm1659 = vmor %vm1657, %vm1658
        %v1660 = vsel %vm1659, %v1651, %v1656
        %v1661 = vrsqrt.pop %v1440
        %v1662 = vmul.f32 %v1661, %v1440
        %v1663 = vmul.f32 %v1662, %v1661
        %v1664 = vmul.f32 0.5, %v1663
        %v1665 = vsub.f32 1.5, %v1664
        %v1666 = vmul.f32 %v1661, %v1665
        %vm1667 = vweird.f32 %v1440
        %vm1668 = vweird.f32 %v1661
        %vm1669 = vmor %vm1667, %vm1668
        %v1670 = vsel %vm1669, %v1661, %v1666
        %v1671 = vrsqrt.pop %v1441
        %v1672 = vmul.f32 %v1671, %v1441
        %v1673 = vmul.f32 %v1672, %v1671
        %v1674 = vmul.f32 0.5, %v1673
        %v1675 = vsub.f32 1.5, %v1674
        %v1676 = vmul.f32 %v1671, %v1675
        %vm1677 = vweird.f32 %v1441
        %vm1678 = vweird.f32 %v1671
        %vm1679 = vmor %vm1677, %vm1678
        %v1680 = vsel %vm1679, %v1671, %v1676
        %v1681 = vrsqrt.pop %v1442
        %v1682 = vmul.f32 %v1681, %v1442
        %v1683 = vmul.f32 %v1682, %v1681
        %v1684 = vmul.f32 0.5, %v1683
        %v1685 = vsub.f32 1.5, %v1684
        %v1686 = vmul.f32 %v1681, %v1685
        %vm1687 = vweird.f32 %v1442
        %vm1688 = vweird.f32 %v1681
        %vm1689 = vmor %vm1687, %vm1688
        %v1690 = vsel %vm1689, %v1681, %v1686
        %v1691 = vrsqrt.pop %v1443
        %v1692 = vmul.f32 %v1691, %v1443
        %v1693 = vmul.f32 %v1692, %v1691
        %v1694 = vmul.f32 0.5, %v1693
        %v1695 = vsub.f32 1.5, %v1694
        %v1696 = vmul.f32 %v1691, %v1695
        %vm1697 = vweird.f32 %v1443
        %vm1698 = vweird.f32 %v1691
        %vm1699 = vmor %vm1697, %vm1698
        %v1700 = vsel %vm1699, %v1691, %v1696
        %v1701 = vrsqrt.pop %v1444
        %v1702 = vmul.f32 %v1701, %v1444
        %v1703 = vmul.f32 %v1702, %v1701
        %v1704 = vmul.f32 0.5, %v1703
        %v1705 = vsub.f32 1.5, %v1704
        %v1706 = vmul.f32 %v1701, %v1705
        %vm1707 = vweird.f32 %v1444
        %vm1708 = vweird.f32 %v1701
        %vm1709 = vmor %vm1707, %vm1708
        %v1710 = vsel %vm1709, %v1701, %v1706
        %v1711 = vrsqrt.pop %v1445
        %v1712 = vmul.f32 %v1711, %v1445
        %v1713 = vmul.f32 %v1712, %v1711
        %v1714 = vmul.f32 0.5, %v1713
        %v1715 = vsub.f32 1.5, %v1714
        %v1716 = vmul.f32 %v1711, %v1715
        %vm1717 = vweird.f32 %v1445
        %vm1718 = vweird.f32 %v1711
        %vm1719 = vmor %vm1717, %vm1718
        %v1720 = vsel %vm1719, %v1711, %v1716
        %v1721 = vrsqrt.pop %v1446
        %v1722 = vmul.f32 %v1721, %v1446
        %v1723 = vmul.f32 %v1722, %v1721
        %v1724 = vmul.f32 0.5, %v1723
        %v1725 = vsub.f32 1.5, %v1724
        %v1726 = vmul.f32 %v1721, %v1725
        %vm1727 = vweird.f32 %v1446
        %vm1728 = vweird.f32 %v1721
        %vm1729 = vmor %vm1727, %vm1728
        %v1730 = vsel %vm1729, %v1721, %v1726
        %v1731 = vrsqrt.pop %v1447
        %v1732 = vmul.f32 %v1731, %v1447
        %v1733 = vmul.f32 %v1732, %v1731
        %v1734 = vmul.f32 0.5, %v1733
        %v1735 = vsub.f32 1.5, %v1734
        %v1736 = vmul.f32 %v1731, %v1735
        %vm1737 = vweird.f32 %v1447
        %vm1738 = vweird.f32 %v1731
        %vm1739 = vmor %vm1737, %vm1738
        %v1740 = vsel %vm1739, %v1731, %v1736
        %v1741 = vrsqrt.pop %v1448
        %v1742 = vmul.f32 %v1741, %v1448
        %v1743 = vmul.f32 %v1742, %v1741
        %v1744 = vmul.f32 0.5, %v1743
        %v1745 = vsub.f32 1.5, %v1744
        %v1746 = vmul.f32 %v1741, %v1745
        %vm1747 = vweird.f32 %v1448
        %vm1748 = vweird.f32 %v1741
        %vm1749 = vmor %vm1747, %vm1748
        %v1750 = vsel %vm1749, %v1741, %v1746
        %v1751 = vrsqrt.pop %v1449
        %v1752 = vmul.f32 %v1751, %v1449
        %v1753 = vmul.f32 %v1752, %v1751
        %v1754 = vmul.f32 0.5, %v1753
        %v1755 = vsub.f32 1.5, %v1754
        %v1756 = vmul.f32 %v1751, %v1755
        %vm1757 = vweird.f32 %v1449
        %vm1758 = vweird.f32 %v1751
        %vm1759 = vmor %vm1757, %vm1758
        %v1760 = vsel %vm1759, %v1751, %v1756
        %v1761 = vrsqrt.pop %v1450
        %v1762 = vmul.f32 %v1761, %v1450
        %v1763 = vmul.f32 %v1762, %v1761
        %v1764 = vmul.f32 0.5, %v1763
        %v1765 = vsub.f32 1.5, %v1764
        %v1766 = vmul.f32 %v1761, %v1765
        %vm1767 = vweird.f32 %v1450
        %vm1768 = vweird.f32 %v1761
        %vm1769 = vmor %vm1767, %vm1768
        %v1770 = vsel %vm1769, %v1761, %v1766
        %v1771 = vmul.f32 %v1227, %v1460
        %v1772 = vmul.f32 %v1228, %v1470
        %v1773 = vmul.f32 %v1229, %v1480
        %v1774 = vmul.f32 %v1230, %v1490
        %v1775 = vmul.f32 %v1231, %v1500
        %v1776 = vmul.f32 %v1232, %v1510
        %v1777 = vmul.f32 %v1233, %v1520
        %v1778 = vmul.f32 %v1234, %v1530
        %v1779 = vmul.f32 %v1235, %v1540
        %v1780 = vmul.f32 %v1236, %v1550
        %v1781 = vmul.f32 %v1237, %v1560
        %v1782 = vmul.f32 %v1238, %v1570
        %v1783 = vmul.f32 %v1239, %v1580
        %v1784 = vmul.f32 %v1240, %v1590
        %v1785 = vmul.f32 %v1241, %v1600
        %v1786 = vmul.f32 %v1242, %v1610
        %v1787 = vmul.f32 %v1243, %v1620
        %v1788 = vmul.f32 %v1244, %v1630
        %v1789 = vmul.f32 %v1245, %v1640
        %v1790 = vmul.f32 %v1246, %v1650
        %v1791 = vmul.f32 %v1247, %v1660
        %v1792 = vmul.f32 %v1248, %v1670
        %v1793 = vmul.f32 %v1249, %v1680
        %v1794 = vmul.f32 %v1250, %v1690
        %v1795 = vmul.f32 %v1251, %v1700
        %v1796 = vmul.f32 %v1252, %v1710
        %v1797 = vmul.f32 %v1253, %v1720
        %v1798 = vmul.f32 %v1254, %v1730
        %v1799 = vmul.f32 %v1255, %v1740
        %v1800 = vmul.f32 %v1256, %v1750
        %v1801 = vmul.f32 %v1257, %v1760
        %v1802 = vmul.f32 %v1258, %v1770
        %v1804 = vperm.slane %v1090, 0
        %v1806 = vmul.f32 %v1771, %v1804
        %v1807 = vmul.f32 %v1772, %v1804
        %v1808 = vmul.f32 %v1773, %v1804
        %v1809 = vmul.f32 %v1774, %v1804
        %v1810 = vmul.f32 %v1775, %v1804
        %v1811 = vmul.f32 %v1776, %v1804
        %v1812 = vmul.f32 %v1777, %v1804
        %v1813 = vmul.f32 %v1778, %v1804
        %v1814 = vmul.f32 %v1779, %v1804
        %v1815 = vmul.f32 %v1780, %v1804
        %v1816 = vmul.f32 %v1781, %v1804
        %v1817 = vmul.f32 %v1782, %v1804
        %v1818 = vmul.f32 %v1783, %v1804
        %v1819 = vmul.f32 %v1784, %v1804
        %v1820 = vmul.f32 %v1785, %v1804
        %v1821 = vmul.f32 %v1786, %v1804
        %v1822 = vmul.f32 %v1787, %v1804
        %v1823 = vmul.f32 %v1788, %v1804
        %v1824 = vmul.f32 %v1789, %v1804
        %v1825 = vmul.f32 %v1790, %v1804
        %v1826 = vmul.f32 %v1791, %v1804
        %v1827 = vmul.f32 %v1792, %v1804
        %v1828 = vmul.f32 %v1793, %v1804
        %v1829 = vmul.f32 %v1794, %v1804
        %v1830 = vmul.f32 %v1795, %v1804
        %v1831 = vmul.f32 %v1796, %v1804
        %v1832 = vmul.f32 %v1797, %v1804
        %v1833 = vmul.f32 %v1798, %v1804
        %v1834 = vmul.f32 %v1799, %v1804
        %v1835 = vmul.f32 %v1800, %v1804
        %v1836 = vmul.f32 %v1801, %v1804
        %v1837 = vmul.f32 %v1802, %v1804
        %v1839 = vperm.slane %v1091, 0
        %v1841 = vadd.f32 %v1806, %v1839
        %v1842 = vadd.f32 %v1807, %v1839
        %v1843 = vadd.f32 %v1808, %v1839
        %v1844 = vadd.f32 %v1809, %v1839
        %v1845 = vadd.f32 %v1810, %v1839
        %v1846 = vadd.f32 %v1811, %v1839
        %v1847 = vadd.f32 %v1812, %v1839
        %v1848 = vadd.f32 %v1813, %v1839
        %v1849 = vadd.f32 %v1814, %v1839
        %v1850 = vadd.f32 %v1815, %v1839
        %v1851 = vadd.f32 %v1816, %v1839
        %v1852 = vadd.f32 %v1817, %v1839
        %v1853 = vadd.f32 %v1818, %v1839
        %v1854 = vadd.f32 %v1819, %v1839
        %v1855 = vadd.f32 %v1820, %v1839
        %v1856 = vadd.f32 %v1821, %v1839
        %v1857 = vadd.f32 %v1822, %v1839
        %v1858 = vadd.f32 %v1823, %v1839
        %v1859 = vadd.f32 %v1824, %v1839
        %v1860 = vadd.f32 %v1825, %v1839
        %v1861 = vadd.f32 %v1826, %v1839
        %v1862 = vadd.f32 %v1827, %v1839
        %v1863 = vadd.f32 %v1828, %v1839
        %v1864 = vadd.f32 %v1829, %v1839
        %v1865 = vadd.f32 %v1830, %v1839
        %v1866 = vadd.f32 %v1831, %v1839
        %v1867 = vadd.f32 %v1832, %v1839
        %v1868 = vadd.f32 %v1833, %v1839
        %v1869 = vadd.f32 %v1834, %v1839
        %v1870 = vadd.f32 %v1835, %v1839
        %v1871 = vadd.f32 %v1836, %v1839
        %v1872 = vadd.f32 %v1837, %v1839
        %v1873 = vpack.c.bf16 %v1842, %v1841
        %v1874 = vpack.c.bf16 %v1844, %v1843
        %v1875 = vpack.c.bf16 %v1846, %v1845
        %v1876 = vpack.c.bf16 %v1848, %v1847
        %v1877 = vpack.c.bf16 %v1850, %v1849
        %v1878 = vpack.c.bf16 %v1852, %v1851
        %v1879 = vpack.c.bf16 %v1854, %v1853
        %v1880 = vpack.c.bf16 %v1856, %v1855
        %v1881 = vpack.c.bf16 %v1858, %v1857
        %v1882 = vpack.c.bf16 %v1860, %v1859
        %v1883 = vpack.c.bf16 %v1862, %v1861
        %v1884 = vpack.c.bf16 %v1864, %v1863
        %v1885 = vpack.c.bf16 %v1866, %v1865
        %v1886 = vpack.c.bf16 %v1868, %v1867
        %v1887 = vpack.c.bf16 %v1870, %v1869
        %v1888 = vpack.c.bf16 %v1872, %v1871
        %v1889 = vld [vmem:[%s9] sm:$0xf]
        %v1890 = vld [vmem:[%s9 + $0x4] sm:$0xf]
        %v1891 = vld [vmem:[%s9 + $0x8] sm:$0xf]
        %v1892 = vld [vmem:[%s9 + $0xc] sm:$0xf]
        %v1893 = vld [vmem:[%s9 + $0x10] sm:$0xf]
        %v1894 = vld [vmem:[%s9 + $0x14] sm:$0xf]
        %v1895 = vld [vmem:[%s9 + $0x18] sm:$0xf]
        %v1896 = vld [vmem:[%s9 + $0x1c] sm:$0xf]
        %v1897 = vld [vmem:[%s10] sm:$0x1]
        %v1899 = vperm.slane %v1897, 0
        %v1909 = vunpack.c.l.b16 %v1889
        %v1910 = vunpack.c.l.b16 %v1890
        %v1911 = vunpack.c.l.b16 %v1891
        %v1912 = vunpack.c.l.b16 %v1892
        %v1913 = vunpack.c.l.b16 %v1893
        %v1914 = vunpack.c.l.b16 %v1894
        %v1915 = vunpack.c.l.b16 %v1895
        %v1916 = vunpack.c.l.b16 %v1896
        %v1917 = vpack.c.b16 %v1910, %v1909
        %v1918 = vpack.c.b16 %v1912, %v1911
        %v1919 = vpack.c.b16 %v1914, %v1913
        %v1920 = vpack.c.b16 %v1916, %v1915
        %v1926 = vsel %vm699, %v1873, 0
        %v1929 = vsel %vm699, %v1874, 0
        %v1932 = vsel %vm699, %v1875, 0
        %v1935 = vsel %vm699, %v1876, 0
        %v1938 = vsel %vm699, %v1877, 0
        %v1941 = vsel %vm699, %v1878, 0
        %v1944 = vsel %vm699, %v1879, 0
        %v1947 = vsel %vm699, %v1880, 0
        %v1950 = vsel %vm699, %v1881, 0
        %v1953 = vsel %vm699, %v1882, 0
        %v1956 = vsel %vm699, %v1883, 0
        %v1959 = vsel %vm699, %v1884, 0
        %v1962 = vsel %vm699, %v1885, 0
        %v1965 = vsel %vm699, %v1886, 0
        %v1968 = vsel %vm699, %v1887, 0
        %v1971 = vsel %vm699, %v1888, 0
        %1973 = vmatpush.bf16.msra.mxu0 0
        %1974 = vmatpush.bf16.msra.mxu0 0
        %1975 = vmatpush.bf16.msra.mxu0 0
        %1976 = vmatpush.bf16.msra.mxu0 0
        %1977 = vmatpush.bf16.msra.mxu0 %v1920
        %1978 = vmatpush.bf16.msra.mxu0 %v1919
        %1979 = vmatpush.bf16.msra.mxu0 %v1918
        %1980 = vmatpush.bf16.msra.mxu0 %v1917
        %1981 = vmatmul.bf16.gmra.mxu0 %v1926
        %v1982 = vpop.f32.mrf.mxu0
        %v1983 = vadd.f32 %v1899, %v1982
        %v1984 = vpop.f32.mrf.mxu0
        %v1985 = vadd.f32 %v1899, %v1984
        %1986 = vmatmul.bf16.gmra.mxu0 %v1929
        %v1987 = vpop.f32.mrf.mxu0
        %v1988 = vadd.f32 %v1899, %v1987
        %v1989 = vpop.f32.mrf.mxu0
        %v1990 = vadd.f32 %v1899, %v1989
        %1991 = vmatmul.bf16.gmra.mxu0 %v1932
        %v1992 = vpop.f32.mrf.mxu0
        %v1993 = vadd.f32 %v1899, %v1992
        %v1994 = vpop.f32.mrf.mxu0
        %v1995 = vadd.f32 %v1899, %v1994
        %1996 = vmatmul.bf16.gmra.mxu0 %v1935
        %v1997 = vpop.f32.mrf.mxu0
        %v1998 = vadd.f32 %v1899, %v1997
        %v1999 = vpop.f32.mrf.mxu0
        %v2000 = vadd.f32 %v1899, %v1999
        %2001 = vmatmul.bf16.gmra.mxu0 %v1938
        %v2002 = vpop.f32.mrf.mxu0
        %v2003 = vadd.f32 %v1899, %v2002
        %v2004 = vpop.f32.mrf.mxu0
        %v2005 = vadd.f32 %v1899, %v2004
        %2006 = vmatmul.bf16.gmra.mxu0 %v1941
        %v2007 = vpop.f32.mrf.mxu0
        %v2008 = vadd.f32 %v1899, %v2007
        %v2009 = vpop.f32.mrf.mxu0
        %v2010 = vadd.f32 %v1899, %v2009
        %2011 = vmatmul.bf16.gmra.mxu0 %v1944
        %v2012 = vpop.f32.mrf.mxu0
        %v2013 = vadd.f32 %v1899, %v2012
        %v2014 = vpop.f32.mrf.mxu0
        %v2015 = vadd.f32 %v1899, %v2014
        %2016 = vmatmul.bf16.gmra.mxu0 %v1947
        %v2017 = vpop.f32.mrf.mxu0
        %v2018 = vadd.f32 %v1899, %v2017
        %v2019 = vpop.f32.mrf.mxu0
        %v2020 = vadd.f32 %v1899, %v2019
        %2021 = vmatmul.bf16.gmra.mxu0 %v1950
        %v2022 = vpop.f32.mrf.mxu0
        %v2023 = vadd.f32 %v1899, %v2022
        %v2024 = vpop.f32.mrf.mxu0
        %v2025 = vadd.f32 %v1899, %v2024
        %2026 = vmatmul.bf16.gmra.mxu0 %v1953
        %v2027 = vpop.f32.mrf.mxu0
        %v2028 = vadd.f32 %v1899, %v2027
        %v2029 = vpop.f32.mrf.mxu0
        %v2030 = vadd.f32 %v1899, %v2029
        %2031 = vmatmul.bf16.gmra.mxu0 %v1956
        %v2032 = vpop.f32.mrf.mxu0
        %v2033 = vadd.f32 %v1899, %v2032
        %v2034 = vpop.f32.mrf.mxu0
        %v2035 = vadd.f32 %v1899, %v2034
        %2036 = vmatmul.bf16.gmra.mxu0 %v1959
        %v2037 = vpop.f32.mrf.mxu0
        %v2038 = vadd.f32 %v1899, %v2037
        %v2039 = vpop.f32.mrf.mxu0
        %v2040 = vadd.f32 %v1899, %v2039
        %2041 = vmatmul.bf16.gmra.mxu0 %v1962
        %v2042 = vpop.f32.mrf.mxu0
        %v2043 = vadd.f32 %v1899, %v2042
        %v2044 = vpop.f32.mrf.mxu0
        %v2045 = vadd.f32 %v1899, %v2044
        %2046 = vmatmul.bf16.gmra.mxu0 %v1965
        %v2047 = vpop.f32.mrf.mxu0
        %v2048 = vadd.f32 %v1899, %v2047
        %v2049 = vpop.f32.mrf.mxu0
        %v2050 = vadd.f32 %v1899, %v2049
        %2051 = vmatmul.bf16.gmra.mxu0 %v1968
        %v2052 = vpop.f32.mrf.mxu0
        %v2053 = vadd.f32 %v1899, %v2052
        %v2054 = vpop.f32.mrf.mxu0
        %v2055 = vadd.f32 %v1899, %v2054
        %2056 = vmatmul.bf16.gmra.mxu0 %v1971
        %v2057 = vpop.f32.mrf.mxu0
        %v2058 = vadd.f32 %v1899, %v2057
        %v2059 = vpop.f32.mrf.mxu0
        %v2060 = vadd.f32 %v1899, %v2059
        %2061 = vdwg.mxu0
        %v2062 = vadd.f32 %v410, %v1983
        %v2063 = vadd.f32 %v411, %v1985
        %v2064 = vadd.f32 %v412, %v1988
        %v2065 = vadd.f32 %v413, %v1990
        %v2066 = vadd.f32 %v414, %v1993
        %v2067 = vadd.f32 %v415, %v1995
        %v2068 = vadd.f32 %v416, %v1998
        %v2069 = vadd.f32 %v417, %v2000
        %v2070 = vadd.f32 %v418, %v2003
        %v2071 = vadd.f32 %v419, %v2005
        %v2072 = vadd.f32 %v420, %v2008
        %v2073 = vadd.f32 %v421, %v2010
        %v2074 = vadd.f32 %v422, %v2013
        %v2075 = vadd.f32 %v423, %v2015
        %v2076 = vadd.f32 %v424, %v2018
        %v2077 = vadd.f32 %v425, %v2020
        %v2078 = vadd.f32 %v426, %v2023
        %v2079 = vadd.f32 %v427, %v2025
        %v2080 = vadd.f32 %v428, %v2028
        %v2081 = vadd.f32 %v429, %v2030
        %v2082 = vadd.f32 %v430, %v2033
        %v2083 = vadd.f32 %v431, %v2035
        %v2084 = vadd.f32 %v432, %v2038
        %v2085 = vadd.f32 %v433, %v2040
        %v2086 = vadd.f32 %v434, %v2043
        %v2087 = vadd.f32 %v435, %v2045
        %v2088 = vadd.f32 %v436, %v2048
        %v2089 = vadd.f32 %v437, %v2050
        %v2090 = vadd.f32 %v438, %v2053
        %v2091 = vadd.f32 %v439, %v2055
        %v2092 = vadd.f32 %v440, %v2058
        %v2093 = vadd.f32 %v441, %v2060
        %2094 = vst [vmem:[%s406] sm:$0xff] %v2062
        %2095 = vst [vmem:[%s406 + $0x8] sm:$0xff] %v2063
        %2096 = vst [vmem:[%s406 + $0x10] sm:$0xff] %v2064
        %2097 = vst [vmem:[%s406 + $0x18] sm:$0xff] %v2065
        %2098 = vst [vmem:[%s406 + $0x20] sm:$0xff] %v2066
        %2099 = vst [vmem:[%s406 + $0x28] sm:$0xff] %v2067
        %2100 = vst [vmem:[%s406 + $0x30] sm:$0xff] %v2068
        %2101 = vst [vmem:[%s406 + $0x38] sm:$0xff] %v2069
        %2102 = vst [vmem:[%s406 + $0x40] sm:$0xff] %v2070
        %2103 = vst [vmem:[%s406 + $0x48] sm:$0xff] %v2071
        %2104 = vst [vmem:[%s406 + $0x50] sm:$0xff] %v2072
        %2105 = vst [vmem:[%s406 + $0x58] sm:$0xff] %v2073
        %2106 = vst [vmem:[%s406 + $0x60] sm:$0xff] %v2074
        %2107 = vst [vmem:[%s406 + $0x68] sm:$0xff] %v2075
        %2108 = vst [vmem:[%s406 + $0x70] sm:$0xff] %v2076
        %2109 = vst [vmem:[%s406 + $0x78] sm:$0xff] %v2077
        %2110 = vst [vmem:[%s406 + $0x80] sm:$0xff] %v2078
        %2111 = vst [vmem:[%s406 + $0x88] sm:$0xff] %v2079
        %2112 = vst [vmem:[%s406 + $0x90] sm:$0xff] %v2080
        %2113 = vst [vmem:[%s406 + $0x98] sm:$0xff] %v2081
        %2114 = vst [vmem:[%s406 + $0xa0] sm:$0xff] %v2082
        %2115 = vst [vmem:[%s406 + $0xa8] sm:$0xff] %v2083
        %2116 = vst [vmem:[%s406 + $0xb0] sm:$0xff] %v2084
        %2117 = vst [vmem:[%s406 + $0xb8] sm:$0xff] %v2085
        %2118 = vst [vmem:[%s406 + $0xc0] sm:$0xff] %v2086
        %2119 = vst [vmem:[%s406 + $0xc8] sm:$0xff] %v2087
        %2120 = vst [vmem:[%s406 + $0xd0] sm:$0xff] %v2088
        %2121 = vst [vmem:[%s406 + $0xd8] sm:$0xff] %v2089
        %2122 = vst [vmem:[%s406 + $0xe0] sm:$0xff] %v2090
        %2123 = vst [vmem:[%s406 + $0xe8] sm:$0xff] %v2091
        %2124 = vst [vmem:[%s406 + $0xf0] sm:$0xff] %v2092
        %2125 = vst [vmem:[%s406 + $0xf8] sm:$0xff] %v2093
        %s2126 = sand.u32 %s272, 1
        %s2127 = scalar_lea.sflag [#allocation4], %s2126
        %s2128 = sand.u32 %s272, 1
        %s2129 = smul.addr %s2128, 256
        %s2130 = scalar_lea.vmem [#allocation5], %s2129
        // Predicated region
        $region69: #{tpu_custom_call.1} parent=63 // pred_check
          %p2131 = pneg %p282
        $region70: #{tpu_custom_call.1} parent=63 // pred_check_branch
          %2133 = sbr.rel (%p2131) target = $region72
        $region71: #{tpu_custom_call.1} parent=63 // pred_region
          %s2134 = smul.u32 32, %s28
          %2136 = vsyncadd %s2127, 0
          %s2137 = smul.addr %s2134, 8
          %s2138 = scalar_lea.hbm %s11, %s2137
          %s2139 = sshll.u32 %s2130, 4
          %s2140 = int_to_ptr.vmem [resolvable:$true] %s2139
          %s2141 = sshll.u32 %s2138, 4
          %s2142 = int_to_ptr.hbm [resolvable:$true] %s2141
          %2147 = dma.vmem_to_hbm [thread:$0]  %s2140, 4096, %s2142, %s2127, 128, 128, 8
        $region72: #{tpu_custom_call.1} parent=63 // pred_fallthru
          _
      $region64: #{tpu_custom_call.1} parent=5 // pred_fallthru
        _
      %p2148 = scmp.le.s32.totalorder 2, %s23
      // Predicated region
      $region73: #{tpu_custom_call.1} parent=5 // pred_check
        %p2149 = pneg %p2148
      $region74: #{tpu_custom_call.1} parent=5 // pred_check_branch
        %2151 = sbr.rel (%p2149) target = $region76
      $region75: #{tpu_custom_call.1} parent=5 // pred_region
        %s2152 = ssub.s32 %s23, 2
        // Predicated region
        $region77: #{tpu_custom_call.1} parent=75 // pred_check
          %p2153 = pneg %p288
        $region78: #{tpu_custom_call.1} parent=75 // pred_check_branch
          %2155 = sbr.rel (%p2153) target = $region80
        $region79: #{tpu_custom_call.1} parent=75 // pred_region
          %s2156 = sand.u32 %s273, 1
          %s2157 = scalar_lea.sflag [#allocation4], %s2156
          %s2158 = sand.u32 %s273, 1
          %s2159 = smul.addr %s2158, 256
          %s2160 = scalar_lea.vmem [#allocation5], %s2159
          %2162 = dma.done %s2157, 4096
        $region80: #{tpu_custom_call.1} parent=75 // pred_fallthru
          _
      $region76: #{tpu_custom_call.1} parent=5 // pred_fallthru
        _
    $region6: #{tpu_custom_call.1} parent=1 // loop_footer
      %s27 = sadd.s32 1, %s23
    $region7: #{tpu_custom_call.1} parent=1 // loop_footer_branch
      %22 = sbr.rel target = $region3
    $region8: #{tpu_custom_call.1} parent=1 // loop_exit
      _
    %2163 = vsyncpa [#allocation3], 1
    %s2164 = scalar_lea.sflag [#allocation3], 1
    %2165 = vsyncpa %s2164, 1
    %2166 = vsyncpa [#allocation4], 1
    %s2167 = scalar_lea.sflag [#allocation4], 1
    %2168 = vsyncpa %s2167, 1

// kernel: tpu_custom_call.1
$region0: #{tpu_custom_call.1}
  #allocation0 [shape = 'u32[]', space=smem, size = 0x4, offset = 0x4, fixed_abs, tag = 'smem constant byte address 0x4 - core index']
  #allocation1 [shape = 'u32[72,128]{1,0:T(1,128)}', space=vmem, size = 0x9000, scoped, tag = 'internal scratch']
  %s0 = inlined_call_operand.hbm [shape: f32[512,128], index: 0, kind: input, shape index: {}]
  %s1 = inlined_call_operand.vmem [shape: bf16[128,64], index: 1, kind: input, shape index: {}]
  %s2 = inlined_call_operand.vmem [shape: f32[1,64], index: 2, kind: input, shape index: {}]
  %s3 = inlined_call_operand.vmem [shape: bf16[64,64], index: 3, kind: input, shape index: {}]
  %s4 = inlined_call_operand.vmem [shape: f32[1,64], index: 4, kind: input, shape index: {}]
  %s5 = inlined_call_operand.vmem [shape: bf16[64,64], index: 5, kind: input, shape index: {}]
  %s6 = inlined_call_operand.vmem [shape: f32[1,64], index: 6, kind: input, shape index: {}]
  %s7 = inlined_call_operand.vmem [shape: f32[1,64], index: 7, kind: input, shape index: {}]
  %s8 = inlined_call_operand.vmem [shape: f32[1,64], index: 8, kind: input, shape index: {}]
  %s9 = inlined_call_operand.vmem [shape: bf16[64,128], index: 9, kind: input, shape index: {}]
  %s10 = inlined_call_operand.vmem [shape: f32[1,128], index: 10, kind: input, shape index: {}]
  %s11 = inlined_call_operand.hbm [shape: f32[512,128], index: 11, kind: output, shape index: {}]
  %s12 = sld [smem:[#allocation0]]
  $region81: #{tpu_custom_call.1} parent=0
    _
  %s14 = ssub.s32 1, %s12
  %s15 = scalar_select 0, %s14, %s12
  $region1: #{tpu_custom_call.1} parent=0
    #allocation2 [shape = 'u8[262144]{0}', space=vmem, size = 0x40000, scoped, tag = 'input window, operand 0']
    #allocation3 [shape = 's32[2]{0}', space=sflag, size = 0x8, scoped, tag = 'scoped memory for tpu_custom_call.1']
    #allocation4 [shape = 's32[2]{0}', space=sflag, size = 0x8, scoped, tag = 'scoped memory for tpu_custom_call.1']
    #allocation5 [shape = 'u8[262144]{0}', space=vmem, size = 0x40000, scoped, tag = 'output window, operand 0']
    %16 = vsyncpa [#allocation3], 0
    %s17 = scalar_lea.sflag [#allocation3], 1
    %18 = vsyncpa %s17, 0
    %19 = vsyncpa [#allocation4], 0
    %s20 = scalar_lea.sflag [#allocation4], 1
    %21 = vsyncpa %s20, 0
    loop: start=0, step=1, limit=4
    $region2: #{tpu_custom_call.1} parent=1 // loop_pre_header
      _
    $region3: #{tpu_custom_call.1} parent=1 // loop_header
      %s23 = sphi 0, %s27
      %p24 = scmp.ge.s32.totalorder %s23, 4
      %s33 = sphi 0, %s35
      %s36 = sphi 0, %s33
      %s37 = sphi 0, %s36
      %s53 = sphi 0, %s37
      %s57 = sphi 0, %s57
      %s59 = sphi 0, %s57
      %s60 = sphi 0, %s59
      %s74 = sphi 0, %s60
      %s78 = sphi 0, %s78
      %s80 = sphi 0, %s78
      %s81 = sphi 0, %s80
      %s95 = sphi 0, %s81
      %s99 = sphi 0, %s99
      %s101 = sphi 0, %s99
      %s102 = sphi 0, %s101
      %s116 = sphi 0, %s102
      %s120 = sphi 0, %s120
      %s122 = sphi 0, %s120
      %s123 = sphi 0, %s122
      %s137 = sphi 0, %s123
      %s141 = sphi 0, %s141
      %s143 = sphi 0, %s141
      %s144 = sphi 0, %s143
      %s158 = sphi 0, %s144
      %s162 = sphi 0, %s162
      %s164 = sphi 0, %s162
      %s165 = sphi 0, %s164
      %s179 = sphi 0, %s165
      %s183 = sphi 0, %s183
      %s185 = sphi 0, %s183
      %s186 = sphi 0, %s185
      %s200 = sphi 0, %s186
      %s204 = sphi 0, %s204
      %s206 = sphi 0, %s204
      %s207 = sphi 0, %s206
      %s221 = sphi 0, %s207
      %s225 = sphi 0, %s225
      %s227 = sphi 0, %s225
      %s228 = sphi 0, %s227
      %s242 = sphi 0, %s228
      %s246 = sphi 0, %s246
      %s248 = sphi 0, %s246
      %s249 = sphi 0, %s248
      %s263 = sphi 0, %s249
      %s269 = sphi 0, %s271
      %s272 = sphi 0, %s269
      %s273 = sphi 0, %s272
      %s289 = sphi 0, %s273
    $region4: #{tpu_custom_call.1} parent=1 // loop_header_branch
      %26 = sbr.rel (%p24) target = $region8
    $region5: #{tpu_custom_call.1} parent=1 // loop_body
      %s28 = ssub.s32 %s23, 1
      %s29 = ssub.s32 %s23, 2
      %s30 = sadd.s32 %s23, 1
      %s31 = ssub.s32 %s23, %s30
      %p32 = scmp.eq.s32.totalorder %s31, 0
      %s34 = sadd.s32 %s33, 1
      %s35 = scalar_select %p32, %s33, %s34
      %p38 = pneg %p32
      %p39 = scmp.eq.s32.totalorder %s23, 1
      %p40 = por %p38, %p39
      %p41 = scmp.ne.s32.totalorder %s33, %s36
      %p42 = scmp.eq.s32.totalorder %s23, 0
      %p43 = por %p41, %p42
      %p44 = scmp.ne.s32.totalorder %s33, %s36
      %p45 = scmp.eq.s32.totalorder %s28, 1
      %p46 = por %p44, %p45
      %p47 = scmp.ne.s32.totalorder %s36, %s37
      %p48 = scmp.eq.s32.totalorder %s28, 0
      %p49 = por %p47, %p48
      %p50 = scmp.ne.s32.totalorder %s36, %s37
      %p51 = scmp.eq.s32.totalorder %s29, 1
      %p52 = por %p50, %p51
      %p54 = scmp.ne.s32.totalorder %s37, %s53
      %p55 = scmp.eq.s32.totalorder %s29, 0
      %p56 = por %p54, %p55
      %s58 = sadd.s32 %s57, 1
      %p61 = scmp.eq.s32.totalorder %s23, 1
      %p62 = scmp.ne.s32.totalorder %s57, %s59
      %p63 = scmp.eq.s32.totalorder %s23, 0
      %p64 = por %p62, %p63
      %p65 = scmp.ne.s32.totalorder %s57, %s59
      %p66 = scmp.eq.s32.totalorder %s28, 1
      %p67 = por %p65, %p66
      %p68 = scmp.ne.s32.totalorder %s59, %s60
      %p69 = scmp.eq.s32.totalorder %s28, 0
      %p70 = por %p68, %p69
      %p71 = scmp.ne.s32.totalorder %s59, %s60
      %p72 = scmp.eq.s32.totalorder %s29, 1
      %p73 = por %p71, %p72
      %p75 = scmp.ne.s32.totalorder %s60, %s74
      %p76 = scmp.eq.s32.totalorder %s29, 0
      %p77 = por %p75, %p76
      %s79 = sadd.s32 %s78, 1
      %p82 = scmp.eq.s32.totalorder %s23, 1
      %p83 = scmp.ne.s32.totalorder %s78, %s80
      %p84 = scmp.eq.s32.totalorder %s23, 0
      %p85 = por %p83, %p84
      %p86 = scmp.ne.s32.totalorder %s78, %s80
      %p87 = scmp.eq.s32.totalorder %s28, 1
      %p88 = por %p86, %p87
      %p89 = scmp.ne.s32.totalorder %s80, %s81
      %p90 = scmp.eq.s32.totalorder %s28, 0
      %p91 = por %p89, %p90
      %p92 = scmp.ne.s32.totalorder %s80, %s81
      %p93 = scmp.eq.s32.totalorder %s29, 1
      %p94 = por %p92, %p93
      %p96 = scmp.ne.s32.totalorder %s81, %s95
      %p97 = scmp.eq.s32.totalorder %s29, 0
      %p98 = por %p96, %p97
      %s100 = sadd.s32 %s99, 1
      %p103 = scmp.eq.s32.totalorder %s23, 1
      %p104 = scmp.ne.s32.totalorder %s99, %s101
      %p105 = scmp.eq.s32.totalorder %s23, 0
      %p106 = por %p104, %p105
      %p107 = scmp.ne.s32.totalorder %s99, %s101
      %p108 = scmp.eq.s32.totalorder %s28, 1
      %p109 = por %p107, %p108
      %p110 = scmp.ne.s32.totalorder %s101, %s102
      %p111 = scmp.eq.s32.totalorder %s28, 0
      %p112 = por %p110, %p111
      %p113 = scmp.ne.s32.totalorder %s101, %s102
      %p114 = scmp.eq.s32.totalorder %s29, 1
      %p115 = por %p113, %p114
      %p117 = scmp.ne.s32.totalorder %s102, %s116
      %p118 = scmp.eq.s32.totalorder %s29, 0
      %p119 = por %p117, %p118
      %s121 = sadd.s32 %s120, 1
      %p124 = scmp.eq.s32.totalorder %s23, 1
      %p125 = scmp.ne.s32.totalorder %s120, %s122
      %p126 = scmp.eq.s32.totalorder %s23, 0
      %p127 = por %p125, %p126
      %p128 = scmp.ne.s32.totalorder %s120, %s122
      %p129 = scmp.eq.s32.totalorder %s28, 1
      %p130 = por %p128, %p129
      %p131 = scmp.ne.s32.totalorder %s122, %s123
      %p132 = scmp.eq.s32.totalorder %s28, 0
      %p133 = por %p131, %p132
      %p134 = scmp.ne.s32.totalorder %s122, %s123
      %p135 = scmp.eq.s32.totalorder %s29, 1
      %p136 = por %p134, %p135
      %p138 = scmp.ne.s32.totalorder %s123, %s137
      %p139 = scmp.eq.s32.totalorder %s29, 0
      %p140 = por %p138, %p139
      %s142 = sadd.s32 %s141, 1
      %p145 = scmp.eq.s32.totalorder %s23, 1
      %p146 = scmp.ne.s32.totalorder %s141, %s143
      %p147 = scmp.eq.s32.totalorder %s23, 0
      %p148 = por %p146, %p147
      %p149 = scmp.ne.s32.totalorder %s141, %s143
      %p150 = scmp.eq.s32.totalorder %s28, 1
      %p151 = por %p149, %p150
      %p152 = scmp.ne.s32.totalorder %s143, %s144
      %p153 = scmp.eq.s32.totalorder %s28, 0
      %p154 = por %p152, %p153
      %p155 = scmp.ne.s32.totalorder %s143, %s144
      %p156 = scmp.eq.s32.totalorder %s29, 1
      %p157 = por %p155, %p156
      %p159 = scmp.ne.s32.totalorder %s144, %s158
      %p160 = scmp.eq.s32.totalorder %s29, 0
      %p161 = por %p159, %p160
      %s163 = sadd.s32 %s162, 1
      %p166 = scmp.eq.s32.totalorder %s23, 1
      %p167 = scmp.ne.s32.totalorder %s162, %s164
      %p168 = scmp.eq.s32.totalorder %s23, 0
      %p169 = por %p167, %p168
      %p170 = scmp.ne.s32.totalorder %s162, %s164
      %p171 = scmp.eq.s32.totalorder %s28, 1
      %p172 = por %p170, %p171
      %p173 = scmp.ne.s32.totalorder %s164, %s165
      %p174 = scmp.eq.s32.totalorder %s28, 0
      %p175 = por %p173, %p174
      %p176 = scmp.ne.s32.totalorder %s164, %s165
      %p177 = scmp.eq.s32.totalorder %s29, 1
      %p178 = por %p176, %p177
      %p180 = scmp.ne.s32.totalorder %s165, %s179
      %p181 = scmp.eq.s32.totalorder %s29, 0
      %p182 = por %p180, %p181
      %s184 = sadd.s32 %s183, 1
      %p187 = scmp.eq.s32.totalorder %s23, 1
      %p188 = scmp.ne.s32.totalorder %s183, %s185
      %p189 = scmp.eq.s32.totalorder %s23, 0
      %p190 = por %p188, %p189
      %p191 = scmp.ne.s32.totalorder %s183, %s185
      %p192 = scmp.eq.s32.totalorder %s28, 1
      %p193 = por %p191, %p192
      %p194 = scmp.ne.s32.totalorder %s185, %s186
      %p195 = scmp.eq.s32.totalorder %s28, 0
      %p196 = por %p194, %p195
      %p197 = scmp.ne.s32.totalorder %s185, %s186
      %p198 = scmp.eq.s32.totalorder %s29, 1
      %p199 = por %p197, %p198
      %p201 = scmp.ne.s32.totalorder %s186, %s200
      %p202 = scmp.eq.s32.totalorder %s29, 0
      %p203 = por %p201, %p202
      %s205 = sadd.s32 %s204, 1
      %p208 = scmp.eq.s32.totalorder %s23, 1
      %p209 = scmp.ne.s32.totalorder %s204, %s206
      %p210 = scmp.eq.s32.totalorder %s23, 0
      %p211 = por %p209, %p210
      %p212 = scmp.ne.s32.totalorder %s204, %s206
      %p213 = scmp.eq.s32.totalorder %s28, 1
      %p214 = por %p212, %p213
      %p215 = scmp.ne.s32.totalorder %s206, %s207
      %p216 = scmp.eq.s32.totalorder %s28, 0
      %p217 = por %p215, %p216
      %p218 = scmp.ne.s32.totalorder %s206, %s207
      %p219 = scmp.eq.s32.totalorder %s29, 1
      %p220 = por %p218, %p219
      %p222 = scmp.ne.s32.totalorder %s207, %s221
      %p223 = scmp.eq.s32.totalorder %s29, 0
      %p224 = por %p222, %p223
      %s226 = sadd.s32 %s225, 1
      %p229 = scmp.eq.s32.totalorder %s23, 1
      %p230 = scmp.ne.s32.totalorder %s225, %s227
      %p231 = scmp.eq.s32.totalorder %s23, 0
      %p232 = por %p230, %p231
      %p233 = scmp.ne.s32.totalorder %s225, %s227
      %p234 = scmp.eq.s32.totalorder %s28, 1
      %p235 = por %p233, %p234
      %p236 = scmp.ne.s32.totalorder %s227, %s228
      %p237 = scmp.eq.s32.totalorder %s28, 0
      %p238 = por %p236, %p237
      %p239 = scmp.ne.s32.totalorder %s227, %s228
      %p240 = scmp.eq.s32.totalorder %s29, 1
      %p241 = por %p239, %p240
      %p243 = scmp.ne.s32.totalorder %s228, %s242
      %p244 = scmp.eq.s32.totalorder %s29, 0
      %p245 = por %p243, %p244
      %s247 = sadd.s32 %s246, 1
      %p250 = scmp.eq.s32.totalorder %s23, 1
      %p251 = scmp.ne.s32.totalorder %s246, %s248
      %p252 = scmp.eq.s32.totalorder %s23, 0
      %p253 = por %p251, %p252
      %p254 = scmp.ne.s32.totalorder %s246, %s248
      %p255 = scmp.eq.s32.totalorder %s28, 1
      %p256 = por %p254, %p255
      %p257 = scmp.ne.s32.totalorder %s248, %s249
      %p258 = scmp.eq.s32.totalorder %s28, 0
      %p259 = por %p257, %p258
      %p260 = scmp.ne.s32.totalorder %s248, %s249
      %p261 = scmp.eq.s32.totalorder %s29, 1
      %p262 = por %p260, %p261
      %p264 = scmp.ne.s32.totalorder %s249, %s263
      %p265 = scmp.eq.s32.totalorder %s29, 0
      %p266 = por %p264, %p265
      %s267 = ssub.s32 %s23, %s30
      %p268 = scmp.eq.s32.totalorder %s267, 0
      %s270 = sadd.s32 %s269, 1
      %s271 = scalar_select %p268, %s269, %s270
      %p274 = pneg %p268
      %p275 = scmp.eq.s32.totalorder %s23, 1
      %p276 = por %p274, %p275
      %p277 = scmp.ne.s32.totalorder %s269, %s272
      %p278 = scmp.eq.s32.totalorder %s23, 0
      %p279 = por %p277, %p278
      %p280 = scmp.ne.s32.totalorder %s269, %s272
      %p281 = scmp.eq.s32.totalorder %s28, 1
      %p282 = por %p280, %p281
      %p283 = scmp.ne.s32.totalorder %s272, %s273
      %p284 = scmp.eq.s32.totalorder %s28, 0
      %p285 = por %p283, %p284
      %p286 = scmp.ne.s32.totalorder %s272, %s273
      %p287 = scmp.eq.s32.totalorder %s29, 1
      %p288 = por %p286, %p287
      %p290 = scmp.ne.s32.totalorder %s273, %s289
      %p291 = scmp.eq.s32.totalorder %s29, 0
      %p292 = por %p290, %p291
      %p293 = scmp.le.s32.totalorder 1, %s23
      %p294 = scmp.lt.s32.totalorder %s23, 3
      %p295 = pnand %p293, %p294
      %p296 = pneg %p295
      // Predicated region
      $region9: #{tpu_custom_call.1} parent=5 // pred_check
        _
      $region10: #{tpu_custom_call.1} parent=5 // pred_check_branch
        %298 = sbr.rel (%p295) target = $region12
      $region11: #{tpu_custom_call.1} parent=5 // pred_region
        %s299 = ssub.s32 %s23, 1
        // Predicated region
        $region13: #{tpu_custom_call.1} parent=11 // pred_check
          %p300 = pneg %p70
        $region14: #{tpu_custom_call.1} parent=11 // pred_check_branch
          %302 = sbr.rel (%p300) target = $region16
        $region15: #{tpu_custom_call.1} parent=11 // pred_region
          _
        $region16: #{tpu_custom_call.1} parent=11 // pred_fallthru
          _
        // Predicated region
        $region17: #{tpu_custom_call.1} parent=11 // pred_check
          %p303 = pneg %p91
        $region18: #{tpu_custom_call.1} parent=11 // pred_check_branch
          %305 = sbr.rel (%p303) target = $region20
        $region19: #{tpu_custom_call.1} parent=11 // pred_region
          _
        $region20: #{tpu_custom_call.1} parent=11 // pred_fallthru
          _
        // Predicated region
        $region21: #{tpu_custom_call.1} parent=11 // pred_check
          %p306 = pneg %p112
        $region22: #{tpu_custom_call.1} parent=11 // pred_check_branch
          %308 = sbr.rel (%p306) target = $region24
        $region23: #{tpu_custom_call.1} parent=11 // pred_region
          _
        $region24: #{tpu_custom_call.1} parent=11 // pred_fallthru
          _
        // Predicated region
        $region25: #{tpu_custom_call.1} parent=11 // pred_check
          %p309 = pneg %p133
        $region26: #{tpu_custom_call.1} parent=11 // pred_check_branch
          %311 = sbr.rel (%p309) target = $region28
        $region27: #{tpu_custom_call.1} parent=11 // pred_region
          _
        $region28: #{tpu_custom_call.1} parent=11 // pred_fallthru
          _
        // Predicated region
        $region29: #{tpu_custom_call.1} parent=11 // pred_check
          %p312 = pneg %p154
        $region30: #{tpu_custom_call.1} parent=11 // pred_check_branch
          %314 = sbr.rel (%p312) target = $region32
        $region31: #{tpu_custom_call.1} parent=11 // pred_region
          _
        $region32: #{tpu_custom_call.1} parent=11 // pred_fallthru
          _
        // Predicated region
        $region33: #{tpu_custom_call.1} parent=11 // pred_check
          %p315 = pneg %p175
        $region34: #{tpu_custom_call.1} parent=11 // pred_check_branch
          %317 = sbr.rel (%p315) target = $region36
        $region35: #{tpu_custom_call.1} parent=11 // pred_region
          _
        $region36: #{tpu_custom_call.1} parent=11 // pred_fallthru
          _
        // Predicated region
        $region37: #{tpu_custom_call.1} parent=11 // pred_check
          %p318 = pneg %p196
        $region38: #{tpu_custom_call.1} parent=11 // pred_check_branch
          %320 = sbr.rel (%p318) target = $region40
        $region39: #{tpu_custom_call.1} parent=11 // pred_region
          _
        $region40: #{tpu_custom_call.1} parent=11 // pred_fallthru
          _
        // Predicated region
        $region41: #{tpu_custom_call.1} parent=11 // pred_check
          %p321 = pneg %p217
        $region42: #{tpu_custom_call.1} parent=11 // pred_check_branch
          %323 = sbr.rel (%p321) target = $region44
        $region43: #{tpu_custom_call.1} parent=11 // pred_region
          _
        $region44: #{tpu_custom_call.1} parent=11 // pred_fallthru
          _
        // Predicated region
        $region45: #{tpu_custom_call.1} parent=11 // pred_check
          %p324 = pneg %p238
        $region46: #{tpu_custom_call.1} parent=11 // pred_check_branch
          %326 = sbr.rel (%p324) target = $region48
        $region47: #{tpu_custom_call.1} parent=11 // pred_region
          _
        $region48: #{tpu_custom_call.1} parent=11 // pred_fallthru
          _
        // Predicated region
        $region49: #{tpu_custom_call.1} parent=11 // pred_check
          %p327 = pneg %p259
        $region50: #{tpu_custom_call.1} parent=11 // pred_check_branch
          %329 = sbr.rel (%p327) target = $region52
        $region51: #{tpu_custom_call.1} parent=11 // pred_region
          _
        $region52: #{tpu_custom_call.1} parent=11 // pred_fallthru
          _
      $region12: #{tpu_custom_call.1} parent=5 // pred_fallthru
        _
      %p330 = scmp.lt.s32.totalorder %s23, 2
      // Predicated region
      $region53: #{tpu_custom_call.1} parent=5 // pred_check
        %p331 = pneg %p330
      $region54: #{tpu_custom_call.1} parent=5 // pred_check_branch
        %333 = sbr.rel (%p331) target = $region56
      $region55: #{tpu_custom_call.1} parent=5 // pred_region
        // Predicated region
        $region57: #{tpu_custom_call.1} parent=55 // pred_check
          %p334 = pneg %p43
        $region58: #{tpu_custom_call.1} parent=55 // pred_check_branch
          %336 = sbr.rel (%p334) target = $region60
        $region59: #{tpu_custom_call.1} parent=55 // pred_region
          %s337 = sand.u32 %s33, 1
          %s338 = scalar_lea.sflag [#allocation3], %s337
          %s339 = sand.u32 %s33, 1
          %s340 = smul.addr %s339, 256
          %s341 = scalar_lea.vmem [#allocation2], %s340
          %s342 = smul.u32 32, %s23
          %344 = vsyncadd %s338, 0
          %s345 = smul.addr %s342, 8
          %s346 = scalar_lea.hbm %s0, %s345
          %s347 = sshll.u32 %s346, 4
          %s348 = int_to_ptr.hbm [resolvable:$true] %s347
          %s349 = sshll.u32 %s341, 4
          %s350 = int_to_ptr.vmem [resolvable:$true] %s349
          %355 = dma.hbm_to_vmem [thread:$0]  %s348, 4096, %s350, %s338, 128, 128, 8
        $region60: #{tpu_custom_call.1} parent=55 // pred_fallthru
          _
      $region56: #{tpu_custom_call.1} parent=5 // pred_fallthru
        _
      %p356 = scmp.le.s32.totalorder 1, %s23
      %p357 = scmp.lt.s32.totalorder %s23, 3
      %p358 = pnand %p356, %p357
      %p359 = pneg %p358
      // Predicated region
      $region61: #{tpu_custom_call.1} parent=5 // pred_check
        _
      $region62: #{tpu_custom_call.1} parent=5 // pred_check_branch
        %361 = sbr.rel (%p358) target = $region64
      $region63: #{tpu_custom_call.1} parent=5 // pred_region
        %s362 = ssub.s32 %s23, 1
        %s363 = sand.u32 %s36, 1
        %s364 = scalar_lea.sflag [#allocation3], %s363
        %s365 = sand.u32 %s36, 1
        %s366 = smul.addr %s365, 256
        %s367 = scalar_lea.vmem [#allocation2], %s366
        // Predicated region
        $region65: #{tpu_custom_call.1} parent=63 // pred_check
          %p368 = pneg %p49
        $region66: #{tpu_custom_call.1} parent=63 // pred_check_branch
          %370 = sbr.rel (%p368) target = $region68
        $region67: #{tpu_custom_call.1} parent=63 // pred_region
          %372 = dma.done %s364, 4096
        $region68: #{tpu_custom_call.1} parent=63 // pred_fallthru
          _
        %s373 = sand.u32 %s36, 1
        %s374 = scalar_lea.sflag [#allocation3], %s373
        %s375 = sand.u32 %s36, 1
        %s376 = smul.addr %s375, 256
        %s377 = scalar_lea.vmem [#allocation2], %s376
        %p378 = pneg %p49
        %p379 = pneg %p46
        %p380 = pneg %p70
        %p381 = pneg %p67
        %p382 = pneg %p91
        %p383 = pneg %p88
        %p384 = pneg %p112
        %p385 = pneg %p109
        %p386 = pneg %p133
        %p387 = pneg %p130
        %p388 = pneg %p154
        %p389 = pneg %p151
        %p390 = pneg %p175
        %p391 = pneg %p172
        %p392 = pneg %p196
        %p393 = pneg %p193
        %p394 = pneg %p217
        %p395 = pneg %p214
        %p396 = pneg %p238
        %p397 = pneg %p235
        %p398 = pneg %p259
        %p399 = pneg %p256
        %p400 = pneg %p285
        %p401 = pneg %p282
        %s402 = sand.u32 %s272, 1
        %s403 = scalar_lea.sflag [#allocation4], %s402
        %s404 = sand.u32 %s272, 1
        %s405 = smul.addr %s404, 256
        %s406 = scalar_lea.vmem [#allocation5], %s405
        %s407 = smul.u32 32, %s28
        %s408 = smul.u32 32, %s28
        %v410 = vld [vmem:[%s367] sm:$0xff]
        %v411 = vld [vmem:[%s367 + $0x8] sm:$0xff]
        %v412 = vld [vmem:[%s367 + $0x10] sm:$0xff]
        %v413 = vld [vmem:[%s367 + $0x18] sm:$0xff]
        %v414 = vld [vmem:[%s367 + $0x20] sm:$0xff]
        %v415 = vld [vmem:[%s367 + $0x28] sm:$0xff]
        %v416 = vld [vmem:[%s367 + $0x30] sm:$0xff]
        %v417 = vld [vmem:[%s367 + $0x38] sm:$0xff]
        %v418 = vld [vmem:[%s367 + $0x40] sm:$0xff]
        %v419 = vld [vmem:[%s367 + $0x48] sm:$0xff]
        %v420 = vld [vmem:[%s367 + $0x50] sm:$0xff]
        %v421 = vld [vmem:[%s367 + $0x58] sm:$0xff]
        %v422 = vld [vmem:[%s367 + $0x60] sm:$0xff]
        %v423 = vld [vmem:[%s367 + $0x68] sm:$0xff]
        %v424 = vld [vmem:[%s367 + $0x70] sm:$0xff]
        %v425 = vld [vmem:[%s367 + $0x78] sm:$0xff]
        %v426 = vld [vmem:[%s367 + $0x80] sm:$0xff]
        %v427 = vld [vmem:[%s367 + $0x88] sm:$0xff]
        %v428 = vld [vmem:[%s367 + $0x90] sm:$0xff]
        %v429 = vld [vmem:[%s367 + $0x98] sm:$0xff]
        %v430 = vld [vmem:[%s367 + $0xa0] sm:$0xff]
        %v431 = vld [vmem:[%s367 + $0xa8] sm:$0xff]
        %v432 = vld [vmem:[%s367 + $0xb0] sm:$0xff]
        %v433 = vld [vmem:[%s367 + $0xb8] sm:$0xff]
        %v434 = vld [vmem:[%s367 + $0xc0] sm:$0xff]
        %v435 = vld [vmem:[%s367 + $0xc8] sm:$0xff]
        %v436 = vld [vmem:[%s367 + $0xd0] sm:$0xff]
        %v437 = vld [vmem:[%s367 + $0xd8] sm:$0xff]
        %v438 = vld [vmem:[%s367 + $0xe0] sm:$0xff]
        %v439 = vld [vmem:[%s367 + $0xe8] sm:$0xff]
        %v440 = vld [vmem:[%s367 + $0xf0] sm:$0xff]
        %v441 = vld [vmem:[%s367 + $0xf8] sm:$0xff]
        %v442 = vpack.c.bf16 %v411, %v410
        %v443 = vpack.c.bf16 %v413, %v412
        %v444 = vpack.c.bf16 %v415, %v414
        %v445 = vpack.c.bf16 %v417, %v416
        %v446 = vpack.c.bf16 %v419, %v418
        %v447 = vpack.c.bf16 %v421, %v420
        %v448 = vpack.c.bf16 %v423, %v422
        %v449 = vpack.c.bf16 %v425, %v424
        %v450 = vpack.c.bf16 %v427, %v426
        %v451 = vpack.c.bf16 %v429, %v428
        %v452 = vpack.c.bf16 %v431, %v430
        %v453 = vpack.c.bf16 %v433, %v432
        %v454 = vpack.c.bf16 %v435, %v434
        %v455 = vpack.c.bf16 %v437, %v436
        %v456 = vpack.c.bf16 %v439, %v438
        %v457 = vpack.c.bf16 %v441, %v440
        %v458 = vld [vmem:[%s1] sm:$0xf]
        %v459 = vld [vmem:[%s1 + $0x4] sm:$0xf]
        %v460 = vld [vmem:[%s1 + $0x8] sm:$0xf]
        %v461 = vld [vmem:[%s1 + $0xc] sm:$0xf]
        %v462 = vld [vmem:[%s1 + $0x10] sm:$0xf]
        %v463 = vld [vmem:[%s1 + $0x14] sm:$0xf]
        %v464 = vld [vmem:[%s1 + $0x18] sm:$0xf]
        %v465 = vld [vmem:[%s1 + $0x1c] sm:$0xf]
        %v466 = vld [vmem:[%s1 + $0x20] sm:$0xf]
        %v467 = vld [vmem:[%s1 + $0x24] sm:$0xf]
        %v468 = vld [vmem:[%s1 + $0x28] sm:$0xf]
        %v469 = vld [vmem:[%s1 + $0x2c] sm:$0xf]
        %v470 = vld [vmem:[%s1 + $0x30] sm:$0xf]
        %v471 = vld [vmem:[%s1 + $0x34] sm:$0xf]
        %v472 = vld [vmem:[%s1 + $0x38] sm:$0xf]
        %v473 = vld [vmem:[%s1 + $0x3c] sm:$0xf]
        %v474 = vld [vmem:[%s2] sm:$0x1]
        %v476 = vperm.slane %v474, 0
        %v494 = vunpack.c.l.b16 %v458
        %v495 = vunpack.c.l.b16 %v459
        %v496 = vunpack.c.l.b16 %v460
        %v497 = vunpack.c.l.b16 %v461
        %v498 = vunpack.c.l.b16 %v462
        %v499 = vunpack.c.l.b16 %v463
        %v500 = vunpack.c.l.b16 %v464
        %v501 = vunpack.c.l.b16 %v465
        %v502 = vunpack.c.l.b16 %v466
        %v503 = vunpack.c.l.b16 %v467
        %v504 = vunpack.c.l.b16 %v468
        %v505 = vunpack.c.l.b16 %v469
        %v506 = vunpack.c.l.b16 %v470
        %v507 = vunpack.c.l.b16 %v471
        %v508 = vunpack.c.l.b16 %v472
        %v509 = vunpack.c.l.b16 %v473
        %v510 = vpack.c.b16 %v495, %v494
        %v511 = vpack.c.b16 %v497, %v496
        %v512 = vpack.c.b16 %v499, %v498
        %v513 = vpack.c.b16 %v501, %v500
        %v514 = vpack.c.b16 %v503, %v502
        %v515 = vpack.c.b16 %v505, %v504
        %v516 = vpack.c.b16 %v507, %v506
        %v517 = vpack.c.b16 %v509, %v508
        %526 = vmatpush.bf16.msra.mxu0 %v517
        %527 = vmatpush.bf16.msra.mxu0 %v516
        %528 = vmatpush.bf16.msra.mxu0 %v515
        %529 = vmatpush.bf16.msra.mxu0 %v514
        %530 = vmatpush.bf16.msra.mxu0 %v513
        %531 = vmatpush.bf16.msra.mxu0 %v512
        %532 = vmatpush.bf16.msra.mxu0 %v511
        %533 = vmatpush.bf16.msra.mxu0 %v510
        %534 = vmatmul.bf16.gmra.mxu0 %v442
        %v535 = vpop.f32.mrf.mxu0
        %v536 = vadd.f32 %v476, %v535
        %v537 = vpop.f32.mrf.mxu0
        %v538 = vadd.f32 %v476, %v537
        %539 = vmatmul.bf16.gmra.mxu0 %v443
        %v540 = vpop.f32.mrf.mxu0
        %v541 = vadd.f32 %v476, %v540
        %v542 = vpop.f32.mrf.mxu0
        %v543 = vadd.f32 %v476, %v542
        %544 = vmatmul.bf16.gmra.mxu0 %v444
        %v545 = vpop.f32.mrf.mxu0
        %v546 = vadd.f32 %v476, %v545
        %v547 = vpop.f32.mrf.mxu0
        %v548 = vadd.f32 %v476, %v547
        %549 = vmatmul.bf16.gmra.mxu0 %v445
        %v550 = vpop.f32.mrf.mxu0
        %v551 = vadd.f32 %v476, %v550
        %v552 = vpop.f32.mrf.mxu0
        %v553 = vadd.f32 %v476, %v552
        %554 = vmatmul.bf16.gmra.mxu0 %v446
        %v555 = vpop.f32.mrf.mxu0
        %v556 = vadd.f32 %v476, %v555
        %v557 = vpop.f32.mrf.mxu0
        %v558 = vadd.f32 %v476, %v557
        %559 = vmatmul.bf16.gmra.mxu0 %v447
        %v560 = vpop.f32.mrf.mxu0
        %v561 = vadd.f32 %v476, %v560
        %v562 = vpop.f32.mrf.mxu0
        %v563 = vadd.f32 %v476, %v562
        %564 = vmatmul.bf16.gmra.mxu0 %v448
        %v565 = vpop.f32.mrf.mxu0
        %v566 = vadd.f32 %v476, %v565
        %v567 = vpop.f32.mrf.mxu0
        %v568 = vadd.f32 %v476, %v567
        %569 = vmatmul.bf16.gmra.mxu0 %v449
        %v570 = vpop.f32.mrf.mxu0
        %v571 = vadd.f32 %v476, %v570
        %v572 = vpop.f32.mrf.mxu0
        %v573 = vadd.f32 %v476, %v572
        %574 = vmatmul.bf16.gmra.mxu0 %v450
        %v575 = vpop.f32.mrf.mxu0
        %v576 = vadd.f32 %v476, %v575
        %v577 = vpop.f32.mrf.mxu0
        %v578 = vadd.f32 %v476, %v577
        %579 = vmatmul.bf16.gmra.mxu0 %v451
        %v580 = vpop.f32.mrf.mxu0
        %v581 = vadd.f32 %v476, %v580
        %v582 = vpop.f32.mrf.mxu0
        %v583 = vadd.f32 %v476, %v582
        %584 = vmatmul.bf16.gmra.mxu0 %v452
        %v585 = vpop.f32.mrf.mxu0
        %v586 = vadd.f32 %v476, %v585
        %v587 = vpop.f32.mrf.mxu0
        %v588 = vadd.f32 %v476, %v587
        %589 = vmatmul.bf16.gmra.mxu0 %v453
        %v590 = vpop.f32.mrf.mxu0
        %v591 = vadd.f32 %v476, %v590
        %v592 = vpop.f32.mrf.mxu0
        %v593 = vadd.f32 %v476, %v592
        %594 = vmatmul.bf16.gmra.mxu0 %v454
        %v595 = vpop.f32.mrf.mxu0
        %v596 = vadd.f32 %v476, %v595
        %v597 = vpop.f32.mrf.mxu0
        %v598 = vadd.f32 %v476, %v597
        %599 = vmatmul.bf16.gmra.mxu0 %v455
        %v600 = vpop.f32.mrf.mxu0
        %v601 = vadd.f32 %v476, %v600
        %v602 = vpop.f32.mrf.mxu0
        %v603 = vadd.f32 %v476, %v602
        %604 = vmatmul.bf16.gmra.mxu0 %v456
        %v605 = vpop.f32.mrf.mxu0
        %v606 = vadd.f32 %v476, %v605
        %v607 = vpop.f32.mrf.mxu0
        %v608 = vadd.f32 %v476, %v607
        %609 = vmatmul.bf16.gmra.mxu0 %v457
        %v610 = vpop.f32.mrf.mxu0
        %v611 = vadd.f32 %v476, %v610
        %v612 = vpop.f32.mrf.mxu0
        %v613 = vadd.f32 %v476, %v612
        %614 = vdwg.mxu0
        %v615 = vmax.f32 %v536, 0.0
        %v616 = vmax.f32 %v538, 0.0
        %v617 = vmax.f32 %v541, 0.0
        %v618 = vmax.f32 %v543, 0.0
        %v619 = vmax.f32 %v546, 0.0
        %v620 = vmax.f32 %v548, 0.0
        %v621 = vmax.f32 %v551, 0.0
        %v622 = vmax.f32 %v553, 0.0
        %v623 = vmax.f32 %v556, 0.0
        %v624 = vmax.f32 %v558, 0.0
        %v625 = vmax.f32 %v561, 0.0
        %v626 = vmax.f32 %v563, 0.0
        %v627 = vmax.f32 %v566, 0.0
        %v628 = vmax.f32 %v568, 0.0
        %v629 = vmax.f32 %v571, 0.0
        %v630 = vmax.f32 %v573, 0.0
        %v631 = vmax.f32 %v576, 0.0
        %v632 = vmax.f32 %v578, 0.0
        %v633 = vmax.f32 %v581, 0.0
        %v634 = vmax.f32 %v583, 0.0
        %v635 = vmax.f32 %v586, 0.0
        %v636 = vmax.f32 %v588, 0.0
        %v637 = vmax.f32 %v591, 0.0
        %v638 = vmax.f32 %v593, 0.0
        %v639 = vmax.f32 %v596, 0.0
        %v640 = vmax.f32 %v598, 0.0
        %v641 = vmax.f32 %v601, 0.0
        %v642 = vmax.f32 %v603, 0.0
        %v643 = vmax.f32 %v606, 0.0
        %v644 = vmax.f32 %v608, 0.0
        %v645 = vmax.f32 %v611, 0.0
        %v646 = vmax.f32 %v613, 0.0
        %v647 = vpack.c.bf16 %v616, %v615
        %v648 = vpack.c.bf16 %v618, %v617
        %v649 = vpack.c.bf16 %v620, %v619
        %v650 = vpack.c.bf16 %v622, %v621
        %v651 = vpack.c.bf16 %v624, %v623
        %v652 = vpack.c.bf16 %v626, %v625
        %v653 = vpack.c.bf16 %v628, %v627
        %v654 = vpack.c.bf16 %v630, %v629
        %v655 = vpack.c.bf16 %v632, %v631
        %v656 = vpack.c.bf16 %v634, %v633
        %v657 = vpack.c.bf16 %v636, %v635
        %v658 = vpack.c.bf16 %v638, %v637
        %v659 = vpack.c.bf16 %v640, %v639
        %v660 = vpack.c.bf16 %v642, %v641
        %v661 = vpack.c.bf16 %v644, %v643
        %v662 = vpack.c.bf16 %v646, %v645
        %v663 = vld [vmem:[%s3] sm:$0xf]
        %v664 = vld [vmem:[%s3 + $0x4] sm:$0xf]
        %v665 = vld [vmem:[%s3 + $0x8] sm:$0xf]
        %v666 = vld [vmem:[%s3 + $0xc] sm:$0xf]
        %v667 = vld [vmem:[%s3 + $0x10] sm:$0xf]
        %v668 = vld [vmem:[%s3 + $0x14] sm:$0xf]
        %v669 = vld [vmem:[%s3 + $0x18] sm:$0xf]
        %v670 = vld [vmem:[%s3 + $0x1c] sm:$0xf]
        %v671 = vld [vmem:[%s4] sm:$0x1]
        %v673 = vperm.slane %v671, 0
        %v683 = vunpack.c.l.b16 %v663
        %v684 = vunpack.c.l.b16 %v664
        %v685 = vunpack.c.l.b16 %v665
        %v686 = vunpack.c.l.b16 %v666
        %v687 = vunpack.c.l.b16 %v667
        %v688 = vunpack.c.l.b16 %v668
        %v689 = vunpack.c.l.b16 %v669
        %v690 = vunpack.c.l.b16 %v670
        %v691 = vpack.c.b16 %v684, %v683
        %v692 = vpack.c.b16 %v686, %v685
        %v693 = vpack.c.b16 %v688, %v687
        %v694 = vpack.c.b16 %v690, %v689
        %vm699 = vcmask 523264
        %v701 = vsel %vm699, %v647, 0
        %v704 = vsel %vm699, %v648, 0
        %v707 = vsel %vm699, %v649, 0
        %v710 = vsel %vm699, %v650, 0
        %v713 = vsel %vm699, %v651, 0
        %v716 = vsel %vm699, %v652, 0
        %v719 = vsel %vm699, %v653, 0
        %v722 = vsel %vm699, %v654, 0
        %v725 = vsel %vm699, %v655, 0
        %v728 = vsel %vm699, %v656, 0
        %v731 = vsel %vm699, %v657, 0
        %v734 = vsel %vm699, %v658, 0
        %v737 = vsel %vm699, %v659, 0
        %v740 = vsel %vm699, %v660, 0
        %v743 = vsel %vm699, %v661, 0
        %v746 = vsel %vm699, %v662, 0
        %748 = vmatpush.bf16.msra.mxu0 0
        %749 = vmatpush.bf16.msra.mxu0 0
        %750 = vmatpush.bf16.msra.mxu0 0
        %751 = vmatpush.bf16.msra.mxu0 0
        %752 = vmatpush.bf16.msra.mxu0 %v694
        %753 = vmatpush.bf16.msra.mxu0 %v693
        %754 = vmatpush.bf16.msra.mxu0 %v692
        %755 = vmatpush.bf16.msra.mxu0 %v691
        %756 = vmatmul.bf16.gmra.mxu0 %v701
        %v757 = vpop.f32.mrf.mxu0
        %v758 = vadd.f32 %v673, %v757
        %v759 = vpop.f32.mrf.mxu0
        %v760 = vadd.f32 %v673, %v759
        %761 = vmatmul.bf16.gmra.mxu0 %v704
        %v762 = vpop.f32.mrf.mxu0
        %v763 = vadd.f32 %v673, %v762
        %v764 = vpop.f32.mrf.mxu0
        %v765 = vadd.f32 %v673, %v764
        %766 = vmatmul.bf16.gmra.mxu0 %v707
        %v767 = vpop.f32.mrf.mxu0
        %v768 = vadd.f32 %v673, %v767
        %v769 = vpop.f32.mrf.mxu0
        %v770 = vadd.f32 %v673, %v769
        %771 = vmatmul.bf16.gmra.mxu0 %v710
        %v772 = vpop.f32.mrf.mxu0
        %v773 = vadd.f32 %v673, %v772
        %v774 = vpop.f32.mrf.mxu0
        %v775 = vadd.f32 %v673, %v774
        %776 = vmatmul.bf16.gmra.mxu0 %v713
        %v777 = vpop.f32.mrf.mxu0
        %v778 = vadd.f32 %v673, %v777
        %v779 = vpop.f32.mrf.mxu0
        %v780 = vadd.f32 %v673, %v779
        %781 = vmatmul.bf16.gmra.mxu0 %v716
        %v782 = vpop.f32.mrf.mxu0
        %v783 = vadd.f32 %v673, %v782
        %v784 = vpop.f32.mrf.mxu0
        %v785 = vadd.f32 %v673, %v784
        %786 = vmatmul.bf16.gmra.mxu0 %v719
        %v787 = vpop.f32.mrf.mxu0
        %v788 = vadd.f32 %v673, %v787
        %v789 = vpop.f32.mrf.mxu0
        %v790 = vadd.f32 %v673, %v789
        %791 = vmatmul.bf16.gmra.mxu0 %v722
        %v792 = vpop.f32.mrf.mxu0
        %v793 = vadd.f32 %v673, %v792
        %v794 = vpop.f32.mrf.mxu0
        %v795 = vadd.f32 %v673, %v794
        %796 = vmatmul.bf16.gmra.mxu0 %v725
        %v797 = vpop.f32.mrf.mxu0
        %v798 = vadd.f32 %v673, %v797
        %v799 = vpop.f32.mrf.mxu0
        %v800 = vadd.f32 %v673, %v799
        %801 = vmatmul.bf16.gmra.mxu0 %v728
        %v802 = vpop.f32.mrf.mxu0
        %v803 = vadd.f32 %v673, %v802
        %v804 = vpop.f32.mrf.mxu0
        %v805 = vadd.f32 %v673, %v804
        %806 = vmatmul.bf16.gmra.mxu0 %v731
        %v807 = vpop.f32.mrf.mxu0
        %v808 = vadd.f32 %v673, %v807
        %v809 = vpop.f32.mrf.mxu0
        %v810 = vadd.f32 %v673, %v809
        %811 = vmatmul.bf16.gmra.mxu0 %v734
        %v812 = vpop.f32.mrf.mxu0
        %v813 = vadd.f32 %v673, %v812
        %v814 = vpop.f32.mrf.mxu0
        %v815 = vadd.f32 %v673, %v814
        %816 = vmatmul.bf16.gmra.mxu0 %v737
        %v817 = vpop.f32.mrf.mxu0
        %v818 = vadd.f32 %v673, %v817
        %v819 = vpop.f32.mrf.mxu0
        %v820 = vadd.f32 %v673, %v819
        %821 = vmatmul.bf16.gmra.mxu0 %v740
        %v822 = vpop.f32.mrf.mxu0
        %v823 = vadd.f32 %v673, %v822
        %v824 = vpop.f32.mrf.mxu0
        %v825 = vadd.f32 %v673, %v824
        %826 = vmatmul.bf16.gmra.mxu0 %v743
        %v827 = vpop.f32.mrf.mxu0
        %v828 = vadd.f32 %v673, %v827
        %v829 = vpop.f32.mrf.mxu0
        %v830 = vadd.f32 %v673, %v829
        %831 = vmatmul.bf16.gmra.mxu0 %v746
        %v832 = vpop.f32.mrf.mxu0
        %v833 = vadd.f32 %v673, %v832
        %v834 = vpop.f32.mrf.mxu0
        %v835 = vadd.f32 %v673, %v834
        %836 = vdwg.mxu0
        %v837 = vmax.f32 %v758, 0.0
        %v838 = vmax.f32 %v760, 0.0
        %v839 = vmax.f32 %v763, 0.0
        %v840 = vmax.f32 %v765, 0.0
        %v841 = vmax.f32 %v768, 0.0
        %v842 = vmax.f32 %v770, 0.0
        %v843 = vmax.f32 %v773, 0.0
        %v844 = vmax.f32 %v775, 0.0
        %v845 = vmax.f32 %v778, 0.0
        %v846 = vmax.f32 %v780, 0.0
        %v847 = vmax.f32 %v783, 0.0
        %v848 = vmax.f32 %v785, 0.0
        %v849 = vmax.f32 %v788, 0.0
        %v850 = vmax.f32 %v790, 0.0
        %v851 = vmax.f32 %v793, 0.0
        %v852 = vmax.f32 %v795, 0.0
        %v853 = vmax.f32 %v798, 0.0
        %v854 = vmax.f32 %v800, 0.0
        %v855 = vmax.f32 %v803, 0.0
        %v856 = vmax.f32 %v805, 0.0
        %v857 = vmax.f32 %v808, 0.0
        %v858 = vmax.f32 %v810, 0.0
        %v859 = vmax.f32 %v813, 0.0
        %v860 = vmax.f32 %v815, 0.0
        %v861 = vmax.f32 %v818, 0.0
        %v862 = vmax.f32 %v820, 0.0
        %v863 = vmax.f32 %v823, 0.0
        %v864 = vmax.f32 %v825, 0.0
        %v865 = vmax.f32 %v828, 0.0
        %v866 = vmax.f32 %v830, 0.0
        %v867 = vmax.f32 %v833, 0.0
        %v868 = vmax.f32 %v835, 0.0
        %v869 = vpack.c.bf16 %v838, %v837
        %v870 = vpack.c.bf16 %v840, %v839
        %v871 = vpack.c.bf16 %v842, %v841
        %v872 = vpack.c.bf16 %v844, %v843
        %v873 = vpack.c.bf16 %v846, %v845
        %v874 = vpack.c.bf16 %v848, %v847
        %v875 = vpack.c.bf16 %v850, %v849
        %v876 = vpack.c.bf16 %v852, %v851
        %v877 = vpack.c.bf16 %v854, %v853
        %v878 = vpack.c.bf16 %v856, %v855
        %v879 = vpack.c.bf16 %v858, %v857
        %v880 = vpack.c.bf16 %v860, %v859
        %v881 = vpack.c.bf16 %v862, %v861
        %v882 = vpack.c.bf16 %v864, %v863
        %v883 = vpack.c.bf16 %v866, %v865
        %v884 = vpack.c.bf16 %v868, %v867
        %v885 = vld [vmem:[%s5] sm:$0xf]
        %v886 = vld [vmem:[%s5 + $0x4] sm:$0xf]
        %v887 = vld [vmem:[%s5 + $0x8] sm:$0xf]
        %v888 = vld [vmem:[%s5 + $0xc] sm:$0xf]
        %v889 = vld [vmem:[%s5 + $0x10] sm:$0xf]
        %v890 = vld [vmem:[%s5 + $0x14] sm:$0xf]
        %v891 = vld [vmem:[%s5 + $0x18] sm:$0xf]
        %v892 = vld [vmem:[%s5 + $0x1c] sm:$0xf]
        %v893 = vld [vmem:[%s6] sm:$0x1]
        %v895 = vperm.slane %v893, 0
        %v905 = vunpack.c.l.b16 %v885
        %v906 = vunpack.c.l.b16 %v886
        %v907 = vunpack.c.l.b16 %v887
        %v908 = vunpack.c.l.b16 %v888
        %v909 = vunpack.c.l.b16 %v889
        %v910 = vunpack.c.l.b16 %v890
        %v911 = vunpack.c.l.b16 %v891
        %v912 = vunpack.c.l.b16 %v892
        %v913 = vpack.c.b16 %v906, %v905
        %v914 = vpack.c.b16 %v908, %v907
        %v915 = vpack.c.b16 %v910, %v909
        %v916 = vpack.c.b16 %v912, %v911
        %v922 = vsel %vm699, %v869, 0
        %v925 = vsel %vm699, %v870, 0
        %v928 = vsel %vm699, %v871, 0
        %v931 = vsel %vm699, %v872, 0
        %v934 = vsel %vm699, %v873, 0
        %v937 = vsel %vm699, %v874, 0
        %v940 = vsel %vm699, %v875, 0
        %v943 = vsel %vm699, %v876, 0
        %v946 = vsel %vm699, %v877, 0
        %v949 = vsel %vm699, %v878, 0
        %v952 = vsel %vm699, %v879, 0
        %v955 = vsel %vm699, %v880, 0
        %v958 = vsel %vm699, %v881, 0
        %v961 = vsel %vm699, %v882, 0
        %v964 = vsel %vm699, %v883, 0
        %v967 = vsel %vm699, %v884, 0
        %969 = vmatpush.bf16.msra.mxu0 0
        %970 = vmatpush.bf16.msra.mxu0 0
        %971 = vmatpush.bf16.msra.mxu0 0
        %972 = vmatpush.bf16.msra.mxu0 0
        %973 = vmatpush.bf16.msra.mxu0 %v916
        %974 = vmatpush.bf16.msra.mxu0 %v915
        %975 = vmatpush.bf16.msra.mxu0 %v914
        %976 = vmatpush.bf16.msra.mxu0 %v913
        %977 = vmatmul.bf16.gmra.mxu0 %v922
        %v978 = vpop.f32.mrf.mxu0
        %v979 = vadd.f32 %v895, %v978
        %v980 = vpop.f32.mrf.mxu0
        %v981 = vadd.f32 %v895, %v980
        %982 = vmatmul.bf16.gmra.mxu0 %v925
        %v983 = vpop.f32.mrf.mxu0
        %v984 = vadd.f32 %v895, %v983
        %v985 = vpop.f32.mrf.mxu0
        %v986 = vadd.f32 %v895, %v985
        %987 = vmatmul.bf16.gmra.mxu0 %v928
        %v988 = vpop.f32.mrf.mxu0
        %v989 = vadd.f32 %v895, %v988
        %v990 = vpop.f32.mrf.mxu0
        %v991 = vadd.f32 %v895, %v990
        %992 = vmatmul.bf16.gmra.mxu0 %v931
        %v993 = vpop.f32.mrf.mxu0
        %v994 = vadd.f32 %v895, %v993
        %v995 = vpop.f32.mrf.mxu0
        %v996 = vadd.f32 %v895, %v995
        %997 = vmatmul.bf16.gmra.mxu0 %v934
        %v998 = vpop.f32.mrf.mxu0
        %v999 = vadd.f32 %v895, %v998
        %v1000 = vpop.f32.mrf.mxu0
        %v1001 = vadd.f32 %v895, %v1000
        %1002 = vmatmul.bf16.gmra.mxu0 %v937
        %v1003 = vpop.f32.mrf.mxu0
        %v1004 = vadd.f32 %v895, %v1003
        %v1005 = vpop.f32.mrf.mxu0
        %v1006 = vadd.f32 %v895, %v1005
        %1007 = vmatmul.bf16.gmra.mxu0 %v940
        %v1008 = vpop.f32.mrf.mxu0
        %v1009 = vadd.f32 %v895, %v1008
        %v1010 = vpop.f32.mrf.mxu0
        %v1011 = vadd.f32 %v895, %v1010
        %1012 = vmatmul.bf16.gmra.mxu0 %v943
        %v1013 = vpop.f32.mrf.mxu0
        %v1014 = vadd.f32 %v895, %v1013
        %v1015 = vpop.f32.mrf.mxu0
        %v1016 = vadd.f32 %v895, %v1015
        %1017 = vmatmul.bf16.gmra.mxu0 %v946
        %v1018 = vpop.f32.mrf.mxu0
        %v1019 = vadd.f32 %v895, %v1018
        %v1020 = vpop.f32.mrf.mxu0
        %v1021 = vadd.f32 %v895, %v1020
        %1022 = vmatmul.bf16.gmra.mxu0 %v949
        %v1023 = vpop.f32.mrf.mxu0
        %v1024 = vadd.f32 %v895, %v1023
        %v1025 = vpop.f32.mrf.mxu0
        %v1026 = vadd.f32 %v895, %v1025
        %1027 = vmatmul.bf16.gmra.mxu0 %v952
        %v1028 = vpop.f32.mrf.mxu0
        %v1029 = vadd.f32 %v895, %v1028
        %v1030 = vpop.f32.mrf.mxu0
        %v1031 = vadd.f32 %v895, %v1030
        %1032 = vmatmul.bf16.gmra.mxu0 %v955
        %v1033 = vpop.f32.mrf.mxu0
        %v1034 = vadd.f32 %v895, %v1033
        %v1035 = vpop.f32.mrf.mxu0
        %v1036 = vadd.f32 %v895, %v1035
        %1037 = vmatmul.bf16.gmra.mxu0 %v958
        %v1038 = vpop.f32.mrf.mxu0
        %v1039 = vadd.f32 %v895, %v1038
        %v1040 = vpop.f32.mrf.mxu0
        %v1041 = vadd.f32 %v895, %v1040
        %1042 = vmatmul.bf16.gmra.mxu0 %v961
        %v1043 = vpop.f32.mrf.mxu0
        %v1044 = vadd.f32 %v895, %v1043
        %v1045 = vpop.f32.mrf.mxu0
        %v1046 = vadd.f32 %v895, %v1045
        %1047 = vmatmul.bf16.gmra.mxu0 %v964
        %v1048 = vpop.f32.mrf.mxu0
        %v1049 = vadd.f32 %v895, %v1048
        %v1050 = vpop.f32.mrf.mxu0
        %v1051 = vadd.f32 %v895, %v1050
        %1052 = vmatmul.bf16.gmra.mxu0 %v967
        %v1053 = vpop.f32.mrf.mxu0
        %v1054 = vadd.f32 %v895, %v1053
        %v1055 = vpop.f32.mrf.mxu0
        %v1056 = vadd.f32 %v895, %v1055
        %1057 = vdwg.mxu0
        %v1058 = vmax.f32 %v979, 0.0
        %v1059 = vmax.f32 %v981, 0.0
        %v1060 = vmax.f32 %v984, 0.0
        %v1061 = vmax.f32 %v986, 0.0
        %v1062 = vmax.f32 %v989, 0.0
        %v1063 = vmax.f32 %v991, 0.0
        %v1064 = vmax.f32 %v994, 0.0
        %v1065 = vmax.f32 %v996, 0.0
        %v1066 = vmax.f32 %v999, 0.0
        %v1067 = vmax.f32 %v1001, 0.0
        %v1068 = vmax.f32 %v1004, 0.0
        %v1069 = vmax.f32 %v1006, 0.0
        %v1070 = vmax.f32 %v1009, 0.0
        %v1071 = vmax.f32 %v1011, 0.0
        %v1072 = vmax.f32 %v1014, 0.0
        %v1073 = vmax.f32 %v1016, 0.0
        %v1074 = vmax.f32 %v1019, 0.0
        %v1075 = vmax.f32 %v1021, 0.0
        %v1076 = vmax.f32 %v1024, 0.0
        %v1077 = vmax.f32 %v1026, 0.0
        %v1078 = vmax.f32 %v1029, 0.0
        %v1079 = vmax.f32 %v1031, 0.0
        %v1080 = vmax.f32 %v1034, 0.0
        %v1081 = vmax.f32 %v1036, 0.0
        %v1082 = vmax.f32 %v1039, 0.0
        %v1083 = vmax.f32 %v1041, 0.0
        %v1084 = vmax.f32 %v1044, 0.0
        %v1085 = vmax.f32 %v1046, 0.0
        %v1086 = vmax.f32 %v1049, 0.0
        %v1087 = vmax.f32 %v1051, 0.0
        %v1088 = vmax.f32 %v1054, 0.0
        %v1089 = vmax.f32 %v1056, 0.0
        %v1090 = vld [vmem:[%s7] sm:$0x1]
        %v1091 = vld [vmem:[%s8] sm:$0x1]
        %v1092 = vsel %vm699, %v1058, 0.0
        %1093 = vadd.xlane.f32.xlu0 %v1092
        %v1094 = vpop.xlane.xlu0 %1093
        %v1095 = vsel %vm699, %v1059, 0.0
        %1096 = vadd.xlane.f32.xlu0 %v1095
        %v1097 = vpop.xlane.xlu0 %1096
        %v1098 = vsel %vm699, %v1060, 0.0
        %1099 = vadd.xlane.f32.xlu0 %v1098
        %v1100 = vpop.xlane.xlu0 %1099
        %v1101 = vsel %vm699, %v1061, 0.0
        %1102 = vadd.xlane.f32.xlu0 %v1101
        %v1103 = vpop.xlane.xlu0 %1102
        %v1104 = vsel %vm699, %v1062, 0.0
        %1105 = vadd.xlane.f32.xlu0 %v1104
        %v1106 = vpop.xlane.xlu0 %1105
        %v1107 = vsel %vm699, %v1063, 0.0
        %1108 = vadd.xlane.f32.xlu0 %v1107
        %v1109 = vpop.xlane.xlu0 %1108
        %v1110 = vsel %vm699, %v1064, 0.0
        %1111 = vadd.xlane.f32.xlu0 %v1110
        %v1112 = vpop.xlane.xlu0 %1111
        %v1113 = vsel %vm699, %v1065, 0.0
        %1114 = vadd.xlane.f32.xlu0 %v1113
        %v1115 = vpop.xlane.xlu0 %1114
        %v1116 = vsel %vm699, %v1066, 0.0
        %1117 = vadd.xlane.f32.xlu0 %v1116
        %v1118 = vpop.xlane.xlu0 %1117
        %v1119 = vsel %vm699, %v1067, 0.0
        %1120 = vadd.xlane.f32.xlu0 %v1119
        %v1121 = vpop.xlane.xlu0 %1120
        %v1122 = vsel %vm699, %v1068, 0.0
        %1123 = vadd.xlane.f32.xlu0 %v1122
        %v1124 = vpop.xlane.xlu0 %1123
        %v1125 = vsel %vm699, %v1069, 0.0
        %1126 = vadd.xlane.f32.xlu0 %v1125
        %v1127 = vpop.xlane.xlu0 %1126
        %v1128 = vsel %vm699, %v1070, 0.0
        %1129 = vadd.xlane.f32.xlu0 %v1128
        %v1130 = vpop.xlane.xlu0 %1129
        %v1131 = vsel %vm699, %v1071, 0.0
        %1132 = vadd.xlane.f32.xlu0 %v1131
        %v1133 = vpop.xlane.xlu0 %1132
        %v1134 = vsel %vm699, %v1072, 0.0
        %1135 = vadd.xlane.f32.xlu0 %v1134
        %v1136 = vpop.xlane.xlu0 %1135
        %v1137 = vsel %vm699, %v1073, 0.0
        %1138 = vadd.xlane.f32.xlu0 %v1137
        %v1139 = vpop.xlane.xlu0 %1138
        %v1140 = vsel %vm699, %v1074, 0.0
        %1141 = vadd.xlane.f32.xlu0 %v1140
        %v1142 = vpop.xlane.xlu0 %1141
        %v1143 = vsel %vm699, %v1075, 0.0
        %1144 = vadd.xlane.f32.xlu0 %v1143
        %v1145 = vpop.xlane.xlu0 %1144
        %v1146 = vsel %vm699, %v1076, 0.0
        %1147 = vadd.xlane.f32.xlu0 %v1146
        %v1148 = vpop.xlane.xlu0 %1147
        %v1149 = vsel %vm699, %v1077, 0.0
        %1150 = vadd.xlane.f32.xlu0 %v1149
        %v1151 = vpop.xlane.xlu0 %1150
        %v1152 = vsel %vm699, %v1078, 0.0
        %1153 = vadd.xlane.f32.xlu0 %v1152
        %v1154 = vpop.xlane.xlu0 %1153
        %v1155 = vsel %vm699, %v1079, 0.0
        %1156 = vadd.xlane.f32.xlu0 %v1155
        %v1157 = vpop.xlane.xlu0 %1156
        %v1158 = vsel %vm699, %v1080, 0.0
        %1159 = vadd.xlane.f32.xlu0 %v1158
        %v1160 = vpop.xlane.xlu0 %1159
        %v1161 = vsel %vm699, %v1081, 0.0
        %1162 = vadd.xlane.f32.xlu0 %v1161
        %v1163 = vpop.xlane.xlu0 %1162
        %v1164 = vsel %vm699, %v1082, 0.0
        %1165 = vadd.xlane.f32.xlu0 %v1164
        %v1166 = vpop.xlane.xlu0 %1165
        %v1167 = vsel %vm699, %v1083, 0.0
        %1168 = vadd.xlane.f32.xlu0 %v1167
        %v1169 = vpop.xlane.xlu0 %1168
        %v1170 = vsel %vm699, %v1084, 0.0
        %1171 = vadd.xlane.f32.xlu0 %v1170
        %v1172 = vpop.xlane.xlu0 %1171
        %v1173 = vsel %vm699, %v1085, 0.0
        %1174 = vadd.xlane.f32.xlu0 %v1173
        %v1175 = vpop.xlane.xlu0 %1174
        %v1176 = vsel %vm699, %v1086, 0.0
        %1177 = vadd.xlane.f32.xlu0 %v1176
        %v1178 = vpop.xlane.xlu0 %1177
        %v1179 = vsel %vm699, %v1087, 0.0
        %1180 = vadd.xlane.f32.xlu0 %v1179
        %v1181 = vpop.xlane.xlu0 %1180
        %v1182 = vsel %vm699, %v1088, 0.0
        %1183 = vadd.xlane.f32.xlu0 %v1182
        %v1184 = vpop.xlane.xlu0 %1183
        %v1185 = vsel %vm699, %v1089, 0.0
        %1186 = vadd.xlane.f32.xlu0 %v1185
        %v1187 = vpop.xlane.xlu0 %1186
        %v1188 = vrcp.pop 64.0
        %v1189 = vmul.f32 64.0, %v1188
        %v1190 = vsub.f32 1.0, %v1189
        %v1191 = vmul.f32 %v1188, %v1190
        %v1192 = vadd.f32 %v1188, %v1191
        %vm1193 = vweird.f32 %v1188
        %v1194 = vsel %vm1193, %v1188, %v1192
        %v1195 = vmul.f32 %v1094, %v1194
        %v1196 = vmul.f32 %v1097, %v1194
        %v1197 = vmul.f32 %v1100, %v1194
        %v1198 = vmul.f32 %v1103, %v1194
        %v1199 = vmul.f32 %v1106, %v1194
        %v1200 = vmul.f32 %v1109, %v1194
        %v1201 = vmul.f32 %v1112, %v1194
        %v1202 = vmul.f32 %v1115, %v1194
        %v1203 = vmul.f32 %v1118, %v1194
        %v1204 = vmul.f32 %v1121, %v1194
        %v1205 = vmul.f32 %v1124, %v1194
        %v1206 = vmul.f32 %v1127, %v1194
        %v1207 = vmul.f32 %v1130, %v1194
        %v1208 = vmul.f32 %v1133, %v1194
        %v1209 = vmul.f32 %v1136, %v1194
        %v1210 = vmul.f32 %v1139, %v1194
        %v1211 = vmul.f32 %v1142, %v1194
        %v1212 = vmul.f32 %v1145, %v1194
        %v1213 = vmul.f32 %v1148, %v1194
        %v1214 = vmul.f32 %v1151, %v1194
        %v1215 = vmul.f32 %v1154, %v1194
        %v1216 = vmul.f32 %v1157, %v1194
        %v1217 = vmul.f32 %v1160, %v1194
        %v1218 = vmul.f32 %v1163, %v1194
        %v1219 = vmul.f32 %v1166, %v1194
        %v1220 = vmul.f32 %v1169, %v1194
        %v1221 = vmul.f32 %v1172, %v1194
        %v1222 = vmul.f32 %v1175, %v1194
        %v1223 = vmul.f32 %v1178, %v1194
        %v1224 = vmul.f32 %v1181, %v1194
        %v1225 = vmul.f32 %v1184, %v1194
        %v1226 = vmul.f32 %v1187, %v1194
        %v1227 = vsub.f32 %v1058, %v1195
        %v1228 = vsub.f32 %v1059, %v1196
        %v1229 = vsub.f32 %v1060, %v1197
        %v1230 = vsub.f32 %v1061, %v1198
        %v1231 = vsub.f32 %v1062, %v1199
        %v1232 = vsub.f32 %v1063, %v1200
        %v1233 = vsub.f32 %v1064, %v1201
        %v1234 = vsub.f32 %v1065, %v1202
        %v1235 = vsub.f32 %v1066, %v1203
        %v1236 = vsub.f32 %v1067, %v1204
        %v1237 = vsub.f32 %v1068, %v1205
        %v1238 = vsub.f32 %v1069, %v1206
        %v1239 = vsub.f32 %v1070, %v1207
        %v1240 = vsub.f32 %v1071, %v1208
        %v1241 = vsub.f32 %v1072, %v1209
        %v1242 = vsub.f32 %v1073, %v1210
        %v1243 = vsub.f32 %v1074, %v1211
        %v1244 = vsub.f32 %v1075, %v1212
        %v1245 = vsub.f32 %v1076, %v1213
        %v1246 = vsub.f32 %v1077, %v1214
        %v1247 = vsub.f32 %v1078, %v1215
        %v1248 = vsub.f32 %v1079, %v1216
        %v1249 = vsub.f32 %v1080, %v1217
        %v1250 = vsub.f32 %v1081, %v1218
        %v1251 = vsub.f32 %v1082, %v1219
        %v1252 = vsub.f32 %v1083, %v1220
        %v1253 = vsub.f32 %v1084, %v1221
        %v1254 = vsub.f32 %v1085, %v1222
        %v1255 = vsub.f32 %v1086, %v1223
        %v1256 = vsub.f32 %v1087, %v1224
        %v1257 = vsub.f32 %v1088, %v1225
        %v1258 = vsub.f32 %v1089, %v1226
        %v1259 = vmul.f32 %v1227, %v1227
        %v1260 = vmul.f32 %v1228, %v1228
        %v1261 = vmul.f32 %v1229, %v1229
        %v1262 = vmul.f32 %v1230, %v1230
        %v1263 = vmul.f32 %v1231, %v1231
        %v1264 = vmul.f32 %v1232, %v1232
        %v1265 = vmul.f32 %v1233, %v1233
        %v1266 = vmul.f32 %v1234, %v1234
        %v1267 = vmul.f32 %v1235, %v1235
        %v1268 = vmul.f32 %v1236, %v1236
        %v1269 = vmul.f32 %v1237, %v1237
        %v1270 = vmul.f32 %v1238, %v1238
        %v1271 = vmul.f32 %v1239, %v1239
        %v1272 = vmul.f32 %v1240, %v1240
        %v1273 = vmul.f32 %v1241, %v1241
        %v1274 = vmul.f32 %v1242, %v1242
        %v1275 = vmul.f32 %v1243, %v1243
        %v1276 = vmul.f32 %v1244, %v1244
        %v1277 = vmul.f32 %v1245, %v1245
        %v1278 = vmul.f32 %v1246, %v1246
        %v1279 = vmul.f32 %v1247, %v1247
        %v1280 = vmul.f32 %v1248, %v1248
        %v1281 = vmul.f32 %v1249, %v1249
        %v1282 = vmul.f32 %v1250, %v1250
        %v1283 = vmul.f32 %v1251, %v1251
        %v1284 = vmul.f32 %v1252, %v1252
        %v1285 = vmul.f32 %v1253, %v1253
        %v1286 = vmul.f32 %v1254, %v1254
        %v1287 = vmul.f32 %v1255, %v1255
        %v1288 = vmul.f32 %v1256, %v1256
        %v1289 = vmul.f32 %v1257, %v1257
        %v1290 = vmul.f32 %v1258, %v1258
        %v1291 = vsel %vm699, %v1259, 0.0
        %1292 = vadd.xlane.f32.xlu0 %v1291
        %v1293 = vpop.xlane.xlu0 %1292
        %v1294 = vsel %vm699, %v1260, 0.0
        %1295 = vadd.xlane.f32.xlu0 %v1294
        %v1296 = vpop.xlane.xlu0 %1295
        %v1297 = vsel %vm699, %v1261, 0.0
        %1298 = vadd.xlane.f32.xlu0 %v1297
        %v1299 = vpop.xlane.xlu0 %1298
        %v1300 = vsel %vm699, %v1262, 0.0
        %1301 = vadd.xlane.f32.xlu0 %v1300
        %v1302 = vpop.xlane.xlu0 %1301
        %v1303 = vsel %vm699, %v1263, 0.0
        %1304 = vadd.xlane.f32.xlu0 %v1303
        %v1305 = vpop.xlane.xlu0 %1304
        %v1306 = vsel %vm699, %v1264, 0.0
        %1307 = vadd.xlane.f32.xlu0 %v1306
        %v1308 = vpop.xlane.xlu0 %1307
        %v1309 = vsel %vm699, %v1265, 0.0
        %1310 = vadd.xlane.f32.xlu0 %v1309
        %v1311 = vpop.xlane.xlu0 %1310
        %v1312 = vsel %vm699, %v1266, 0.0
        %1313 = vadd.xlane.f32.xlu0 %v1312
        %v1314 = vpop.xlane.xlu0 %1313
        %v1315 = vsel %vm699, %v1267, 0.0
        %1316 = vadd.xlane.f32.xlu0 %v1315
        %v1317 = vpop.xlane.xlu0 %1316
        %v1318 = vsel %vm699, %v1268, 0.0
        %1319 = vadd.xlane.f32.xlu0 %v1318
        %v1320 = vpop.xlane.xlu0 %1319
        %v1321 = vsel %vm699, %v1269, 0.0
        %1322 = vadd.xlane.f32.xlu0 %v1321
        %v1323 = vpop.xlane.xlu0 %1322
        %v1324 = vsel %vm699, %v1270, 0.0
        %1325 = vadd.xlane.f32.xlu0 %v1324
        %v1326 = vpop.xlane.xlu0 %1325
        %v1327 = vsel %vm699, %v1271, 0.0
        %1328 = vadd.xlane.f32.xlu0 %v1327
        %v1329 = vpop.xlane.xlu0 %1328
        %v1330 = vsel %vm699, %v1272, 0.0
        %1331 = vadd.xlane.f32.xlu0 %v1330
        %v1332 = vpop.xlane.xlu0 %1331
        %v1333 = vsel %vm699, %v1273, 0.0
        %1334 = vadd.xlane.f32.xlu0 %v1333
        %v1335 = vpop.xlane.xlu0 %1334
        %v1336 = vsel %vm699, %v1274, 0.0
        %1337 = vadd.xlane.f32.xlu0 %v1336
        %v1338 = vpop.xlane.xlu0 %1337
        %v1339 = vsel %vm699, %v1275, 0.0
        %1340 = vadd.xlane.f32.xlu0 %v1339
        %v1341 = vpop.xlane.xlu0 %1340
        %v1342 = vsel %vm699, %v1276, 0.0
        %1343 = vadd.xlane.f32.xlu0 %v1342
        %v1344 = vpop.xlane.xlu0 %1343
        %v1345 = vsel %vm699, %v1277, 0.0
        %1346 = vadd.xlane.f32.xlu0 %v1345
        %v1347 = vpop.xlane.xlu0 %1346
        %v1348 = vsel %vm699, %v1278, 0.0
        %1349 = vadd.xlane.f32.xlu0 %v1348
        %v1350 = vpop.xlane.xlu0 %1349
        %v1351 = vsel %vm699, %v1279, 0.0
        %1352 = vadd.xlane.f32.xlu0 %v1351
        %v1353 = vpop.xlane.xlu0 %1352
        %v1354 = vsel %vm699, %v1280, 0.0
        %1355 = vadd.xlane.f32.xlu0 %v1354
        %v1356 = vpop.xlane.xlu0 %1355
        %v1357 = vsel %vm699, %v1281, 0.0
        %1358 = vadd.xlane.f32.xlu0 %v1357
        %v1359 = vpop.xlane.xlu0 %1358
        %v1360 = vsel %vm699, %v1282, 0.0
        %1361 = vadd.xlane.f32.xlu0 %v1360
        %v1362 = vpop.xlane.xlu0 %1361
        %v1363 = vsel %vm699, %v1283, 0.0
        %1364 = vadd.xlane.f32.xlu0 %v1363
        %v1365 = vpop.xlane.xlu0 %1364
        %v1366 = vsel %vm699, %v1284, 0.0
        %1367 = vadd.xlane.f32.xlu0 %v1366
        %v1368 = vpop.xlane.xlu0 %1367
        %v1369 = vsel %vm699, %v1285, 0.0
        %1370 = vadd.xlane.f32.xlu0 %v1369
        %v1371 = vpop.xlane.xlu0 %1370
        %v1372 = vsel %vm699, %v1286, 0.0
        %1373 = vadd.xlane.f32.xlu0 %v1372
        %v1374 = vpop.xlane.xlu0 %1373
        %v1375 = vsel %vm699, %v1287, 0.0
        %1376 = vadd.xlane.f32.xlu0 %v1375
        %v1377 = vpop.xlane.xlu0 %1376
        %v1378 = vsel %vm699, %v1288, 0.0
        %1379 = vadd.xlane.f32.xlu0 %v1378
        %v1380 = vpop.xlane.xlu0 %1379
        %v1381 = vsel %vm699, %v1289, 0.0
        %1382 = vadd.xlane.f32.xlu0 %v1381
        %v1383 = vpop.xlane.xlu0 %1382
        %v1384 = vsel %vm699, %v1290, 0.0
        %1385 = vadd.xlane.f32.xlu0 %v1384
        %v1386 = vpop.xlane.xlu0 %1385
        %v1387 = vmul.f32 %v1293, %v1194
        %v1388 = vmul.f32 %v1296, %v1194
        %v1389 = vmul.f32 %v1299, %v1194
        %v1390 = vmul.f32 %v1302, %v1194
        %v1391 = vmul.f32 %v1305, %v1194
        %v1392 = vmul.f32 %v1308, %v1194
        %v1393 = vmul.f32 %v1311, %v1194
        %v1394 = vmul.f32 %v1314, %v1194
        %v1395 = vmul.f32 %v1317, %v1194
        %v1396 = vmul.f32 %v1320, %v1194
        %v1397 = vmul.f32 %v1323, %v1194
        %v1398 = vmul.f32 %v1326, %v1194
        %v1399 = vmul.f32 %v1329, %v1194
        %v1400 = vmul.f32 %v1332, %v1194
        %v1401 = vmul.f32 %v1335, %v1194
        %v1402 = vmul.f32 %v1338, %v1194
        %v1403 = vmul.f32 %v1341, %v1194
        %v1404 = vmul.f32 %v1344, %v1194
        %v1405 = vmul.f32 %v1347, %v1194
        %v1406 = vmul.f32 %v1350, %v1194
        %v1407 = vmul.f32 %v1353, %v1194
        %v1408 = vmul.f32 %v1356, %v1194
        %v1409 = vmul.f32 %v1359, %v1194
        %v1410 = vmul.f32 %v1362, %v1194
        %v1411 = vmul.f32 %v1365, %v1194
        %v1412 = vmul.f32 %v1368, %v1194
        %v1413 = vmul.f32 %v1371, %v1194
        %v1414 = vmul.f32 %v1374, %v1194
        %v1415 = vmul.f32 %v1377, %v1194
        %v1416 = vmul.f32 %v1380, %v1194
        %v1417 = vmul.f32 %v1383, %v1194
        %v1418 = vmul.f32 %v1386, %v1194
        %v1419 = vadd.f32 %v1387, 1e-05
        %v1420 = vadd.f32 %v1388, 1e-05
        %v1421 = vadd.f32 %v1389, 1e-05
        %v1422 = vadd.f32 %v1390, 1e-05
        %v1423 = vadd.f32 %v1391, 1e-05
        %v1424 = vadd.f32 %v1392, 1e-05
        %v1425 = vadd.f32 %v1393, 1e-05
        %v1426 = vadd.f32 %v1394, 1e-05
        %v1427 = vadd.f32 %v1395, 1e-05
        %v1428 = vadd.f32 %v1396, 1e-05
        %v1429 = vadd.f32 %v1397, 1e-05
        %v1430 = vadd.f32 %v1398, 1e-05
        %v1431 = vadd.f32 %v1399, 1e-05
        %v1432 = vadd.f32 %v1400, 1e-05
        %v1433 = vadd.f32 %v1401, 1e-05
        %v1434 = vadd.f32 %v1402, 1e-05
        %v1435 = vadd.f32 %v1403, 1e-05
        %v1436 = vadd.f32 %v1404, 1e-05
        %v1437 = vadd.f32 %v1405, 1e-05
        %v1438 = vadd.f32 %v1406, 1e-05
        %v1439 = vadd.f32 %v1407, 1e-05
        %v1440 = vadd.f32 %v1408, 1e-05
        %v1441 = vadd.f32 %v1409, 1e-05
        %v1442 = vadd.f32 %v1410, 1e-05
        %v1443 = vadd.f32 %v1411, 1e-05
        %v1444 = vadd.f32 %v1412, 1e-05
        %v1445 = vadd.f32 %v1413, 1e-05
        %v1446 = vadd.f32 %v1414, 1e-05
        %v1447 = vadd.f32 %v1415, 1e-05
        %v1448 = vadd.f32 %v1416, 1e-05
        %v1449 = vadd.f32 %v1417, 1e-05
        %v1450 = vadd.f32 %v1418, 1e-05
        %v1451 = vrsqrt.pop %v1419
        %v1452 = vmul.f32 %v1451, %v1419
        %v1453 = vmul.f32 %v1452, %v1451
        %v1454 = vmul.f32 0.5, %v1453
        %v1455 = vsub.f32 1.5, %v1454
        %v1456 = vmul.f32 %v1451, %v1455
        %vm1457 = vweird.f32 %v1419
        %vm1458 = vweird.f32 %v1451
        %vm1459 = vmor %vm1457, %vm1458
        %v1460 = vsel %vm1459, %v1451, %v1456
        %v1461 = vrsqrt.pop %v1420
        %v1462 = vmul.f32 %v1461, %v1420
        %v1463 = vmul.f32 %v1462, %v1461
        %v1464 = vmul.f32 0.5, %v1463
        %v1465 = vsub.f32 1.5, %v1464
        %v1466 = vmul.f32 %v1461, %v1465
        %vm1467 = vweird.f32 %v1420
        %vm1468 = vweird.f32 %v1461
        %vm1469 = vmor %vm1467, %vm1468
        %v1470 = vsel %vm1469, %v1461, %v1466
        %v1471 = vrsqrt.pop %v1421
        %v1472 = vmul.f32 %v1471, %v1421
        %v1473 = vmul.f32 %v1472, %v1471
        %v1474 = vmul.f32 0.5, %v1473
        %v1475 = vsub.f32 1.5, %v1474
        %v1476 = vmul.f32 %v1471, %v1475
        %vm1477 = vweird.f32 %v1421
        %vm1478 = vweird.f32 %v1471
        %vm1479 = vmor %vm1477, %vm1478
        %v1480 = vsel %vm1479, %v1471, %v1476
        %v1481 = vrsqrt.pop %v1422
        %v1482 = vmul.f32 %v1481, %v1422
        %v1483 = vmul.f32 %v1482, %v1481
        %v1484 = vmul.f32 0.5, %v1483
        %v1485 = vsub.f32 1.5, %v1484
        %v1486 = vmul.f32 %v1481, %v1485
        %vm1487 = vweird.f32 %v1422
        %vm1488 = vweird.f32 %v1481
        %vm1489 = vmor %vm1487, %vm1488
        %v1490 = vsel %vm1489, %v1481, %v1486
        %v1491 = vrsqrt.pop %v1423
        %v1492 = vmul.f32 %v1491, %v1423
        %v1493 = vmul.f32 %v1492, %v1491
        %v1494 = vmul.f32 0.5, %v1493
        %v1495 = vsub.f32 1.5, %v1494
        %v1496 = vmul.f32 %v1491, %v1495
        %vm1497 = vweird.f32 %v1423
        %vm1498 = vweird.f32 %v1491
        %vm1499 = vmor %vm1497, %vm1498
        %v1500 = vsel %vm1499, %v1491, %v1496
        %v1501 = vrsqrt.pop %v1424
        %v1502 = vmul.f32 %v1501, %v1424
        %v1503 = vmul.f32 %v1502, %v1501
        %v1504 = vmul.f32 0.5, %v1503
        %v1505 = vsub.f32 1.5, %v1504
        %v1506 = vmul.f32 %v1501, %v1505
        %vm1507 = vweird.f32 %v1424
        %vm1508 = vweird.f32 %v1501
        %vm1509 = vmor %vm1507, %vm1508
        %v1510 = vsel %vm1509, %v1501, %v1506
        %v1511 = vrsqrt.pop %v1425
        %v1512 = vmul.f32 %v1511, %v1425
        %v1513 = vmul.f32 %v1512, %v1511
        %v1514 = vmul.f32 0.5, %v1513
        %v1515 = vsub.f32 1.5, %v1514
        %v1516 = vmul.f32 %v1511, %v1515
        %vm1517 = vweird.f32 %v1425
        %vm1518 = vweird.f32 %v1511
        %vm1519 = vmor %vm1517, %vm1518
        %v1520 = vsel %vm1519, %v1511, %v1516
        %v1521 = vrsqrt.pop %v1426
        %v1522 = vmul.f32 %v1521, %v1426
        %v1523 = vmul.f32 %v1522, %v1521
        %v1524 = vmul.f32 0.5, %v1523
        %v1525 = vsub.f32 1.5, %v1524
        %v1526 = vmul.f32 %v1521, %v1525
        %vm1527 = vweird.f32 %v1426
        %vm1528 = vweird.f32 %v1521
        %vm1529 = vmor %vm1527, %vm1528
        %v1530 = vsel %vm1529, %v1521, %v1526
        %v1531 = vrsqrt.pop %v1427
        %v1532 = vmul.f32 %v1531, %v1427
        %v1533 = vmul.f32 %v1532, %v1531
        %v1534 = vmul.f32 0.5, %v1533
        %v1535 = vsub.f32 1.5, %v1534
        %v1536 = vmul.f32 %v1531, %v1535
        %vm1537 = vweird.f32 %v1427
        %vm1538 = vweird.f32 %v1531
        %vm1539 = vmor %vm1537, %vm1538
        %v1540 = vsel %vm1539, %v1531, %v1536
        %v1541 = vrsqrt.pop %v1428
        %v1542 = vmul.f32 %v1541, %v1428
        %v1543 = vmul.f32 %v1542, %v1541
        %v1544 = vmul.f32 0.5, %v1543
        %v1545 = vsub.f32 1.5, %v1544
        %v1546 = vmul.f32 %v1541, %v1545
        %vm1547 = vweird.f32 %v1428
        %vm1548 = vweird.f32 %v1541
        %vm1549 = vmor %vm1547, %vm1548
        %v1550 = vsel %vm1549, %v1541, %v1546
        %v1551 = vrsqrt.pop %v1429
        %v1552 = vmul.f32 %v1551, %v1429
        %v1553 = vmul.f32 %v1552, %v1551
        %v1554 = vmul.f32 0.5, %v1553
        %v1555 = vsub.f32 1.5, %v1554
        %v1556 = vmul.f32 %v1551, %v1555
        %vm1557 = vweird.f32 %v1429
        %vm1558 = vweird.f32 %v1551
        %vm1559 = vmor %vm1557, %vm1558
        %v1560 = vsel %vm1559, %v1551, %v1556
        %v1561 = vrsqrt.pop %v1430
        %v1562 = vmul.f32 %v1561, %v1430
        %v1563 = vmul.f32 %v1562, %v1561
        %v1564 = vmul.f32 0.5, %v1563
        %v1565 = vsub.f32 1.5, %v1564
        %v1566 = vmul.f32 %v1561, %v1565
        %vm1567 = vweird.f32 %v1430
        %vm1568 = vweird.f32 %v1561
        %vm1569 = vmor %vm1567, %vm1568
        %v1570 = vsel %vm1569, %v1561, %v1566
        %v1571 = vrsqrt.pop %v1431
        %v1572 = vmul.f32 %v1571, %v1431
        %v1573 = vmul.f32 %v1572, %v1571
        %v1574 = vmul.f32 0.5, %v1573
        %v1575 = vsub.f32 1.5, %v1574
        %v1576 = vmul.f32 %v1571, %v1575
        %vm1577 = vweird.f32 %v1431
        %vm1578 = vweird.f32 %v1571
        %vm1579 = vmor %vm1577, %vm1578
        %v1580 = vsel %vm1579, %v1571, %v1576
        %v1581 = vrsqrt.pop %v1432
        %v1582 = vmul.f32 %v1581, %v1432
        %v1583 = vmul.f32 %v1582, %v1581
        %v1584 = vmul.f32 0.5, %v1583
        %v1585 = vsub.f32 1.5, %v1584
        %v1586 = vmul.f32 %v1581, %v1585
        %vm1587 = vweird.f32 %v1432
        %vm1588 = vweird.f32 %v1581
        %vm1589 = vmor %vm1587, %vm1588
        %v1590 = vsel %vm1589, %v1581, %v1586
        %v1591 = vrsqrt.pop %v1433
        %v1592 = vmul.f32 %v1591, %v1433
        %v1593 = vmul.f32 %v1592, %v1591
        %v1594 = vmul.f32 0.5, %v1593
        %v1595 = vsub.f32 1.5, %v1594
        %v1596 = vmul.f32 %v1591, %v1595
        %vm1597 = vweird.f32 %v1433
        %vm1598 = vweird.f32 %v1591
        %vm1599 = vmor %vm1597, %vm1598
        %v1600 = vsel %vm1599, %v1591, %v1596
        %v1601 = vrsqrt.pop %v1434
        %v1602 = vmul.f32 %v1601, %v1434
        %v1603 = vmul.f32 %v1602, %v1601
        %v1604 = vmul.f32 0.5, %v1603
        %v1605 = vsub.f32 1.5, %v1604
        %v1606 = vmul.f32 %v1601, %v1605
        %vm1607 = vweird.f32 %v1434
        %vm1608 = vweird.f32 %v1601
        %vm1609 = vmor %vm1607, %vm1608
        %v1610 = vsel %vm1609, %v1601, %v1606
        %v1611 = vrsqrt.pop %v1435
        %v1612 = vmul.f32 %v1611, %v1435
        %v1613 = vmul.f32 %v1612, %v1611
        %v1614 = vmul.f32 0.5, %v1613
        %v1615 = vsub.f32 1.5, %v1614
        %v1616 = vmul.f32 %v1611, %v1615
        %vm1617 = vweird.f32 %v1435
        %vm1618 = vweird.f32 %v1611
        %vm1619 = vmor %vm1617, %vm1618
        %v1620 = vsel %vm1619, %v1611, %v1616
        %v1621 = vrsqrt.pop %v1436
        %v1622 = vmul.f32 %v1621, %v1436
        %v1623 = vmul.f32 %v1622, %v1621
        %v1624 = vmul.f32 0.5, %v1623
        %v1625 = vsub.f32 1.5, %v1624
        %v1626 = vmul.f32 %v1621, %v1625
        %vm1627 = vweird.f32 %v1436
        %vm1628 = vweird.f32 %v1621
        %vm1629 = vmor %vm1627, %vm1628
        %v1630 = vsel %vm1629, %v1621, %v1626
        %v1631 = vrsqrt.pop %v1437
        %v1632 = vmul.f32 %v1631, %v1437
        %v1633 = vmul.f32 %v1632, %v1631
        %v1634 = vmul.f32 0.5, %v1633
        %v1635 = vsub.f32 1.5, %v1634
        %v1636 = vmul.f32 %v1631, %v1635
        %vm1637 = vweird.f32 %v1437
        %vm1638 = vweird.f32 %v1631
        %vm1639 = vmor %vm1637, %vm1638
        %v1640 = vsel %vm1639, %v1631, %v1636
        %v1641 = vrsqrt.pop %v1438
        %v1642 = vmul.f32 %v1641, %v1438
        %v1643 = vmul.f32 %v1642, %v1641
        %v1644 = vmul.f32 0.5, %v1643
        %v1645 = vsub.f32 1.5, %v1644
        %v1646 = vmul.f32 %v1641, %v1645
        %vm1647 = vweird.f32 %v1438
        %vm1648 = vweird.f32 %v1641
        %vm1649 = vmor %vm1647, %vm1648
        %v1650 = vsel %vm1649, %v1641, %v1646
        %v1651 = vrsqrt.pop %v1439
        %v1652 = vmul.f32 %v1651, %v1439
        %v1653 = vmul.f32 %v1652, %v1651
        %v1654 = vmul.f32 0.5, %v1653
        %v1655 = vsub.f32 1.5, %v1654
        %v1656 = vmul.f32 %v1651, %v1655
        %vm1657 = vweird.f32 %v1439
        %vm1658 = vweird.f32 %v1651
        %vm1659 = vmor %vm1657, %vm1658
        %v1660 = vsel %vm1659, %v1651, %v1656
        %v1661 = vrsqrt.pop %v1440
        %v1662 = vmul.f32 %v1661, %v1440
        %v1663 = vmul.f32 %v1662, %v1661
        %v1664 = vmul.f32 0.5, %v1663
        %v1665 = vsub.f32 1.5, %v1664
        %v1666 = vmul.f32 %v1661, %v1665
        %vm1667 = vweird.f32 %v1440
        %vm1668 = vweird.f32 %v1661
        %vm1669 = vmor %vm1667, %vm1668
        %v1670 = vsel %vm1669, %v1661, %v1666
        %v1671 = vrsqrt.pop %v1441
        %v1672 = vmul.f32 %v1671, %v1441
        %v1673 = vmul.f32 %v1672, %v1671
        %v1674 = vmul.f32 0.5, %v1673
        %v1675 = vsub.f32 1.5, %v1674
        %v1676 = vmul.f32 %v1671, %v1675
        %vm1677 = vweird.f32 %v1441
        %vm1678 = vweird.f32 %v1671
        %vm1679 = vmor %vm1677, %vm1678
        %v1680 = vsel %vm1679, %v1671, %v1676
        %v1681 = vrsqrt.pop %v1442
        %v1682 = vmul.f32 %v1681, %v1442
        %v1683 = vmul.f32 %v1682, %v1681
        %v1684 = vmul.f32 0.5, %v1683
        %v1685 = vsub.f32 1.5, %v1684
        %v1686 = vmul.f32 %v1681, %v1685
        %vm1687 = vweird.f32 %v1442
        %vm1688 = vweird.f32 %v1681
        %vm1689 = vmor %vm1687, %vm1688
        %v1690 = vsel %vm1689, %v1681, %v1686
        %v1691 = vrsqrt.pop %v1443
        %v1692 = vmul.f32 %v1691, %v1443
        %v1693 = vmul.f32 %v1692, %v1691
        %v1694 = vmul.f32 0.5, %v1693
        %v1695 = vsub.f32 1.5, %v1694
        %v1696 = vmul.f32 %v1691, %v1695
        %vm1697 = vweird.f32 %v1443
        %vm1698 = vweird.f32 %v1691
        %vm1699 = vmor %vm1697, %vm1698
        %v1700 = vsel %vm1699, %v1691, %v1696
        %v1701 = vrsqrt.pop %v1444
        %v1702 = vmul.f32 %v1701, %v1444
        %v1703 = vmul.f32 %v1702, %v1701
        %v1704 = vmul.f32 0.5, %v1703
        %v1705 = vsub.f32 1.5, %v1704
        %v1706 = vmul.f32 %v1701, %v1705
        %vm1707 = vweird.f32 %v1444
        %vm1708 = vweird.f32 %v1701
        %vm1709 = vmor %vm1707, %vm1708
        %v1710 = vsel %vm1709, %v1701, %v1706
        %v1711 = vrsqrt.pop %v1445
        %v1712 = vmul.f32 %v1711, %v1445
        %v1713 = vmul.f32 %v1712, %v1711
        %v1714 = vmul.f32 0.5, %v1713
        %v1715 = vsub.f32 1.5, %v1714
        %v1716 = vmul.f32 %v1711, %v1715
        %vm1717 = vweird.f32 %v1445
        %vm1718 = vweird.f32 %v1711
        %vm1719 = vmor %vm1717, %vm1718
        %v1720 = vsel %vm1719, %v1711, %v1716
        %v1721 = vrsqrt.pop %v1446
        %v1722 = vmul.f32 %v1721, %v1446
        %v1723 = vmul.f32 %v1722, %v1721
        %v1724 = vmul.f32 0.5, %v1723
        %v1725 = vsub.f32 1.5, %v1724
        %v1726 = vmul.f32 %v1721, %v1725
        %vm1727 = vweird.f32 %v1446
        %vm1728 = vweird.f32 %v1721
        %vm1729 = vmor %vm1727, %vm1728
        %v1730 = vsel %vm1729, %v1721, %v1726
        %v1731 = vrsqrt.pop %v1447
        %v1732 = vmul.f32 %v1731, %v1447
        %v1733 = vmul.f32 %v1732, %v1731
        %v1734 = vmul.f32 0.5, %v1733
        %v1735 = vsub.f32 1.5, %v1734
        %v1736 = vmul.f32 %v1731, %v1735
        %vm1737 = vweird.f32 %v1447
        %vm1738 = vweird.f32 %v1731
        %vm1739 = vmor %vm1737, %vm1738
        %v1740 = vsel %vm1739, %v1731, %v1736
        %v1741 = vrsqrt.pop %v1448
        %v1742 = vmul.f32 %v1741, %v1448
        %v1743 = vmul.f32 %v1742, %v1741
        %v1744 = vmul.f32 0.5, %v1743
        %v1745 = vsub.f32 1.5, %v1744
        %v1746 = vmul.f32 %v1741, %v1745
        %vm1747 = vweird.f32 %v1448
        %vm1748 = vweird.f32 %v1741
        %vm1749 = vmor %vm1747, %vm1748
        %v1750 = vsel %vm1749, %v1741, %v1746
        %v1751 = vrsqrt.pop %v1449
        %v1752 = vmul.f32 %v1751, %v1449
        %v1753 = vmul.f32 %v1752, %v1751
        %v1754 = vmul.f32 0.5, %v1753
        %v1755 = vsub.f32 1.5, %v1754
        %v1756 = vmul.f32 %v1751, %v1755
        %vm1757 = vweird.f32 %v1449
        %vm1758 = vweird.f32 %v1751
        %vm1759 = vmor %vm1757, %vm1758
        %v1760 = vsel %vm1759, %v1751, %v1756
        %v1761 = vrsqrt.pop %v1450
        %v1762 = vmul.f32 %v1761, %v1450
        %v1763 = vmul.f32 %v1762, %v1761
        %v1764 = vmul.f32 0.5, %v1763
        %v1765 = vsub.f32 1.5, %v1764
        %v1766 = vmul.f32 %v1761, %v1765
        %vm1767 = vweird.f32 %v1450
        %vm1768 = vweird.f32 %v1761
        %vm1769 = vmor %vm1767, %vm1768
        %v1770 = vsel %vm1769, %v1761, %v1766
        %v1771 = vmul.f32 %v1227, %v1460
        %v1772 = vmul.f32 %v1228, %v1470
        %v1773 = vmul.f32 %v1229, %v1480
        %v1774 = vmul.f32 %v1230, %v1490
        %v1775 = vmul.f32 %v1231, %v1500
        %v1776 = vmul.f32 %v1232, %v1510
        %v1777 = vmul.f32 %v1233, %v1520
        %v1778 = vmul.f32 %v1234, %v1530
        %v1779 = vmul.f32 %v1235, %v1540
        %v1780 = vmul.f32 %v1236, %v1550
        %v1781 = vmul.f32 %v1237, %v1560
        %v1782 = vmul.f32 %v1238, %v1570
        %v1783 = vmul.f32 %v1239, %v1580
        %v1784 = vmul.f32 %v1240, %v1590
        %v1785 = vmul.f32 %v1241, %v1600
        %v1786 = vmul.f32 %v1242, %v1610
        %v1787 = vmul.f32 %v1243, %v1620
        %v1788 = vmul.f32 %v1244, %v1630
        %v1789 = vmul.f32 %v1245, %v1640
        %v1790 = vmul.f32 %v1246, %v1650
        %v1791 = vmul.f32 %v1247, %v1660
        %v1792 = vmul.f32 %v1248, %v1670
        %v1793 = vmul.f32 %v1249, %v1680
        %v1794 = vmul.f32 %v1250, %v1690
        %v1795 = vmul.f32 %v1251, %v1700
        %v1796 = vmul.f32 %v1252, %v1710
        %v1797 = vmul.f32 %v1253, %v1720
        %v1798 = vmul.f32 %v1254, %v1730
        %v1799 = vmul.f32 %v1255, %v1740
        %v1800 = vmul.f32 %v1256, %v1750
        %v1801 = vmul.f32 %v1257, %v1760
        %v1802 = vmul.f32 %v1258, %v1770
        %v1804 = vperm.slane %v1090, 0
        %v1806 = vmul.f32 %v1771, %v1804
        %v1807 = vmul.f32 %v1772, %v1804
        %v1808 = vmul.f32 %v1773, %v1804
        %v1809 = vmul.f32 %v1774, %v1804
        %v1810 = vmul.f32 %v1775, %v1804
        %v1811 = vmul.f32 %v1776, %v1804
        %v1812 = vmul.f32 %v1777, %v1804
        %v1813 = vmul.f32 %v1778, %v1804
        %v1814 = vmul.f32 %v1779, %v1804
        %v1815 = vmul.f32 %v1780, %v1804
        %v1816 = vmul.f32 %v1781, %v1804
        %v1817 = vmul.f32 %v1782, %v1804
        %v1818 = vmul.f32 %v1783, %v1804
        %v1819 = vmul.f32 %v1784, %v1804
        %v1820 = vmul.f32 %v1785, %v1804
        %v1821 = vmul.f32 %v1786, %v1804
        %v1822 = vmul.f32 %v1787, %v1804
        %v1823 = vmul.f32 %v1788, %v1804
        %v1824 = vmul.f32 %v1789, %v1804
        %v1825 = vmul.f32 %v1790, %v1804
        %v1826 = vmul.f32 %v1791, %v1804
        %v1827 = vmul.f32 %v1792, %v1804
        %v1828 = vmul.f32 %v1793, %v1804
        %v1829 = vmul.f32 %v1794, %v1804
        %v1830 = vmul.f32 %v1795, %v1804
        %v1831 = vmul.f32 %v1796, %v1804
        %v1832 = vmul.f32 %v1797, %v1804
        %v1833 = vmul.f32 %v1798, %v1804
        %v1834 = vmul.f32 %v1799, %v1804
        %v1835 = vmul.f32 %v1800, %v1804
        %v1836 = vmul.f32 %v1801, %v1804
        %v1837 = vmul.f32 %v1802, %v1804
        %v1839 = vperm.slane %v1091, 0
        %v1841 = vadd.f32 %v1806, %v1839
        %v1842 = vadd.f32 %v1807, %v1839
        %v1843 = vadd.f32 %v1808, %v1839
        %v1844 = vadd.f32 %v1809, %v1839
        %v1845 = vadd.f32 %v1810, %v1839
        %v1846 = vadd.f32 %v1811, %v1839
        %v1847 = vadd.f32 %v1812, %v1839
        %v1848 = vadd.f32 %v1813, %v1839
        %v1849 = vadd.f32 %v1814, %v1839
        %v1850 = vadd.f32 %v1815, %v1839
        %v1851 = vadd.f32 %v1816, %v1839
        %v1852 = vadd.f32 %v1817, %v1839
        %v1853 = vadd.f32 %v1818, %v1839
        %v1854 = vadd.f32 %v1819, %v1839
        %v1855 = vadd.f32 %v1820, %v1839
        %v1856 = vadd.f32 %v1821, %v1839
        %v1857 = vadd.f32 %v1822, %v1839
        %v1858 = vadd.f32 %v1823, %v1839
        %v1859 = vadd.f32 %v1824, %v1839
        %v1860 = vadd.f32 %v1825, %v1839
        %v1861 = vadd.f32 %v1826, %v1839
        %v1862 = vadd.f32 %v1827, %v1839
        %v1863 = vadd.f32 %v1828, %v1839
        %v1864 = vadd.f32 %v1829, %v1839
        %v1865 = vadd.f32 %v1830, %v1839
        %v1866 = vadd.f32 %v1831, %v1839
        %v1867 = vadd.f32 %v1832, %v1839
        %v1868 = vadd.f32 %v1833, %v1839
        %v1869 = vadd.f32 %v1834, %v1839
        %v1870 = vadd.f32 %v1835, %v1839
        %v1871 = vadd.f32 %v1836, %v1839
        %v1872 = vadd.f32 %v1837, %v1839
        %v1873 = vpack.c.bf16 %v1842, %v1841
        %v1874 = vpack.c.bf16 %v1844, %v1843
        %v1875 = vpack.c.bf16 %v1846, %v1845
        %v1876 = vpack.c.bf16 %v1848, %v1847
        %v1877 = vpack.c.bf16 %v1850, %v1849
        %v1878 = vpack.c.bf16 %v1852, %v1851
        %v1879 = vpack.c.bf16 %v1854, %v1853
        %v1880 = vpack.c.bf16 %v1856, %v1855
        %v1881 = vpack.c.bf16 %v1858, %v1857
        %v1882 = vpack.c.bf16 %v1860, %v1859
        %v1883 = vpack.c.bf16 %v1862, %v1861
        %v1884 = vpack.c.bf16 %v1864, %v1863
        %v1885 = vpack.c.bf16 %v1866, %v1865
        %v1886 = vpack.c.bf16 %v1868, %v1867
        %v1887 = vpack.c.bf16 %v1870, %v1869
        %v1888 = vpack.c.bf16 %v1872, %v1871
        %v1889 = vld [vmem:[%s9] sm:$0xf]
        %v1890 = vld [vmem:[%s9 + $0x4] sm:$0xf]
        %v1891 = vld [vmem:[%s9 + $0x8] sm:$0xf]
        %v1892 = vld [vmem:[%s9 + $0xc] sm:$0xf]
        %v1893 = vld [vmem:[%s9 + $0x10] sm:$0xf]
        %v1894 = vld [vmem:[%s9 + $0x14] sm:$0xf]
        %v1895 = vld [vmem:[%s9 + $0x18] sm:$0xf]
        %v1896 = vld [vmem:[%s9 + $0x1c] sm:$0xf]
        %v1897 = vld [vmem:[%s10] sm:$0x1]
        %v1899 = vperm.slane %v1897, 0
        %v1909 = vunpack.c.l.b16 %v1889
        %v1910 = vunpack.c.l.b16 %v1890
        %v1911 = vunpack.c.l.b16 %v1891
        %v1912 = vunpack.c.l.b16 %v1892
        %v1913 = vunpack.c.l.b16 %v1893
        %v1914 = vunpack.c.l.b16 %v1894
        %v1915 = vunpack.c.l.b16 %v1895
        %v1916 = vunpack.c.l.b16 %v1896
        %v1917 = vpack.c.b16 %v1910, %v1909
        %v1918 = vpack.c.b16 %v1912, %v1911
        %v1919 = vpack.c.b16 %v1914, %v1913
        %v1920 = vpack.c.b16 %v1916, %v1915
        %v1926 = vsel %vm699, %v1873, 0
        %v1929 = vsel %vm699, %v1874, 0
        %v1932 = vsel %vm699, %v1875, 0
        %v1935 = vsel %vm699, %v1876, 0
        %v1938 = vsel %vm699, %v1877, 0
        %v1941 = vsel %vm699, %v1878, 0
        %v1944 = vsel %vm699, %v1879, 0
        %v1947 = vsel %vm699, %v1880, 0
        %v1950 = vsel %vm699, %v1881, 0
        %v1953 = vsel %vm699, %v1882, 0
        %v1956 = vsel %vm699, %v1883, 0
        %v1959 = vsel %vm699, %v1884, 0
        %v1962 = vsel %vm699, %v1885, 0
        %v1965 = vsel %vm699, %v1886, 0
        %v1968 = vsel %vm699, %v1887, 0
        %v1971 = vsel %vm699, %v1888, 0
        %1973 = vmatpush.bf16.msra.mxu0 0
        %1974 = vmatpush.bf16.msra.mxu0 0
        %1975 = vmatpush.bf16.msra.mxu0 0
        %1976 = vmatpush.bf16.msra.mxu0 0
        %1977 = vmatpush.bf16.msra.mxu0 %v1920
        %1978 = vmatpush.bf16.msra.mxu0 %v1919
        %1979 = vmatpush.bf16.msra.mxu0 %v1918
        %1980 = vmatpush.bf16.msra.mxu0 %v1917
        %1981 = vmatmul.bf16.gmra.mxu0 %v1926
        %v1982 = vpop.f32.mrf.mxu0
        %v1983 = vadd.f32 %v1899, %v1982
        %v1984 = vpop.f32.mrf.mxu0
        %v1985 = vadd.f32 %v1899, %v1984
        %1986 = vmatmul.bf16.gmra.mxu0 %v1929
        %v1987 = vpop.f32.mrf.mxu0
        %v1988 = vadd.f32 %v1899, %v1987
        %v1989 = vpop.f32.mrf.mxu0
        %v1990 = vadd.f32 %v1899, %v1989
        %1991 = vmatmul.bf16.gmra.mxu0 %v1932
        %v1992 = vpop.f32.mrf.mxu0
        %v1993 = vadd.f32 %v1899, %v1992
        %v1994 = vpop.f32.mrf.mxu0
        %v1995 = vadd.f32 %v1899, %v1994
        %1996 = vmatmul.bf16.gmra.mxu0 %v1935
        %v1997 = vpop.f32.mrf.mxu0
        %v1998 = vadd.f32 %v1899, %v1997
        %v1999 = vpop.f32.mrf.mxu0
        %v2000 = vadd.f32 %v1899, %v1999
        %2001 = vmatmul.bf16.gmra.mxu0 %v1938
        %v2002 = vpop.f32.mrf.mxu0
        %v2003 = vadd.f32 %v1899, %v2002
        %v2004 = vpop.f32.mrf.mxu0
        %v2005 = vadd.f32 %v1899, %v2004
        %2006 = vmatmul.bf16.gmra.mxu0 %v1941
        %v2007 = vpop.f32.mrf.mxu0
        %v2008 = vadd.f32 %v1899, %v2007
        %v2009 = vpop.f32.mrf.mxu0
        %v2010 = vadd.f32 %v1899, %v2009
        %2011 = vmatmul.bf16.gmra.mxu0 %v1944
        %v2012 = vpop.f32.mrf.mxu0
        %v2013 = vadd.f32 %v1899, %v2012
        %v2014 = vpop.f32.mrf.mxu0
        %v2015 = vadd.f32 %v1899, %v2014
        %2016 = vmatmul.bf16.gmra.mxu0 %v1947
        %v2017 = vpop.f32.mrf.mxu0
        %v2018 = vadd.f32 %v1899, %v2017
        %v2019 = vpop.f32.mrf.mxu0
        %v2020 = vadd.f32 %v1899, %v2019
        %2021 = vmatmul.bf16.gmra.mxu0 %v1950
        %v2022 = vpop.f32.mrf.mxu0
        %v2023 = vadd.f32 %v1899, %v2022
        %v2024 = vpop.f32.mrf.mxu0
        %v2025 = vadd.f32 %v1899, %v2024
        %2026 = vmatmul.bf16.gmra.mxu0 %v1953
        %v2027 = vpop.f32.mrf.mxu0
        %v2028 = vadd.f32 %v1899, %v2027
        %v2029 = vpop.f32.mrf.mxu0
        %v2030 = vadd.f32 %v1899, %v2029
        %2031 = vmatmul.bf16.gmra.mxu0 %v1956
        %v2032 = vpop.f32.mrf.mxu0
        %v2033 = vadd.f32 %v1899, %v2032
        %v2034 = vpop.f32.mrf.mxu0
        %v2035 = vadd.f32 %v1899, %v2034
        %2036 = vmatmul.bf16.gmra.mxu0 %v1959
        %v2037 = vpop.f32.mrf.mxu0
        %v2038 = vadd.f32 %v1899, %v2037
        %v2039 = vpop.f32.mrf.mxu0
        %v2040 = vadd.f32 %v1899, %v2039
        %2041 = vmatmul.bf16.gmra.mxu0 %v1962
        %v2042 = vpop.f32.mrf.mxu0
        %v2043 = vadd.f32 %v1899, %v2042
        %v2044 = vpop.f32.mrf.mxu0
        %v2045 = vadd.f32 %v1899, %v2044
        %2046 = vmatmul.bf16.gmra.mxu0 %v1965
        %v2047 = vpop.f32.mrf.mxu0
        %v2048 = vadd.f32 %v1899, %v2047
        %v2049 = vpop.f32.mrf.mxu0
        %v2050 = vadd.f32 %v1899, %v2049
        %2051 = vmatmul.bf16.gmra.mxu0 %v1968
        %v2052 = vpop.f32.mrf.mxu0
        %v2053 = vadd.f32 %v1899, %v2052
        %v2054 = vpop.f32.mrf.mxu0
        %v2055 = vadd.f32 %v1899, %v2054
        %2056 = vmatmul.bf16.gmra.mxu0 %v1971
        %v2057 = vpop.f32.mrf.mxu0
        %v2058 = vadd.f32 %v1899, %v2057
        %v2059 = vpop.f32.mrf.mxu0
        %v2060 = vadd.f32 %v1899, %v2059
        %2061 = vdwg.mxu0
        %v2062 = vadd.f32 %v410, %v1983
        %v2063 = vadd.f32 %v411, %v1985
        %v2064 = vadd.f32 %v412, %v1988
        %v2065 = vadd.f32 %v413, %v1990
        %v2066 = vadd.f32 %v414, %v1993
        %v2067 = vadd.f32 %v415, %v1995
        %v2068 = vadd.f32 %v416, %v1998
        %v2069 = vadd.f32 %v417, %v2000
        %v2070 = vadd.f32 %v418, %v2003
        %v2071 = vadd.f32 %v419, %v2005
        %v2072 = vadd.f32 %v420, %v2008
        %v2073 = vadd.f32 %v421, %v2010
        %v2074 = vadd.f32 %v422, %v2013
        %v2075 = vadd.f32 %v423, %v2015
        %v2076 = vadd.f32 %v424, %v2018
        %v2077 = vadd.f32 %v425, %v2020
        %v2078 = vadd.f32 %v426, %v2023
        %v2079 = vadd.f32 %v427, %v2025
        %v2080 = vadd.f32 %v428, %v2028
        %v2081 = vadd.f32 %v429, %v2030
        %v2082 = vadd.f32 %v430, %v2033
        %v2083 = vadd.f32 %v431, %v2035
        %v2084 = vadd.f32 %v432, %v2038
        %v2085 = vadd.f32 %v433, %v2040
        %v2086 = vadd.f32 %v434, %v2043
        %v2087 = vadd.f32 %v435, %v2045
        %v2088 = vadd.f32 %v436, %v2048
        %v2089 = vadd.f32 %v437, %v2050
        %v2090 = vadd.f32 %v438, %v2053
        %v2091 = vadd.f32 %v439, %v2055
        %v2092 = vadd.f32 %v440, %v2058
        %v2093 = vadd.f32 %v441, %v2060
        %2094 = vst [vmem:[%s406] sm:$0xff] %v2062
        %2095 = vst [vmem:[%s406 + $0x8] sm:$0xff] %v2063
        %2096 = vst [vmem:[%s406 + $0x10] sm:$0xff] %v2064
        %2097 = vst [vmem:[%s406 + $0x18] sm:$0xff] %v2065
        %2098 = vst [vmem:[%s406 + $0x20] sm:$0xff] %v2066
        %2099 = vst [vmem:[%s406 + $0x28] sm:$0xff] %v2067
        %2100 = vst [vmem:[%s406 + $0x30] sm:$0xff] %v2068
        %2101 = vst [vmem:[%s406 + $0x38] sm:$0xff] %v2069
        %2102 = vst [vmem:[%s406 + $0x40] sm:$0xff] %v2070
        %2103 = vst [vmem:[%s406 + $0x48] sm:$0xff] %v2071
        %2104 = vst [vmem:[%s406 + $0x50] sm:$0xff] %v2072
        %2105 = vst [vmem:[%s406 + $0x58] sm:$0xff] %v2073
        %2106 = vst [vmem:[%s406 + $0x60] sm:$0xff] %v2074
        %2107 = vst [vmem:[%s406 + $0x68] sm:$0xff] %v2075
        %2108 = vst [vmem:[%s406 + $0x70] sm:$0xff] %v2076
        %2109 = vst [vmem:[%s406 + $0x78] sm:$0xff] %v2077
        %2110 = vst [vmem:[%s406 + $0x80] sm:$0xff] %v2078
        %2111 = vst [vmem:[%s406 + $0x88] sm:$0xff] %v2079
        %2112 = vst [vmem:[%s406 + $0x90] sm:$0xff] %v2080
        %2113 = vst [vmem:[%s406 + $0x98] sm:$0xff] %v2081
        %2114 = vst [vmem:[%s406 + $0xa0] sm:$0xff] %v2082
        %2115 = vst [vmem:[%s406 + $0xa8] sm:$0xff] %v2083
        %2116 = vst [vmem:[%s406 + $0xb0] sm:$0xff] %v2084
        %2117 = vst [vmem:[%s406 + $0xb8] sm:$0xff] %v2085
        %2118 = vst [vmem:[%s406 + $0xc0] sm:$0xff] %v2086
        %2119 = vst [vmem:[%s406 + $0xc8] sm:$0xff] %v2087
        %2120 = vst [vmem:[%s406 + $0xd0] sm:$0xff] %v2088
        %2121 = vst [vmem:[%s406 + $0xd8] sm:$0xff] %v2089
        %2122 = vst [vmem:[%s406 + $0xe0] sm:$0xff] %v2090
        %2123 = vst [vmem:[%s406 + $0xe8] sm:$0xff] %v2091
        %2124 = vst [vmem:[%s406 + $0xf0] sm:$0xff] %v2092
        %2125 = vst [vmem:[%s406 + $0xf8] sm:$0xff] %v2093
        %s2126 = sand.u32 %s272, 1
        %s2127 = scalar_lea.sflag [#allocation4], %s2126
        %s2128 = sand.u32 %s272, 1
        %s2129 = smul.addr %s2128, 256
        %s2130 = scalar_lea.vmem [#allocation5], %s2129
        // Predicated region
        $region69: #{tpu_custom_call.1} parent=63 // pred_check
          %p2131 = pneg %p282
        $region70: #{tpu_custom_call.1} parent=63 // pred_check_branch
          %2133 = sbr.rel (%p2131) target = $region72
        $region71: #{tpu_custom_call.1} parent=63 // pred_region
          %s2134 = smul.u32 32, %s28
          %2136 = vsyncadd %s2127, 0
          %s2137 = smul.addr %s2134, 8
          %s2138 = scalar_lea.hbm %s11, %s2137
          %s2139 = sshll.u32 %s2130, 4
          %s2140 = int_to_ptr.vmem [resolvable:$true] %s2139
          %s2141 = sshll.u32 %s2138, 4
          %s2142 = int_to_ptr.hbm [resolvable:$true] %s2141
          %2147 = dma.vmem_to_hbm [thread:$0]  %s2140, 4096, %s2142, %s2127, 128, 128, 8
        $region72: #{tpu_custom_call.1} parent=63 // pred_fallthru
          _
      $region64: #{tpu_custom_call.1} parent=5 // pred_fallthru
        _
      %p2148 = scmp.le.s32.totalorder 2, %s23
      // Predicated region
      $region73: #{tpu_custom_call.1} parent=5 // pred_check
        %p2149 = pneg %p2148
      $region74: #{tpu_custom_call.1} parent=5 // pred_check_branch
        %2151 = sbr.rel (%p2149) target = $region76
      $region75: #{tpu_custom_call.1} parent=5 // pred_region
        %s2152 = ssub.s32 %s23, 2
        // Predicated region
        $region77: #{tpu_custom_call.1} parent=75 // pred_check
          %p2153 = pneg %p288
        $region78: #{tpu_custom_call.1} parent=75 // pred_check_branch
          %2155 = sbr.rel (%p2153) target = $region80
        $region79: #{tpu_custom_call.1} parent=75 // pred_region
          %s2156 = sand.u32 %s273, 1
          %s2157 = scalar_lea.sflag [#allocation4], %s2156
          %s2158 = sand.u32 %s273, 1
          %s2159 = smul.addr %s2158, 256
          %s2160 = scalar_lea.vmem [#allocation5], %s2159
          %2162 = dma.done %s2157, 4096
        $region80: #{tpu_custom_call.1} parent=75 // pred_fallthru
          _
      $region76: #{tpu_custom_call.1} parent=5 // pred_fallthru
        _
    $region6: #{tpu_custom_call.1} parent=1 // loop_footer
      %s27 = sadd.s32 1, %s23
    $region7: #{tpu_custom_call.1} parent=1 // loop_footer_branch
      %22 = sbr.rel target = $region3
    $region8: #{tpu_custom_call.1} parent=1 // loop_exit
      _
    %2163 = vsyncpa [#allocation3], 1
    %s2164 = scalar_lea.sflag [#allocation3], 1
    %2165 = vsyncpa %s2164, 1
    %2166 = vsyncpa [#allocation4], 1
    %s2167 = scalar_lea.sflag [#allocation4], 1
    %2168 = vsyncpa %s2167, 1

</llo_original>
